<compile_context>
chip_gen: v7x
topology: tpu7x:2x2x1
jax: 0.10.0
libtpu: 0.0.40
codegen_flags: <defaults>
</compile_context>

<pallas_src>
import functools

import jax
import jax.numpy as jnp
from jax.experimental import pallas as pl
from jax.experimental.pallas import tpu as pltpu


# ----------------------------------------------------------------------------
# helpers
# ----------------------------------------------------------------------------
def _round_up(a, m):
    return ((a + m - 1) // m) * m


def _pick_col_tile(n, cap=512):
    """Largest divisor of n that is a multiple of 128 and <= cap."""
    for cand in (512, 384, 256, 128):
        if cand <= cap and n >= cand and n % cand == 0:
            return cand
    return n  # small n: take it whole (equals the full array dim)


def _row_tile(M, compute_dtype, cap=512):
    mult = 16 if compute_dtype == jnp.bfloat16 else 8
    tm = min(_round_up(M, mult), cap)
    return max(mult, (tm // mult) * mult)


# ----------------------------------------------------------------------------
# LayerNorm kernel
# ----------------------------------------------------------------------------
def _ln_kernel(x_ref, g_ref, b_ref, o_ref, *, eps):
    x = x_ref[...].astype(jnp.float32)
    mu = jnp.mean(x, axis=-1, keepdims=True)
    var = jnp.mean(jnp.square(x - mu), axis=-1, keepdims=True)
    y = (x - mu) * jax.lax.rsqrt(var + eps)
    o_ref[...] = (y * g_ref[...] + b_ref[...]).astype(o_ref.dtype)


def layer_norm(x, gamma, beta, *, eps=1e-5, tm=None):
    orig = x.shape
    D = orig[-1]
    x2 = x.reshape(-1, D)
    M = x2.shape[0]
    if tm is None:
        tm = _row_tile(M, jnp.float32, cap=512)
    Mp = _round_up(M, tm)
    if Mp != M:
        x2 = jnp.pad(x2, ((0, Mp - M), (0, 0)))
    g = gamma.reshape(1, D).astype(jnp.float32)
    b = beta.reshape(1, D).astype(jnp.float32)

    out = pl.pallas_call(
        functools.partial(_ln_kernel, eps=eps),
        out_shape=jax.ShapeDtypeStruct((Mp, D), x.dtype),
        grid_spec=pltpu.PrefetchScalarGridSpec(
            num_scalar_prefetch=0,
            grid=(Mp // tm,),
            in_specs=[pl.BlockSpec((tm, D), lambda i: (i, 0)),
                      pl.BlockSpec((1, D), lambda i: (0, 0)),
                      pl.BlockSpec((1, D), lambda i: (0, 0))],
            out_specs=pl.BlockSpec((tm, D), lambda i: (i, 0))),
        compiler_params=pltpu.CompilerParams(
            dimension_semantics=("parallel",)),
    )(x2, g, b)
    return out[:M].reshape(orig)


# ----------------------------------------------------------------------------
# Linear (matmul + bias) kernel: used for q/k/v, attention proj, LM head
# ----------------------------------------------------------------------------
def _linear_kernel(x_ref, w_ref, b_ref, o_ref):
    y = jnp.dot(x_ref[...], w_ref[...], preferred_element_type=jnp.float32)
    o_ref[...] = (y + b_ref[...]).astype(o_ref.dtype)


def linear(x, w, b=None, *, tm=None, tn=None, compute_dtype=jnp.bfloat16):
    orig = x.shape
    K = orig[-1]
    N = w.shape[1]
    assert w.shape[0] == K
    x2 = x.reshape(-1, K)
    M = x2.shape[0]

    if tm is None:
        tm = _row_tile(M, compute_dtype, cap=512)
    Mp = _round_up(M, tm)
    Np = max(128, _round_up(N, 128))         # lane-dense output stores
    if tn is None:
        tn = _pick_col_tile(Np)

    xk = x2.astype(compute_dtype)
    if Mp != M:
        xk = jnp.pad(xk, ((0, Mp - M), (0, 0)))
    wk = w.astype(compute_dtype)
    bk = (jnp.zeros((N,), jnp.float32) if b is None
          else b.astype(jnp.float32)).reshape(1, N)
    if Np != N:
        wk = jnp.pad(wk, ((0, 0), (0, Np - N)))
        bk = jnp.pad(bk, ((0, 0), (0, Np - N)))

    out = pl.pallas_call(
        _linear_kernel,
        out_shape=jax.ShapeDtypeStruct((Mp, Np), x.dtype),
        grid_spec=pltpu.PrefetchScalarGridSpec(
            num_scalar_prefetch=0,
            grid=(Mp // tm, Np // tn),
            in_specs=[pl.BlockSpec((tm, K), lambda i, j: (i, 0)),
                      pl.BlockSpec((K, tn), lambda i, j: (0, j)),
                      pl.BlockSpec((1, tn), lambda i, j: (0, j))],
            out_specs=pl.BlockSpec((tm, tn), lambda i, j: (i, j))),
        compiler_params=pltpu.CompilerParams(
            dimension_semantics=("parallel", "parallel")),
    )(xk, wk, bk)
    return out[:M, :N].reshape(orig[:-1] + (N,))


# ----------------------------------------------------------------------------
# Causal multi-head attention kernel (one grid step per batch*head)
# ----------------------------------------------------------------------------
def _attn_kernel(q_ref, k_ref, v_ref, o_ref, *, scale):
    q = q_ref[0]                                    # (T, hd) bf16
    k = k_ref[0]
    v = v_ref[0]
    T = q.shape[0]
    # q @ k^T via dot_general (contraction on the head dim), f32 accumulation.
    s = jax.lax.dot_general(q, k, (((1,), (1,)), ((), ())),
                            preferred_element_type=jnp.float32) * scale
    row = jax.lax.broadcasted_iota(jnp.int32, (T, T), 0)
    col = jax.lax.broadcasted_iota(jnp.int32, (T, T), 1)
    s = jnp.where(col <= row, s, -jnp.inf)          # causal mask
    m = jnp.max(s, axis=-1, keepdims=True)
    p = jnp.exp(s - m)
    p = p / jnp.sum(p, axis=-1, keepdims=True)
    # Dropout on attention weights: identity in eval mode.
    o = jnp.dot(p.astype(v.dtype), v, preferred_element_type=jnp.float32)
    o_ref[0] = o.astype(o_ref.dtype)


def causal_attention(q, k, v, n_head, *, compute_dtype=jnp.bfloat16):
    B, T, D = q.shape
    hd = D // n_head

    def split_heads(x):
        return (x.reshape(B, T, n_head, hd).transpose(0, 2, 1, 3)
                 .reshape(B * n_head, T, hd).astype(compute_dtype))

    qh, kh, vh = split_heads(q), split_heads(k), split_heads(v)

    out = pl.pallas_call(
        functools.partial(_attn_kernel, scale=float(hd) ** -0.5),
        out_shape=jax.ShapeDtypeStruct((B * n_head, T, hd), q.dtype),
        grid_spec=pltpu.PrefetchScalarGridSpec(
            num_scalar_prefetch=0,
            grid=(B * n_head,),
            in_specs=[pl.BlockSpec((1, T, hd), lambda i: (i, 0, 0)),
                      pl.BlockSpec((1, T, hd), lambda i: (i, 0, 0)),
                      pl.BlockSpec((1, T, hd), lambda i: (i, 0, 0))],
            out_specs=pl.BlockSpec((1, T, hd), lambda i: (i, 0, 0))),
        compiler_params=pltpu.CompilerParams(
            dimension_semantics=("parallel",)),
    )(qh, kh, vh)

    return (out.reshape(B, n_head, T, hd).transpose(0, 2, 1, 3)
               .reshape(B, T, D))


# ----------------------------------------------------------------------------
# Fused FeedForward kernel: Linear(D,4D) -> ReLU -> Linear(4D,D)
# ----------------------------------------------------------------------------
def _ffn_kernel(x_ref, w1_ref, b1_ref, w2_ref, b2_ref, o_ref, acc_ref):
    # Grid = (row tiles, hidden tiles); hidden axis is a reduction for matmul 2.
    k = pl.program_id(1)

    @pl.when(k == 0)
    def _():
        acc_ref[...] = jnp.zeros_like(acc_ref)

    h = jnp.dot(x_ref[...], w1_ref[...], preferred_element_type=jnp.float32)
    h = jnp.maximum(h + b1_ref[...], 0.0)
    acc_ref[...] += jnp.dot(h.astype(w2_ref.dtype), w2_ref[...],
                            preferred_element_type=jnp.float32)

    @pl.when(k == pl.num_programs(1) - 1)
    def _():
        # Dropout in eval mode == identity.
        o_ref[...] = (acc_ref[...] + b2_ref[...]).astype(o_ref.dtype)


def feed_forward(x, w1, b1, w2, b2, *, tm=None, tk=None,
                 compute_dtype=jnp.bfloat16):
    orig_shape = x.shape
    out_dtype = x.dtype
    size = orig_shape[-1]
    hidden = w1.shape[1]
    assert w1.shape == (size, hidden) and w2.shape == (hidden, size)

    x2d = x.reshape(-1, size)
    M = x2d.shape[0]

    if tm is None:
        tm = _row_tile(M, compute_dtype, cap=512)
    else:
        mult = 16 if compute_dtype == jnp.bfloat16 else 8
        tm = max(mult, (tm // mult) * mult)
    Mp = _round_up(M, tm)

    if tk is None:
        tk = _pick_col_tile(hidden)
    assert hidden % tk == 0, "hidden tile must divide 4*size"

    size_p = max(128, _round_up(size, 128))   # lane-dense output stores

    xk = x2d.astype(compute_dtype)
    if Mp != M:
        xk = jnp.pad(xk, ((0, Mp - M), (0, 0)))
    w1k = w1.astype(compute_dtype)
    w2k = w2.astype(compute_dtype)
    b1k = b1.reshape(1, hidden).astype(jnp.float32)
    b2k = b2.reshape(1, size).astype(jnp.float32)
    if size_p != size:
        w2k = jnp.pad(w2k, ((0, 0), (0, size_p - size)))
        b2k = jnp.pad(b2k, ((0, 0), (0, size_p - size)))

    grid = (Mp // tm, hidden // tk)

    cdt = jnp.dtype(compute_dtype).itemsize
    odt = jnp.dtype(out_dtype).itemsize
    est = (2 * tm * size * cdt + 2 * size * tk * cdt + 2 * tk * size_p * cdt
           + 2 * (tk + size_p) * 4 + 2 * tm * size_p * odt + tm * size_p * 4)
    vmem_limit = int(min(max(2 * est, 16 * 2 ** 20), 64 * 2 ** 20))

    out = pl.pallas_call(
        _ffn_kernel,
        out_shape=jax.ShapeDtypeStruct((Mp, size_p), out_dtype),
        grid_spec=pltpu.PrefetchScalarGridSpec(
            num_scalar_prefetch=0,
            grid=grid,
            in_specs=[
                pl.BlockSpec((tm, size), lambda i, k: (i, 0)),
                pl.BlockSpec((size, tk), lambda i, k: (0, k)),
                pl.BlockSpec((1, tk), lambda i, k: (0, k)),
                pl.BlockSpec((tk, size_p), lambda i, k: (k, 0)),
                pl.BlockSpec((1, size_p), lambda i, k: (0, 0)),
            ],
            out_specs=pl.BlockSpec((tm, size_p), lambda i, k: (i, 0)),
            scratch_shapes=[pltpu.VMEM((tm, size_p), jnp.float32)],
        ),
        compiler_params=pltpu.CompilerParams(
            dimension_semantics=("parallel", "arbitrary"),
            vmem_limit_bytes=vmem_limit),
    )(xk, w1k, b1k, w2k, b2k)

    out = out[:M, :size]
    return out.reshape(orig_shape)


# ----------------------------------------------------------------------------
# Full GPT forward (eval mode, logits only)
# ----------------------------------------------------------------------------
def gpt_forward(params, contexts, n_head):
    B, T = contexts.shape
    # TODO(synk): embedding gathers stay in XLA (jnp advanced indexing).
    x = params['tok_emb'][contexts] + params['pos_emb'][:T]
    for blk in params['blocks']:
        h = layer_norm(x, blk['ln1_g'], blk['ln1_b'])
        q = linear(h, blk['wq'])
        k = linear(h, blk['wk'])
        v = linear(h, blk['wv'])
        a = causal_attention(q, k, v, n_head)
        a = linear(a, blk['proj_w'], blk['proj_b'])
        x = x + a                                   # dropout: identity (eval)
        h2 = layer_norm(x, blk['ln2_g'], blk['ln2_b'])
        x = x + feed_forward(h2, blk['w1'], blk['b1'], blk['w2'], blk['b2'])
    x = layer_norm(x, params['lnf_g'], params['lnf_b'])
    logits = linear(x, params['head_w'], params['head_b'])
    return logits


# ----------------------------------------------------------------------------
# Pure-JAX reference (identical bf16-compute / f32-accumulate recipe)
# ----------------------------------------------------------------------------
def _ref_layer_norm(x, g, b, eps=1e-5):
    xf = x.astype(jnp.float32)
    mu = jnp.mean(xf, axis=-1, keepdims=True)
    var = jnp.mean(jnp.square(xf - mu), axis=-1, keepdims=True)
    y = (xf - mu) * jax.lax.rsqrt(var + eps)
    return (y * g.astype(jnp.float32) + b.astype(jnp.float32)).astype(x.dtype)


def _ref_linear(x, w, b=None, compute_dtype=jnp.bfloat16):
    y = jnp.dot(x.astype(compute_dtype), w.astype(compute_dtype),
                preferred_element_type=jnp.float32)
    if b is not None:
        y = y + b.astype(jnp.float32)
    return y.astype(x.dtype)


def _ref_attention(q, k, v, n_head, compute_dtype=jnp.bfloat16):
    B, T, D = q.shape
    hd = D // n_head
    def sh(x):
        return x.reshape(B, T, n_head, hd).transpose(0, 2, 1, 3).astype(compute_dtype)
    qh, kh, vh = sh(q), sh(k), sh(v)
    s = jnp.einsum('bhtd,bhsd->bhts', qh, kh,
                   preferred_element_type=jnp.float32) * float(hd) ** -0.5
    mask = jnp.tril(jnp.ones((T, T), dtype=bool))
    s = jnp.where(mask, s, -jnp.inf)
    p = jax.nn.softmax(s, axis=-1)
    o = jnp.einsum('bhts,bhsd->bhtd', p.astype(compute_dtype), vh,
                   preferred_element_type=jnp.float32)
    return o.transpose(0, 2, 1, 3).reshape(B, T, D).astype(q.dtype)


def _ref_ffn(x, w1, b1, w2, b2, compute_dtype=jnp.bfloat16):
    h = _ref_linear(x, w1, b1, compute_dtype).astype(jnp.float32)
    h = jnp.maximum(h, 0.0).astype(x.dtype)
    return _ref_linear(h, w2, b2, compute_dtype)


def gpt_forward_reference(params, contexts, n_head):
    B, T = contexts.shape
    x = params['tok_emb'][contexts] + params['pos_emb'][:T]
    for blk in params['blocks']:
        h = _ref_layer_norm(x, blk['ln1_g'], blk['ln1_b'])
        q = _ref_linear(h, blk['wq'])
        k = _ref_linear(h, blk['wk'])
        v = _ref_linear(h, blk['wv'])
        a = _ref_attention(q, k, v, n_head)
        a = _ref_linear(a, blk['proj_w'], blk['proj_b'])
        x = x + a
        h2 = _ref_layer_norm(x, blk['ln2_g'], blk['ln2_b'])
        x = x + _ref_ffn(h2, blk['w1'], blk['b1'], blk['w2'], blk['b2'])
    x = _ref_layer_norm(x, params['lnf_g'], params['lnf_b'])
    return _ref_linear(x, params['head_w'], params['head_b'])


# ----------------------------------------------------------------------------
# Parameter init (mimics GPTModel._init_weights: N(0, 0.02) weights, zero bias)
# ----------------------------------------------------------------------------
def init_gpt_params(key, vocab_size, block_size, n_embed, n_head, n_layer,
                    dtype=jnp.float32):
    del n_head  # head split handled at forward time
    hidden = 4 * n_embed
    keys = jax.random.split(key, 4 + n_layer)

    def nrm(k, shape):
        return (0.02 * jax.random.normal(k, shape)).astype(dtype)

    params = {
        'tok_emb': nrm(keys[0], (vocab_size, n_embed)),
        'pos_emb': nrm(keys[1], (block_size, n_embed)),
        'lnf_g': jnp.ones((n_embed,), dtype),
        'lnf_b': jnp.zeros((n_embed,), dtype),
        'head_w': nrm(keys[2], (n_embed, vocab_size)),
        'head_b': jnp.zeros((vocab_size,), dtype),
        'blocks': [],
    }
    for l in range(n_layer):
        ks = jax.random.split(keys[4 + l], 6)
        params['blocks'].append({
            'ln1_g': jnp.ones((n_embed,), dtype),
            'ln1_b': jnp.zeros((n_embed,), dtype),
            'wq': nrm(ks[0], (n_embed, n_embed)),
            'wk': nrm(ks[1], (n_embed, n_embed)),
            'wv': nrm(ks[2], (n_embed, n_embed)),
            'proj_w': nrm(ks[3], (n_embed, n_embed)),
            'proj_b': jnp.zeros((n_embed,), dtype),
            'ln2_g': jnp.ones((n_embed,), dtype),
            'ln2_b': jnp.zeros((n_embed,), dtype),
            'w1': nrm(ks[4], (n_embed, hidden)),
            'b1': jnp.zeros((hidden,), dtype),
            'w2': nrm(ks[5], (hidden, n_embed)),
            'b2': jnp.zeros((n_embed,), dtype),
        })
    return params


# ----------------------------------------------------------------------------
if __name__ == "__main__":
    key = jax.random.PRNGKey(0)

    # Small test config consistent with the spec (n_embed=384, n_head=6);
    # shrunken vocab / seq / depth for a fast self-check.
    vocab_size, block_size_t, n_embed_t, n_head_t, n_layer_t = 65, 64, 384, 6, 2
    B, T = 2, 16

    kparams, kctx, kffn = jax.random.split(key, 3)
    params = init_gpt_params(kparams, vocab_size, block_size_t, n_embed_t,
                             n_head_t, n_layer_t)
    contexts = jax.random.randint(kctx, (B, T), 0, vocab_size)

    fwd = jax.jit(gpt_forward, static_argnums=2)
    logits = jax.block_until_ready(fwd(params, contexts, n_head_t))
    ref_logits = gpt_forward_reference(params, contexts, n_head_t)
    assert logits.shape == (B, T, vocab_size)
    assert jnp.allclose(logits, ref_logits, atol=2e-2, rtol=2e-2), \
        float(jnp.max(jnp.abs(logits - ref_logits)))

    # Standalone ragged-M FFN check: exercises row padding + the hidden-axis
    # k-accumulation path at a non-multiple-of-tile row count.
    B2, T2 = 3, 13  # M = 39
    blk0 = params['blocks'][0]
    x2 = jax.random.normal(kffn, (B2, T2, n_embed_t), dtype=jnp.float32)
    out2 = jax.block_until_ready(
        feed_forward(x2, blk0['w1'], blk0['b1'], blk0['w2'], blk0['b2'], tm=16))
    ref2 = _ref_ffn(x2, blk0['w1'], blk0['b1'], blk0['w2'], blk0['b2'])
    assert out2.shape == x2.shape
    assert jnp.allclose(out2, ref2, atol=2e-2, rtol=2e-2), \
        float(jnp.max(jnp.abs(out2 - ref2)))

    print("KERNEL_OK")
</pallas_src>

<mosaic_0001>
module attributes {stable_mosaic.version = 11 : i64} {
  func.func @_ln_kernel(%arg0: i32, %arg1: memref<32x384xf32, #tpu.memory_space<vmem>>, %arg2: memref<1x384xf32, #tpu.memory_space<vmem>>, %arg3: memref<1x384xf32, #tpu.memory_space<vmem>>, %arg4: memref<32x384xf32, #tpu.memory_space<vmem>>) attributes {dimension_semantics = [#tpu.dimension_semantics<parallel>], iteration_bounds = array<i64: 1>, scalar_prefetch = 0 : i64, scratch_operands = 0 : i64, tpu.core_type = #tpu.core_type<tc>, window_params = [{transform_indices = @transform_0, window_bounds = array<i64: 32, 384>}, {pipeline_mode = #tpu.pipeline_mode<synchronous>, transform_indices = @transform_1, window_bounds = array<i64: 1, 384>}, {pipeline_mode = #tpu.pipeline_mode<synchronous>, transform_indices = @transform_2, window_bounds = array<i64: 1, 384>}, {transform_indices = @transform_3, window_bounds = array<i64: 32, 384>}]} {
    %c0 = arith.constant 0 : index
    %c0_0 = arith.constant 0 : index
    %0 = vector.load %arg1[%c0, %c0_0] : memref<32x384xf32, #tpu.memory_space<vmem>>, vector<32x384xf32>
    %cst = arith.constant dense<0.000000e+00> : vector<32xf32>
    %1 = vector.multi_reduction <add>, %0, %cst [1] : vector<32x384xf32> to vector<32xf32>
    %2 = vector.shape_cast %1 : vector<32xf32> to vector<32x1xf32>
    %cst_1 = arith.constant 3.840000e+02 : f32
    %3 = vector.broadcast %cst_1 : f32 to vector<32x1xf32>
    %4 = arith.divf %2, %3 : vector<32x1xf32>
    %5 = vector.broadcast %4 : vector<32x1xf32> to vector<32x384xf32>
    %6 = arith.subf %0, %5 : vector<32x384xf32>
    %7 = arith.mulf %6, %6 : vector<32x384xf32>
    %cst_2 = arith.constant dense<0.000000e+00> : vector<32xf32>
    %8 = vector.multi_reduction <add>, %7, %cst_2 [1] : vector<32x384xf32> to vector<32xf32>
    %9 = vector.shape_cast %8 : vector<32xf32> to vector<32x1xf32>
    %cst_3 = arith.constant 3.840000e+02 : f32
    %10 = vector.broadcast %cst_3 : f32 to vector<32x1xf32>
    %11 = arith.divf %9, %10 : vector<32x1xf32>
    %12 = vector.broadcast %4 : vector<32x1xf32> to vector<32x384xf32>
    %13 = arith.subf %0, %12 : vector<32x384xf32>
    %cst_4 = arith.constant 9.99999974E-6 : f32
    %14 = vector.broadcast %cst_4 : f32 to vector<32x1xf32>
    %15 = arith.addf %11, %14 : vector<32x1xf32>
    %16 = math.rsqrt %15 : vector<32x1xf32>
    %17 = vector.broadcast %16 : vector<32x1xf32> to vector<32x384xf32>
    %18 = arith.mulf %13, %17 : vector<32x384xf32>
    %c0_5 = arith.constant 0 : index
    %c0_6 = arith.constant 0 : index
    %19 = vector.load %arg2[%c0_5, %c0_6] : memref<1x384xf32, #tpu.memory_space<vmem>>, vector<1x384xf32>
    %20 = vector.broadcast %19 : vector<1x384xf32> to vector<32x384xf32>
    %21 = arith.mulf %18, %20 : vector<32x384xf32>
    %c0_7 = arith.constant 0 : index
    %c0_8 = arith.constant 0 : index
    %22 = vector.load %arg3[%c0_7, %c0_8] : memref<1x384xf32, #tpu.memory_space<vmem>>, vector<1x384xf32>
    %23 = vector.broadcast %22 : vector<1x384xf32> to vector<32x384xf32>
    %24 = arith.addf %21, %23 : vector<32x384xf32>
    %c0_9 = arith.constant 0 : index
    %c0_10 = arith.constant 0 : index
    %25 = vector.load %arg4[%c0_9, %c0_10] : memref<32x384xf32, #tpu.memory_space<vmem>>, vector<32x384xf32>
    tpu.vector_store %arg4[%c0_9, %c0_10], %24 {strides = array<i32>} : memref<32x384xf32, #tpu.memory_space<vmem>>, vector<32x384xf32>,
    return
  }
  func.func @transform_0(%arg0: i32) -> (i32, i32) {
    %c0_i32 = arith.constant 0 : i32
    %c0_i32_0 = arith.constant 0 : i32
    return %arg0, %c0_i32 : i32, i32
  }
  func.func @transform_1(%arg0: i32) -> (i32, i32) {
    %c0_i32 = arith.constant 0 : i32
    %c0_i32_0 = arith.constant 0 : i32
    %c0_i32_1 = arith.constant 0 : i32
    return %c0_i32, %c0_i32_0 : i32, i32
  }
  func.func @transform_2(%arg0: i32) -> (i32, i32) {
    %c0_i32 = arith.constant 0 : i32
    %c0_i32_0 = arith.constant 0 : i32
    %c0_i32_1 = arith.constant 0 : i32
    return %c0_i32, %c0_i32_0 : i32, i32
  }
  func.func @transform_3(%arg0: i32) -> (i32, i32) {
    %c0_i32 = arith.constant 0 : i32
    %c0_i32_0 = arith.constant 0 : i32
    return %arg0, %c0_i32 : i32, i32
  }
}

module attributes {stable_mosaic.version = 11 : i64} {
  func.func @_linear_kernel(%arg0: i32, %arg1: i32, %arg2: memref<32x384xbf16, #tpu.memory_space<vmem>>, %arg3: memref<384x384xbf16, #tpu.memory_space<vmem>>, %arg4: memref<1x384xf32, #tpu.memory_space<vmem>>, %arg5: memref<32x384xf32, #tpu.memory_space<vmem>>) attributes {dimension_semantics = [#tpu.dimension_semantics<parallel>, #tpu.dimension_semantics<parallel>], iteration_bounds = array<i64: 1, 1>, scalar_prefetch = 0 : i64, scratch_operands = 0 : i64, tpu.core_type = #tpu.core_type<tc>, window_params = [{transform_indices = @transform_0, window_bounds = array<i64: 32, 384>}, {transform_indices = @transform_1, window_bounds = array<i64: 384, 384>}, {transform_indices = @transform_2, window_bounds = array<i64: 1, 384>}, {transform_indices = @transform_3, window_bounds = array<i64: 32, 384>}]} {
    %c0 = arith.constant 0 : index
    %c0_0 = arith.constant 0 : index
    %0 = vector.load %arg2[%c0, %c0_0] : memref<32x384xbf16, #tpu.memory_space<vmem>>, vector<32x384xbf16>
    %c0_1 = arith.constant 0 : index
    %c0_2 = arith.constant 0 : index
    %1 = vector.load %arg3[%c0_1, %c0_2] : memref<384x384xbf16, #tpu.memory_space<vmem>>, vector<384x384xbf16>
    %cst = arith.constant dense<0.000000e+00> : vector<32x384xf32>
    %2 = tpu.matmul %0, %1, %cst {dimension_numbers = #tpu.dot_dimension_numbers<[1], [0], [0], [1], [0, 0, 1, 1], [], []>} : vector<32x384xbf16>, vector<384x384xbf16>, vector<32x384xf32> -> vector<32x384xf32>
    %c0_3 = arith.constant 0 : index
    %c0_4 = arith.constant 0 : index
    %3 = vector.load %arg4[%c0_3, %c0_4] : memref<1x384xf32, #tpu.memory_space<vmem>>, vector<1x384xf32>
    %4 = vector.broadcast %3 : vector<1x384xf32> to vector<32x384xf32>
    %5 = arith.addf %2, %4 : vector<32x384xf32>
    %c0_5 = arith.constant 0 : index
    %c0_6 = arith.constant 0 : index
    %6 = vector.load %arg5[%c0_5, %c0_6] : memref<32x384xf32, #tpu.memory_space<vmem>>, vector<32x384xf32>
    tpu.vector_store %arg5[%c0_5, %c0_6], %5 {strides = array<i32>} : memref<32x384xf32, #tpu.memory_space<vmem>>, vector<32x384xf32>,
    return
  }
  func.func @transform_0(%arg0: i32, %arg1: i32) -> (i32, i32) {
    %c0_i32 = arith.constant 0 : i32
    %c0_i32_0 = arith.constant 0 : i32
    return %arg0, %c0_i32 : i32, i32
  }
  func.func @transform_1(%arg0: i32, %arg1: i32) -> (i32, i32) {
    %c0_i32 = arith.constant 0 : i32
    %c0_i32_0 = arith.constant 0 : i32
    return %c0_i32, %arg1 : i32, i32
  }
  func.func @transform_2(%arg0: i32, %arg1: i32) -> (i32, i32) {
    %c0_i32 = arith.constant 0 : i32
    %c0_i32_0 = arith.constant 0 : i32
    return %c0_i32, %arg1 : i32, i32
  }
  func.func @transform_3(%arg0: i32, %arg1: i32) -> (i32, i32) {
    %c0_i32 = arith.constant 0 : i32
    return %arg0, %arg1 : i32, i32
  }
}

module attributes {stable_mosaic.version = 11 : i64} {
  func.func @_attn_kernel(%arg0: i32, %arg1: memref<1x16x64xbf16, #tpu.memory_space<vmem>>, %arg2: memref<1x16x64xbf16, #tpu.memory_space<vmem>>, %arg3: memref<1x16x64xbf16, #tpu.memory_space<vmem>>, %arg4: memref<1x16x64xf32, #tpu.memory_space<vmem>>) attributes {dimension_semantics = [#tpu.dimension_semantics<parallel>], iteration_bounds = array<i64: 12>, scalar_prefetch = 0 : i64, scratch_operands = 0 : i64, tpu.core_type = #tpu.core_type<tc>, window_params = [{transform_indices = @transform_0, window_bounds = array<i64: 1, 16, 64>}, {transform_indices = @transform_1, window_bounds = array<i64: 1, 16, 64>}, {transform_indices = @transform_2, window_bounds = array<i64: 1, 16, 64>}, {transform_indices = @transform_3, window_bounds = array<i64: 1, 16, 64>}]} {
    %c0 = arith.constant 0 : index
    %c0_0 = arith.constant 0 : index
    %c0_1 = arith.constant 0 : index
    %0 = vector.load %arg1[%c0, %c0_0, %c0_1] : memref<1x16x64xbf16, #tpu.memory_space<vmem>>, vector<1x16x64xbf16>
    %1 = vector.shape_cast %0 : vector<1x16x64xbf16> to vector<16x64xbf16>
    %c0_2 = arith.constant 0 : index
    %c0_3 = arith.constant 0 : index
    %c0_4 = arith.constant 0 : index
    %2 = vector.load %arg2[%c0_2, %c0_3, %c0_4] : memref<1x16x64xbf16, #tpu.memory_space<vmem>>, vector<1x16x64xbf16>
    %3 = vector.shape_cast %2 : vector<1x16x64xbf16> to vector<16x64xbf16>
    %c0_5 = arith.constant 0 : index
    %c0_6 = arith.constant 0 : index
    %c0_7 = arith.constant 0 : index
    %4 = vector.load %arg3[%c0_5, %c0_6, %c0_7] : memref<1x16x64xbf16, #tpu.memory_space<vmem>>, vector<1x16x64xbf16>
    %5 = vector.shape_cast %4 : vector<1x16x64xbf16> to vector<16x64xbf16>
    %cst = arith.constant dense<0.000000e+00> : vector<16x16xf32>
    %6 = tpu.matmul %1, %3, %cst {dimension_numbers = #tpu.dot_dimension_numbers<[1], [1], [0], [0], [0, 0, 1, 0], [], []>} : vector<16x64xbf16>, vector<16x64xbf16>, vector<16x16xf32> -> vector<16x16xf32>
    %cst_8 = arith.constant 1.250000e-01 : f32
    %7 = vector.broadcast %cst_8 : f32 to vector<16x16xf32>
    %8 = arith.mulf %6, %7 : vector<16x16xf32>
    %9 = tpu.iota {dimensions = array<i32: 0>} : vector<16x16xi32>
    %10 = tpu.iota {dimensions = array<i32: 1>} : vector<16x16xi32>
    %11 = arith.cmpi sle, %10, %9 : vector<16x16xi32>
    %cst_9 = arith.constant 0xFF800000 : f32
    %12 = vector.broadcast %cst_9 : f32 to vector<16x16xf32>
    %13 = arith.select %11, %8, %12 : vector<16x16xi1>, vector<16x16xf32>
    %cst_10 = arith.constant dense<0xFF800000> : vector<16xf32>
    %14 = vector.multi_reduction <maximumf>, %13, %cst_10 [1] : vector<16x16xf32> to vector<16xf32>
    %15 = vector.shape_cast %14 : vector<16xf32> to vector<16x1xf32>
    %16 = vector.broadcast %15 : vector<16x1xf32> to vector<16x16xf32>
    %17 = arith.subf %13, %16 : vector<16x16xf32>
    %18 = math.exp %17 : vector<16x16xf32>
    %cst_11 = arith.constant dense<0.000000e+00> : vector<16xf32>
    %19 = vector.multi_reduction <add>, %18, %cst_11 [1] : vector<16x16xf32> to vector<16xf32>
    %20 = vector.shape_cast %19 : vector<16xf32> to vector<16x1xf32>
    %21 = vector.broadcast %20 : vector<16x1xf32> to vector<16x16xf32>
    %22 = arith.divf %18, %21 : vector<16x16xf32>
    %23 = arith.truncf %22 : vector<16x16xf32> to vector<16x16xbf16>
    %cst_12 = arith.constant dense<0.000000e+00> : vector<16x64xf32>
    %24 = tpu.matmul %23, %5, %cst_12 {dimension_numbers = #tpu.dot_dimension_numbers<[1], [0], [0], [1], [0, 0, 1, 1], [], []>} : vector<16x16xbf16>, vector<16x64xbf16>, vector<16x64xf32> -> vector<16x64xf32>
    %c0_13 = arith.constant 0 : index
    %c0_14 = arith.constant 0 : index
    %c0_15 = arith.constant 0 : index
    %25 = vector.load %arg4[%c0_13, %c0_14, %c0_15] : memref<1x16x64xf32, #tpu.memory_space<vmem>>, vector<1x16x64xf32>
    %26 = vector.shape_cast %25 : vector<1x16x64xf32> to vector<16x64xf32>
    %27 = vector.shape_cast %24 : vector<16x64xf32> to vector<1x16x64xf32>
    tpu.vector_store %arg4[%c0_13, %c0_14, %c0_15], %27 {strides = array<i32>} : memref<1x16x64xf32, #tpu.memory_space<vmem>>, vector<1x16x64xf32>,
    return
  }
  func.func @transform_0(%arg0: i32) -> (i32, i32, i32) {
    %c0_i32 = arith.constant 0 : i32
    %c0_i32_0 = arith.constant 0 : i32
    %c0_i32_1 = arith.constant 0 : i32
    return %arg0, %c0_i32, %c0_i32_0 : i32, i32, i32
  }
  func.func @transform_1(%arg0: i32) -> (i32, i32, i32) {
    %c0_i32 = arith.constant 0 : i32
    %c0_i32_0 = arith.constant 0 : i32
    %c0_i32_1 = arith.constant 0 : i32
    return %arg0, %c0_i32, %c0_i32_0 : i32, i32, i32
  }
  func.func @transform_2(%arg0: i32) -> (i32, i32, i32) {
    %c0_i32 = arith.constant 0 : i32
    %c0_i32_0 = arith.constant 0 : i32
    %c0_i32_1 = arith.constant 0 : i32
    return %arg0, %c0_i32, %c0_i32_0 : i32, i32, i32
  }
  func.func @transform_3(%arg0: i32) -> (i32, i32, i32) {
    %c0_i32 = arith.constant 0 : i32
    %c0_i32_0 = arith.constant 0 : i32
    %c0_i32_1 = arith.constant 0 : i32
    return %arg0, %c0_i32, %c0_i32_0 : i32, i32, i32
  }
}

module attributes {stable_mosaic.version = 11 : i64} {
  func.func @_ffn_kernel(%arg0: i32, %arg1: i32, %arg2: memref<32x384xbf16, #tpu.memory_space<vmem>>, %arg3: memref<384x512xbf16, #tpu.memory_space<vmem>>, %arg4: memref<1x512xf32, #tpu.memory_space<vmem>>, %arg5: memref<512x384xbf16, #tpu.memory_space<vmem>>, %arg6: memref<1x384xf32, #tpu.memory_space<vmem>>, %arg7: memref<32x384xf32, #tpu.memory_space<vmem>>, %arg8: memref<32x384xf32, #tpu.memory_space<vmem>>) attributes {dimension_semantics = [#tpu.dimension_semantics<parallel>, #tpu.dimension_semantics<arbitrary>], iteration_bounds = array<i64: 1, 3>, scalar_prefetch = 0 : i64, scratch_operands = 1 : i64, tpu.core_type = #tpu.core_type<tc>, window_params = [{transform_indices = @transform_0, window_bounds = array<i64: 32, 384>}, {transform_indices = @transform_1, window_bounds = array<i64: 384, 512>}, {transform_indices = @transform_2, window_bounds = array<i64: 1, 512>}, {transform_indices = @transform_3, window_bounds = array<i64: 512, 384>}, {pipeline_mode = #tpu.pipeline_mode<synchronous>, transform_indices = @transform_4, window_bounds = array<i64: 1, 384>}, {transform_indices = @transform_5, window_bounds = array<i64: 32, 384>}]} {
    %c0_i32 = arith.constant 0 : i32
    %0 = arith.cmpi eq, %arg1, %c0_i32 : i32
    %1 = arith.extui %0 : i1 to i32
    %c0_i32_0 = arith.constant 0 : i32
    %2 = arith.cmpi ne, %1, %c0_i32_0 : i32
    scf.if %2 {
      %cst_15 = arith.constant 0.000000e+00 : f32
      %20 = vector.broadcast %cst_15 : f32 to vector<32x384xf32>
      %c0_16 = arith.constant 0 : index
      %c0_17 = arith.constant 0 : index
      %21 = vector.load %arg8[%c0_16, %c0_17] : memref<32x384xf32, #tpu.memory_space<vmem>>, vector<32x384xf32>
      tpu.vector_store %arg8[%c0_16, %c0_17], %20 {strides = array<i32>} : memref<32x384xf32, #tpu.memory_space<vmem>>, vector<32x384xf32>,
    } else {
    }
    %c0 = arith.constant 0 : index
    %c0_1 = arith.constant 0 : index
    %3 = vector.load %arg2[%c0, %c0_1] : memref<32x384xbf16, #tpu.memory_space<vmem>>, vector<32x384xbf16>
    %c0_2 = arith.constant 0 : index
    %c0_3 = arith.constant 0 : index
    %4 = vector.load %arg3[%c0_2, %c0_3] : memref<384x512xbf16, #tpu.memory_space<vmem>>, vector<384x512xbf16>
    %cst = arith.constant dense<0.000000e+00> : vector<32x512xf32>
    %5 = tpu.matmul %3, %4, %cst {dimension_numbers = #tpu.dot_dimension_numbers<[1], [0], [0], [1], [0, 0, 1, 1], [], []>} : vector<32x384xbf16>, vector<384x512xbf16>, vector<32x512xf32> -> vector<32x512xf32>
    %c0_4 = arith.constant 0 : index
    %c0_5 = arith.constant 0 : index
    %6 = vector.load %arg4[%c0_4, %c0_5] : memref<1x512xf32, #tpu.memory_space<vmem>>, vector<1x512xf32>
    %7 = vector.broadcast %6 : vector<1x512xf32> to vector<32x512xf32>
    %8 = arith.addf %5, %7 : vector<32x512xf32>
    %cst_6 = arith.constant 0.000000e+00 : f32
    %9 = vector.broadcast %cst_6 : f32 to vector<32x512xf32>
    %10 = arith.maximumf %8, %9 : vector<32x512xf32>
    %c0_7 = arith.constant 0 : index
    %c0_8 = arith.constant 0 : index
    %11 = vector.load %arg8[%c0_7, %c0_8] : memref<32x384xf32, #tpu.memory_space<vmem>>, vector<32x384xf32>
    %12 = arith.truncf %10 : vector<32x512xf32> to vector<32x512xbf16>
    %c0_9 = arith.constant 0 : index
    %c0_10 = arith.constant 0 : index
    %13 = vector.load %arg5[%c0_9, %c0_10] : memref<512x384xbf16, #tpu.memory_space<vmem>>, vector<512x384xbf16>
    %cst_11 = arith.constant dense<0.000000e+00> : vector<32x384xf32>
    %14 = tpu.matmul %12, %13, %cst_11 {dimension_numbers = #tpu.dot_dimension_numbers<[1], [0], [0], [1], [0, 0, 1, 1], [], []>} : vector<32x512xbf16>, vector<512x384xbf16>, vector<32x384xf32> -> vector<32x384xf32>
    %15 = arith.addf %11, %14 : vector<32x384xf32>
    %c0_12 = arith.constant 0 : index
    %c0_13 = arith.constant 0 : index
    %16 = vector.load %arg8[%c0_12, %c0_13] : memref<32x384xf32, #tpu.memory_space<vmem>>, vector<32x384xf32>
    tpu.vector_store %arg8[%c0_12, %c0_13], %15 {strides = array<i32>} : memref<32x384xf32, #tpu.memory_space<vmem>>, vector<32x384xf32>,
    %c2_i32 = arith.constant 2 : i32
    %17 = arith.cmpi eq, %arg1, %c2_i32 : i32
    %18 = arith.extui %17 : i1 to i32
    %c0_i32_14 = arith.constant 0 : i32
    %19 = arith.cmpi ne, %18, %c0_i32_14 : i32
    scf.if %19 {
      %c0_15 = arith.constant 0 : index
      %c0_16 = arith.constant 0 : index
      %20 = vector.load %arg8[%c0_15, %c0_16] : memref<32x384xf32, #tpu.memory_space<vmem>>, vector<32x384xf32>
      %c0_17 = arith.constant 0 : index
      %c0_18 = arith.constant 0 : index
      %21 = vector.load %arg6[%c0_17, %c0_18] : memref<1x384xf32, #tpu.memory_space<vmem>>, vector<1x384xf32>
      %22 = vector.broadcast %21 : vector<1x384xf32> to vector<32x384xf32>
      %23 = arith.addf %20, %22 : vector<32x384xf32>
      %c0_19 = arith.constant 0 : index
      %c0_20 = arith.constant 0 : index
      %24 = vector.load %arg7[%c0_19, %c0_20] : memref<32x384xf32, #tpu.memory_space<vmem>>, vector<32x384xf32>
      tpu.vector_store %arg7[%c0_19, %c0_20], %23 {strides = array<i32>} : memref<32x384xf32, #tpu.memory_space<vmem>>, vector<32x384xf32>,
    } else {
    }
    return
  }
  func.func @transform_0(%arg0: i32, %arg1: i32) -> (i32, i32) {
    %c0_i32 = arith.constant 0 : i32
    %c0_i32_0 = arith.constant 0 : i32
    return %arg0, %c0_i32 : i32, i32
  }
  func.func @transform_1(%arg0: i32, %arg1: i32) -> (i32, i32) {
    %c0_i32 = arith.constant 0 : i32
    %c0_i32_0 = arith.constant 0 : i32
    return %c0_i32, %arg1 : i32, i32
  }
  func.func @transform_2(%arg0: i32, %arg1: i32) -> (i32, i32) {
    %c0_i32 = arith.constant 0 : i32
    %c0_i32_0 = arith.constant 0 : i32
    return %c0_i32, %arg1 : i32, i32
  }
  func.func @transform_3(%arg0: i32, %arg1: i32) -> (i32, i32) {
    %c0_i32 = arith.constant 0 : i32
    %c0_i32_0 = arith.constant 0 : i32
    return %arg1, %c0_i32 : i32, i32
  }
  func.func @transform_4(%arg0: i32, %arg1: i32) -> (i32, i32) {
    %c0_i32 = arith.constant 0 : i32
    %c0_i32_0 = arith.constant 0 : i32
    %c0_i32_1 = arith.constant 0 : i32
    return %c0_i32, %c0_i32_0 : i32, i32
  }
  func.func @transform_5(%arg0: i32, %arg1: i32) -> (i32, i32) {
    %c0_i32 = arith.constant 0 : i32
    %c0_i32_0 = arith.constant 0 : i32
    return %arg0, %c0_i32 : i32, i32
  }
}

module attributes {stable_mosaic.version = 11 : i64} {
  func.func @_linear_kernel(%arg0: i32, %arg1: i32, %arg2: memref<32x384xbf16, #tpu.memory_space<vmem>>, %arg3: memref<384x128xbf16, #tpu.memory_space<vmem>>, %arg4: memref<1x128xf32, #tpu.memory_space<vmem>>, %arg5: memref<32x128xf32, #tpu.memory_space<vmem>>) attributes {dimension_semantics = [#tpu.dimension_semantics<parallel>, #tpu.dimension_semantics<parallel>], iteration_bounds = array<i64: 1, 1>, scalar_prefetch = 0 : i64, scratch_operands = 0 : i64, tpu.core_type = #tpu.core_type<tc>, window_params = [{transform_indices = @transform_0, window_bounds = array<i64: 32, 384>}, {transform_indices = @transform_1, window_bounds = array<i64: 384, 128>}, {transform_indices = @transform_2, window_bounds = array<i64: 1, 128>}, {transform_indices = @transform_3, window_bounds = array<i64: 32, 128>}]} {
    %c0 = arith.constant 0 : index
    %c0_0 = arith.constant 0 : index
    %0 = vector.load %arg2[%c0, %c0_0] : memref<32x384xbf16, #tpu.memory_space<vmem>>, vector<32x384xbf16>
    %c0_1 = arith.constant 0 : index
    %c0_2 = arith.constant 0 : index
    %1 = vector.load %arg3[%c0_1, %c0_2] : memref<384x128xbf16, #tpu.memory_space<vmem>>, vector<384x128xbf16>
    %cst = arith.constant dense<0.000000e+00> : vector<32x128xf32>
    %2 = tpu.matmul %0, %1, %cst {dimension_numbers = #tpu.dot_dimension_numbers<[1], [0], [0], [1], [0, 0, 1, 1], [], []>} : vector<32x384xbf16>, vector<384x128xbf16>, vector<32x128xf32> -> vector<32x128xf32>
    %c0_3 = arith.constant 0 : index
    %c0_4 = arith.constant 0 : index
    %3 = vector.load %arg4[%c0_3, %c0_4] : memref<1x128xf32, #tpu.memory_space<vmem>>, vector<1x128xf32>
    %4 = vector.broadcast %3 : vector<1x128xf32> to vector<32x128xf32>
    %5 = arith.addf %2, %4 : vector<32x128xf32>
    %c0_5 = arith.constant 0 : index
    %c0_6 = arith.constant 0 : index
    %6 = vector.load %arg5[%c0_5, %c0_6] : memref<32x128xf32, #tpu.memory_space<vmem>>, vector<32x128xf32>
    tpu.vector_store %arg5[%c0_5, %c0_6], %5 {strides = array<i32>} : memref<32x128xf32, #tpu.memory_space<vmem>>, vector<32x128xf32>,
    return
  }
  func.func @transform_0(%arg0: i32, %arg1: i32) -> (i32, i32) {
    %c0_i32 = arith.constant 0 : i32
    %c0_i32_0 = arith.constant 0 : i32
    return %arg0, %c0_i32 : i32, i32
  }
  func.func @transform_1(%arg0: i32, %arg1: i32) -> (i32, i32) {
    %c0_i32 = arith.constant 0 : i32
    %c0_i32_0 = arith.constant 0 : i32
    return %c0_i32, %arg1 : i32, i32
  }
  func.func @transform_2(%arg0: i32, %arg1: i32) -> (i32, i32) {
    %c0_i32 = arith.constant 0 : i32
    %c0_i32_0 = arith.constant 0 : i32
    return %c0_i32, %arg1 : i32, i32
  }
  func.func @transform_3(%arg0: i32, %arg1: i32) -> (i32, i32) {
    %c0_i32 = arith.constant 0 : i32
    return %arg0, %arg1 : i32, i32
  }
}

</mosaic_0001>

<llo_original>
// kernel: gpt_forward.18
$region0: #{gpt_forward.18}
  #allocation0 [shape = 'u32[]', space=smem, size = 0x4, offset = 0x4, fixed_abs, tag = 'smem constant byte address 0x4 - core index']
  #allocation1 [shape = 'u32[144,128]{1,0:T(1,128)}', space=vmem, size = 0x12000, scoped, tag = 'internal scratch']
  %s0 = inlined_call_operand.vmem [shape: f32[32,384], index: 0, kind: input, shape index: {}]
  %s1 = inlined_call_operand.vmem [shape: f32[1,384], index: 1, kind: input, shape index: {}]
  %s2 = inlined_call_operand.vmem [shape: f32[1,384], index: 2, kind: input, shape index: {}]
  %s3 = inlined_call_operand.vmem [shape: f32[32,384], index: 3, kind: output, shape index: {}]
  %s4 = sld [smem:[#allocation0]]
  $region22: #{gpt_forward.18} parent=0
    _
  %s6 = ssub.s32 1, %s4
  %s7 = scalar_select 0, %s6, %s4
  // Predicated region
  $region2: #{gpt_forward.18} parent=0 // pred_check
    _
  $region3: #{gpt_forward.18} parent=0 // pred_check_branch
    %9 = sbr.rel (0) target = $region5
  $region4: #{gpt_forward.18} parent=0 // pred_region
    _
  $region5: #{gpt_forward.18} parent=0 // pred_fallthru
    _
  // Predicated region
  $region6: #{gpt_forward.18} parent=0 // pred_check
    _
  $region7: #{gpt_forward.18} parent=0 // pred_check_branch
    %11 = sbr.rel (0) target = $region9
  $region8: #{gpt_forward.18} parent=0 // pred_region
    _
  $region9: #{gpt_forward.18} parent=0 // pred_fallthru
    _
  // Predicated region
  $region10: #{gpt_forward.18} parent=0 // pred_check
    _
  $region11: #{gpt_forward.18} parent=0 // pred_check_branch
    %13 = sbr.rel (0) target = $region13
  $region12: #{gpt_forward.18} parent=0 // pred_region
    _
  $region13: #{gpt_forward.18} parent=0 // pred_fallthru
    _
  %v14 = vld [vmem:[%s0] sm:$0xff]
  %v15 = vld [vmem:[%s0 + $0x8] sm:$0xff]
  %v16 = vld [vmem:[%s0 + $0x10] sm:$0xff]
  %v17 = vld [vmem:[%s0 + $0x18] sm:$0xff]
  %v18 = vld [vmem:[%s0 + $0x20] sm:$0xff]
  %v19 = vld [vmem:[%s0 + $0x28] sm:$0xff]
  %v20 = vld [vmem:[%s0 + $0x30] sm:$0xff]
  %v21 = vld [vmem:[%s0 + $0x38] sm:$0xff]
  %v22 = vld [vmem:[%s0 + $0x40] sm:$0xff]
  %v23 = vld [vmem:[%s0 + $0x48] sm:$0xff]
  %v24 = vld [vmem:[%s0 + $0x50] sm:$0xff]
  %v25 = vld [vmem:[%s0 + $0x58] sm:$0xff]
  %v26 = vadd.f32 %v14, %v15
  %v27 = vadd.f32 %v26, %v16
  %28 = vadd.xlane.f32.xlu0 %v27
  %v29 = vpop.xlane.xlu0 %28
  %v30 = vadd.f32 %v17, %v18
  %v31 = vadd.f32 %v30, %v19
  %32 = vadd.xlane.f32.xlu0 %v31
  %v33 = vpop.xlane.xlu0 %32
  %v34 = vadd.f32 %v20, %v21
  %v35 = vadd.f32 %v34, %v22
  %36 = vadd.xlane.f32.xlu0 %v35
  %v37 = vpop.xlane.xlu0 %36
  %v38 = vadd.f32 %v23, %v24
  %v39 = vadd.f32 %v38, %v25
  %40 = vadd.xlane.f32.xlu0 %v39
  %v41 = vpop.xlane.xlu0 %40
  %v42 = vrcp.pop 384.0
  %v43 = vmul.f32 %v29, %v42
  %v44 = vmul.f32 %v33, %v42
  %v45 = vmul.f32 %v37, %v42
  %v46 = vmul.f32 %v41, %v42
  %v47 = vsub.f32 %v14, %v43
  %v48 = vsub.f32 %v15, %v43
  %v49 = vsub.f32 %v16, %v43
  %v50 = vsub.f32 %v17, %v44
  %v51 = vsub.f32 %v18, %v44
  %v52 = vsub.f32 %v19, %v44
  %v53 = vsub.f32 %v20, %v45
  %v54 = vsub.f32 %v21, %v45
  %v55 = vsub.f32 %v22, %v45
  %v56 = vsub.f32 %v23, %v46
  %v57 = vsub.f32 %v24, %v46
  %v58 = vsub.f32 %v25, %v46
  %v59 = vmul.f32 %v47, %v47
  %v60 = vmul.f32 %v48, %v48
  %v61 = vmul.f32 %v49, %v49
  %v62 = vmul.f32 %v50, %v50
  %v63 = vmul.f32 %v51, %v51
  %v64 = vmul.f32 %v52, %v52
  %v65 = vmul.f32 %v53, %v53
  %v66 = vmul.f32 %v54, %v54
  %v67 = vmul.f32 %v55, %v55
  %v68 = vmul.f32 %v56, %v56
  %v69 = vmul.f32 %v57, %v57
  %v70 = vmul.f32 %v58, %v58
  %v71 = vadd.f32 %v59, %v60
  %v72 = vadd.f32 %v71, %v61
  %73 = vadd.xlane.f32.xlu0 %v72
  %v74 = vpop.xlane.xlu0 %73
  %v75 = vadd.f32 %v62, %v63
  %v76 = vadd.f32 %v75, %v64
  %77 = vadd.xlane.f32.xlu0 %v76
  %v78 = vpop.xlane.xlu0 %77
  %v79 = vadd.f32 %v65, %v66
  %v80 = vadd.f32 %v79, %v67
  %81 = vadd.xlane.f32.xlu0 %v80
  %v82 = vpop.xlane.xlu0 %81
  %v83 = vadd.f32 %v68, %v69
  %v84 = vadd.f32 %v83, %v70
  %85 = vadd.xlane.f32.xlu0 %v84
  %v86 = vpop.xlane.xlu0 %85
  %v87 = vmul.f32 %v74, %v42
  %v88 = vmul.f32 %v78, %v42
  %v89 = vmul.f32 %v82, %v42
  %v90 = vmul.f32 %v86, %v42
  %v91 = vadd.f32 %v87, 1e-05
  %v92 = vadd.f32 %v88, 1e-05
  %v93 = vadd.f32 %v89, 1e-05
  %v94 = vadd.f32 %v90, 1e-05
  %v95 = vrsqrt.pop %v91
  %v96 = vrsqrt.pop %v92
  %v97 = vrsqrt.pop %v93
  %v98 = vrsqrt.pop %v94
  %v99 = vmul.f32 %v47, %v95
  %v100 = vmul.f32 %v48, %v95
  %v101 = vmul.f32 %v49, %v95
  %v102 = vmul.f32 %v50, %v96
  %v103 = vmul.f32 %v51, %v96
  %v104 = vmul.f32 %v52, %v96
  %v105 = vmul.f32 %v53, %v97
  %v106 = vmul.f32 %v54, %v97
  %v107 = vmul.f32 %v55, %v97
  %v108 = vmul.f32 %v56, %v98
  %v109 = vmul.f32 %v57, %v98
  %v110 = vmul.f32 %v58, %v98
  %v111 = vld [vmem:[%s1] sm:$0x7]
  %v113 = vlaneseq
  %v114 = vshrl.u32 %v113, 7
  %v115 = vsub.s32 0, %v114
  %v116 = vrot.slane %v111, %v115
  %v117 = vlaneseq
  %v118 = vshrl.u32 %v117, 7
  %v119 = vsub.s32 1, %v118
  %v120 = vrot.slane %v111, %v119
  %v121 = vlaneseq
  %v122 = vshrl.u32 %v121, 7
  %v123 = vsub.s32 2, %v122
  %v124 = vrot.slane %v111, %v123
  %v128 = vmul.f32 %v99, %v116
  %v129 = vmul.f32 %v100, %v120
  %v130 = vmul.f32 %v101, %v124
  %v131 = vmul.f32 %v102, %v116
  %v132 = vmul.f32 %v103, %v120
  %v133 = vmul.f32 %v104, %v124
  %v134 = vmul.f32 %v105, %v116
  %v135 = vmul.f32 %v106, %v120
  %v136 = vmul.f32 %v107, %v124
  %v137 = vmul.f32 %v108, %v116
  %v138 = vmul.f32 %v109, %v120
  %v139 = vmul.f32 %v110, %v124
  %v140 = vld [vmem:[%s2] sm:$0x7]
  %v142 = vlaneseq
  %v143 = vshrl.u32 %v142, 7
  %v144 = vsub.s32 0, %v143
  %v145 = vrot.slane %v140, %v144
  %v146 = vlaneseq
  %v147 = vshrl.u32 %v146, 7
  %v148 = vsub.s32 1, %v147
  %v149 = vrot.slane %v140, %v148
  %v150 = vlaneseq
  %v151 = vshrl.u32 %v150, 7
  %v152 = vsub.s32 2, %v151
  %v153 = vrot.slane %v140, %v152
  %v157 = vadd.f32 %v128, %v145
  %v158 = vadd.f32 %v129, %v149
  %v159 = vadd.f32 %v130, %v153
  %v160 = vadd.f32 %v131, %v145
  %v161 = vadd.f32 %v132, %v149
  %v162 = vadd.f32 %v133, %v153
  %v163 = vadd.f32 %v134, %v145
  %v164 = vadd.f32 %v135, %v149
  %v165 = vadd.f32 %v136, %v153
  %v166 = vadd.f32 %v137, %v145
  %v167 = vadd.f32 %v138, %v149
  %v168 = vadd.f32 %v139, %v153
  %169 = vst [vmem:[%s3] sm:$0xff] %v157
  %170 = vst [vmem:[%s3 + $0x8] sm:$0xff] %v158
  %171 = vst [vmem:[%s3 + $0x10] sm:$0xff] %v159
  %172 = vst [vmem:[%s3 + $0x18] sm:$0xff] %v160
  %173 = vst [vmem:[%s3 + $0x20] sm:$0xff] %v161
  %174 = vst [vmem:[%s3 + $0x28] sm:$0xff] %v162
  %175 = vst [vmem:[%s3 + $0x30] sm:$0xff] %v163
  %176 = vst [vmem:[%s3 + $0x38] sm:$0xff] %v164
  %177 = vst [vmem:[%s3 + $0x40] sm:$0xff] %v165
  %178 = vst [vmem:[%s3 + $0x48] sm:$0xff] %v166
  %179 = vst [vmem:[%s3 + $0x50] sm:$0xff] %v167
  %180 = vst [vmem:[%s3 + $0x58] sm:$0xff] %v168
  // Predicated region
  $region14: #{gpt_forward.18} parent=0 // pred_check
    _
  $region15: #{gpt_forward.18} parent=0 // pred_check_branch
    %182 = sbr.rel (0) target = $region17
  $region16: #{gpt_forward.18} parent=0 // pred_region
    _
  $region17: #{gpt_forward.18} parent=0 // pred_fallthru
    _
  // Predicated region
  $region18: #{gpt_forward.18} parent=0 // pred_check
    _
  $region19: #{gpt_forward.18} parent=0 // pred_check_branch
    %184 = sbr.rel (0) target = $region21
  $region20: #{gpt_forward.18} parent=0 // pred_region
    _
  $region21: #{gpt_forward.18} parent=0 // pred_fallthru
    _

// kernel: gpt_forward.19
$region0: #{gpt_forward.19}
  #allocation0 [shape = 'u32[]', space=smem, size = 0x4, offset = 0x4, fixed_abs, tag = 'smem constant byte address 0x4 - core index']
  #allocation1 [shape = 'u32[144,128]{1,0:T(1,128)}', space=vmem, size = 0x12000, scoped, tag = 'internal scratch']
  %s0 = inlined_call_operand.vmem [shape: bf16[32,384], index: 0, kind: input, shape index: {}]
  %s1 = inlined_call_operand.vmem [shape: bf16[384,384], index: 1, kind: input, shape index: {}]
  %s2 = inlined_call_operand.vmem [shape: f32[1,384], index: 2, kind: input, shape index: {}]
  %s3 = inlined_call_operand.vmem [shape: f32[32,384], index: 3, kind: output, shape index: {}]
  %s4 = sld [smem:[#allocation0]]
  $region22: #{gpt_forward.19} parent=0
    _
  %s6 = ssub.s32 1, %s4
  %s7 = scalar_select 0, %s6, %s4
  // Predicated region
  $region2: #{gpt_forward.19} parent=0 // pred_check
    _
  $region3: #{gpt_forward.19} parent=0 // pred_check_branch
    %9 = sbr.rel (0) target = $region5
  $region4: #{gpt_forward.19} parent=0 // pred_region
    _
  $region5: #{gpt_forward.19} parent=0 // pred_fallthru
    _
  // Predicated region
  $region6: #{gpt_forward.19} parent=0 // pred_check
    _
  $region7: #{gpt_forward.19} parent=0 // pred_check_branch
    %11 = sbr.rel (0) target = $region9
  $region8: #{gpt_forward.19} parent=0 // pred_region
    _
  $region9: #{gpt_forward.19} parent=0 // pred_fallthru
    _
  // Predicated region
  $region10: #{gpt_forward.19} parent=0 // pred_check
    _
  $region11: #{gpt_forward.19} parent=0 // pred_check_branch
    %13 = sbr.rel (0) target = $region13
  $region12: #{gpt_forward.19} parent=0 // pred_region
    _
  $region13: #{gpt_forward.19} parent=0 // pred_fallthru
    _
  %v15 = vld [vmem:[%s0] sm:$0xff]
  %v16 = vld [vmem:[%s0 + $0x8] sm:$0xf]
  %v17 = vld [vmem:[%s0 + $0xc] sm:$0xff]
  %v18 = vld [vmem:[%s0 + $0x14] sm:$0xf]
  %v19 = vld [vmem:[%s0 + $0x18] sm:$0xff]
  %v20 = vld [vmem:[%s0 + $0x20] sm:$0xf]
  %v21 = vld [vmem:[%s0 + $0x24] sm:$0xff]
  %v22 = vld [vmem:[%s0 + $0x2c] sm:$0xf]
  %v23 = vld [vmem:[%s1] sm:$0xff]
  %v24 = vld [vmem:[%s1 + $0x8] sm:$0xf]
  %v25 = vld [vmem:[%s1 + $0xc] sm:$0xff]
  %v26 = vld [vmem:[%s1 + $0x14] sm:$0xf]
  %v27 = vld [vmem:[%s1 + $0x18] sm:$0xff]
  %v28 = vld [vmem:[%s1 + $0x20] sm:$0xf]
  %v29 = vld [vmem:[%s1 + $0x24] sm:$0xff]
  %v30 = vld [vmem:[%s1 + $0x2c] sm:$0xf]
  %v31 = vld [vmem:[%s1 + $0x30] sm:$0xff]
  %v32 = vld [vmem:[%s1 + $0x38] sm:$0xf]
  %v33 = vld [vmem:[%s1 + $0x3c] sm:$0xff]
  %v34 = vld [vmem:[%s1 + $0x44] sm:$0xf]
  %v35 = vld [vmem:[%s1 + $0x48] sm:$0xff]
  %v36 = vld [vmem:[%s1 + $0x50] sm:$0xf]
  %v37 = vld [vmem:[%s1 + $0x54] sm:$0xff]
  %v38 = vld [vmem:[%s1 + $0x5c] sm:$0xf]
  %v39 = vld [vmem:[%s1 + $0x60] sm:$0xff]
  %v40 = vld [vmem:[%s1 + $0x68] sm:$0xf]
  %v41 = vld [vmem:[%s1 + $0x6c] sm:$0xff]
  %v42 = vld [vmem:[%s1 + $0x74] sm:$0xf]
  %v43 = vld [vmem:[%s1 + $0x78] sm:$0xff]
  %v44 = vld [vmem:[%s1 + $0x80] sm:$0xf]
  %v45 = vld [vmem:[%s1 + $0x84] sm:$0xff]
  %v46 = vld [vmem:[%s1 + $0x8c] sm:$0xf]
  %v47 = vld [vmem:[%s1 + $0x90] sm:$0xff]
  %v48 = vld [vmem:[%s1 + $0x98] sm:$0xf]
  %v49 = vld [vmem:[%s1 + $0x9c] sm:$0xff]
  %v50 = vld [vmem:[%s1 + $0xa4] sm:$0xf]
  %v51 = vld [vmem:[%s1 + $0xa8] sm:$0xff]
  %v52 = vld [vmem:[%s1 + $0xb0] sm:$0xf]
  %v53 = vld [vmem:[%s1 + $0xb4] sm:$0xff]
  %v54 = vld [vmem:[%s1 + $0xbc] sm:$0xf]
  %v55 = vld [vmem:[%s1 + $0xc0] sm:$0xff]
  %v56 = vld [vmem:[%s1 + $0xc8] sm:$0xf]
  %v57 = vld [vmem:[%s1 + $0xcc] sm:$0xff]
  %v58 = vld [vmem:[%s1 + $0xd4] sm:$0xf]
  %v59 = vld [vmem:[%s1 + $0xd8] sm:$0xff]
  %v60 = vld [vmem:[%s1 + $0xe0] sm:$0xf]
  %v61 = vld [vmem:[%s1 + $0xe4] sm:$0xff]
  %v62 = vld [vmem:[%s1 + $0xec] sm:$0xf]
  %v63 = vld [vmem:[%s1 + $0xf0] sm:$0xff]
  %v64 = vld [vmem:[%s1 + $0xf8] sm:$0xf]
  %v65 = vld [vmem:[%s1 + $0xfc] sm:$0xff]
  %v66 = vld [vmem:[%s1 + $0x104] sm:$0xf]
  %v67 = vld [vmem:[%s1 + $0x108] sm:$0xff]
  %v68 = vld [vmem:[%s1 + $0x110] sm:$0xf]
  %v69 = vld [vmem:[%s1 + $0x114] sm:$0xff]
  %v70 = vld [vmem:[%s1 + $0x11c] sm:$0xf]
  %v71 = vld [vmem:[%s1 + $0x120] sm:$0xff]
  %v72 = vld [vmem:[%s1 + $0x128] sm:$0xf]
  %v73 = vld [vmem:[%s1 + $0x12c] sm:$0xff]
  %v74 = vld [vmem:[%s1 + $0x134] sm:$0xf]
  %v75 = vld [vmem:[%s1 + $0x138] sm:$0xff]
  %v76 = vld [vmem:[%s1 + $0x140] sm:$0xf]
  %v77 = vld [vmem:[%s1 + $0x144] sm:$0xff]
  %v78 = vld [vmem:[%s1 + $0x14c] sm:$0xf]
  %v79 = vld [vmem:[%s1 + $0x150] sm:$0xff]
  %v80 = vld [vmem:[%s1 + $0x158] sm:$0xf]
  %v81 = vld [vmem:[%s1 + $0x15c] sm:$0xff]
  %v82 = vld [vmem:[%s1 + $0x164] sm:$0xf]
  %v83 = vld [vmem:[%s1 + $0x168] sm:$0xff]
  %v84 = vld [vmem:[%s1 + $0x170] sm:$0xf]
  %v85 = vld [vmem:[%s1 + $0x174] sm:$0xff]
  %v86 = vld [vmem:[%s1 + $0x17c] sm:$0xf]
  %v87 = vld [vmem:[%s1 + $0x180] sm:$0xff]
  %v88 = vld [vmem:[%s1 + $0x188] sm:$0xf]
  %v89 = vld [vmem:[%s1 + $0x18c] sm:$0xff]
  %v90 = vld [vmem:[%s1 + $0x194] sm:$0xf]
  %v91 = vld [vmem:[%s1 + $0x198] sm:$0xff]
  %v92 = vld [vmem:[%s1 + $0x1a0] sm:$0xf]
  %v93 = vld [vmem:[%s1 + $0x1a4] sm:$0xff]
  %v94 = vld [vmem:[%s1 + $0x1ac] sm:$0xf]
  %v95 = vld [vmem:[%s1 + $0x1b0] sm:$0xff]
  %v96 = vld [vmem:[%s1 + $0x1b8] sm:$0xf]
  %v97 = vld [vmem:[%s1 + $0x1bc] sm:$0xff]
  %v98 = vld [vmem:[%s1 + $0x1c4] sm:$0xf]
  %v99 = vld [vmem:[%s1 + $0x1c8] sm:$0xff]
  %v100 = vld [vmem:[%s1 + $0x1d0] sm:$0xf]
  %v101 = vld [vmem:[%s1 + $0x1d4] sm:$0xff]
  %v102 = vld [vmem:[%s1 + $0x1dc] sm:$0xf]
  %v103 = vld [vmem:[%s1 + $0x1e0] sm:$0xff]
  %v104 = vld [vmem:[%s1 + $0x1e8] sm:$0xf]
  %v105 = vld [vmem:[%s1 + $0x1ec] sm:$0xff]
  %v106 = vld [vmem:[%s1 + $0x1f4] sm:$0xf]
  %v107 = vld [vmem:[%s1 + $0x1f8] sm:$0xff]
  %v108 = vld [vmem:[%s1 + $0x200] sm:$0xf]
  %v109 = vld [vmem:[%s1 + $0x204] sm:$0xff]
  %v110 = vld [vmem:[%s1 + $0x20c] sm:$0xf]
  %v111 = vld [vmem:[%s1 + $0x210] sm:$0xff]
  %v112 = vld [vmem:[%s1 + $0x218] sm:$0xf]
  %v113 = vld [vmem:[%s1 + $0x21c] sm:$0xff]
  %v114 = vld [vmem:[%s1 + $0x224] sm:$0xf]
  %v115 = vld [vmem:[%s1 + $0x228] sm:$0xff]
  %v116 = vld [vmem:[%s1 + $0x230] sm:$0xf]
  %v117 = vld [vmem:[%s1 + $0x234] sm:$0xff]
  %v118 = vld [vmem:[%s1 + $0x23c] sm:$0xf]
  %v119 = vld [vmem:[%s2] sm:$0x7]
  %v121 = vlaneseq
  %v122 = vshrl.u32 %v121, 7
  %v123 = vsub.s32 0, %v122
  %v124 = vrot.slane %v119, %v123
  %v125 = vlaneseq
  %v126 = vshrl.u32 %v125, 7
  %v127 = vsub.s32 1, %v126
  %v128 = vrot.slane %v119, %v127
  %v129 = vlaneseq
  %v130 = vshrl.u32 %v129, 7
  %v131 = vsub.s32 2, %v130
  %v132 = vrot.slane %v119, %v131
  %v144 = vunpack.c.l.b16 %v15
  %v145 = vunpack.c.h.b16 %v15
  %v146 = vunpack.c.l.b16 %v16
  %v147 = vunpack.c.l.b16 %v17
  %v148 = vunpack.c.h.b16 %v17
  %v149 = vunpack.c.l.b16 %v18
  %v150 = vunpack.c.l.b16 %v19
  %v151 = vunpack.c.h.b16 %v19
  %v152 = vunpack.c.l.b16 %v20
  %v153 = vunpack.c.l.b16 %v21
  %v154 = vunpack.c.h.b16 %v21
  %v155 = vunpack.c.l.b16 %v22
  %v156 = vpack.c.b16 %v147, %v144
  %v157 = vpack.c.b16 %v148, %v145
  %v158 = vpack.c.b16 %v149, %v146
  %v159 = vpack.c.b16 %v153, %v150
  %v160 = vpack.c.b16 %v154, %v151
  %v161 = vpack.c.b16 %v155, %v152
  %v264 = vunpack.c.l.b16 %v23
  %v265 = vunpack.c.h.b16 %v23
  %v266 = vunpack.c.l.b16 %v24
  %v267 = vunpack.c.l.b16 %v25
  %v268 = vunpack.c.h.b16 %v25
  %v269 = vunpack.c.l.b16 %v26
  %v270 = vunpack.c.l.b16 %v27
  %v271 = vunpack.c.h.b16 %v27
  %v272 = vunpack.c.l.b16 %v28
  %v273 = vunpack.c.l.b16 %v29
  %v274 = vunpack.c.h.b16 %v29
  %v275 = vunpack.c.l.b16 %v30
  %v276 = vunpack.c.l.b16 %v31
  %v277 = vunpack.c.h.b16 %v31
  %v278 = vunpack.c.l.b16 %v32
  %v279 = vunpack.c.l.b16 %v33
  %v280 = vunpack.c.h.b16 %v33
  %v281 = vunpack.c.l.b16 %v34
  %v282 = vunpack.c.l.b16 %v35
  %v283 = vunpack.c.h.b16 %v35
  %v284 = vunpack.c.l.b16 %v36
  %v285 = vunpack.c.l.b16 %v37
  %v286 = vunpack.c.h.b16 %v37
  %v287 = vunpack.c.l.b16 %v38
  %v288 = vunpack.c.l.b16 %v39
  %v289 = vunpack.c.h.b16 %v39
  %v290 = vunpack.c.l.b16 %v40
  %v291 = vunpack.c.l.b16 %v41
  %v292 = vunpack.c.h.b16 %v41
  %v293 = vunpack.c.l.b16 %v42
  %v294 = vunpack.c.l.b16 %v43
  %v295 = vunpack.c.h.b16 %v43
  %v296 = vunpack.c.l.b16 %v44
  %v297 = vunpack.c.l.b16 %v45
  %v298 = vunpack.c.h.b16 %v45
  %v299 = vunpack.c.l.b16 %v46
  %v300 = vunpack.c.l.b16 %v47
  %v301 = vunpack.c.h.b16 %v47
  %v302 = vunpack.c.l.b16 %v48
  %v303 = vunpack.c.l.b16 %v49
  %v304 = vunpack.c.h.b16 %v49
  %v305 = vunpack.c.l.b16 %v50
  %v306 = vunpack.c.l.b16 %v51
  %v307 = vunpack.c.h.b16 %v51
  %v308 = vunpack.c.l.b16 %v52
  %v309 = vunpack.c.l.b16 %v53
  %v310 = vunpack.c.h.b16 %v53
  %v311 = vunpack.c.l.b16 %v54
  %v312 = vunpack.c.l.b16 %v55
  %v313 = vunpack.c.h.b16 %v55
  %v314 = vunpack.c.l.b16 %v56
  %v315 = vunpack.c.l.b16 %v57
  %v316 = vunpack.c.h.b16 %v57
  %v317 = vunpack.c.l.b16 %v58
  %v318 = vunpack.c.l.b16 %v59
  %v319 = vunpack.c.h.b16 %v59
  %v320 = vunpack.c.l.b16 %v60
  %v321 = vunpack.c.l.b16 %v61
  %v322 = vunpack.c.h.b16 %v61
  %v323 = vunpack.c.l.b16 %v62
  %v324 = vunpack.c.l.b16 %v63
  %v325 = vunpack.c.h.b16 %v63
  %v326 = vunpack.c.l.b16 %v64
  %v327 = vunpack.c.l.b16 %v65
  %v328 = vunpack.c.h.b16 %v65
  %v329 = vunpack.c.l.b16 %v66
  %v330 = vunpack.c.l.b16 %v67
  %v331 = vunpack.c.h.b16 %v67
  %v332 = vunpack.c.l.b16 %v68
  %v333 = vunpack.c.l.b16 %v69
  %v334 = vunpack.c.h.b16 %v69
  %v335 = vunpack.c.l.b16 %v70
  %v336 = vunpack.c.l.b16 %v71
  %v337 = vunpack.c.h.b16 %v71
  %v338 = vunpack.c.l.b16 %v72
  %v339 = vunpack.c.l.b16 %v73
  %v340 = vunpack.c.h.b16 %v73
  %v341 = vunpack.c.l.b16 %v74
  %v342 = vunpack.c.l.b16 %v75
  %v343 = vunpack.c.h.b16 %v75
  %v344 = vunpack.c.l.b16 %v76
  %v345 = vunpack.c.l.b16 %v77
  %v346 = vunpack.c.h.b16 %v77
  %v347 = vunpack.c.l.b16 %v78
  %v348 = vunpack.c.l.b16 %v79
  %v349 = vunpack.c.h.b16 %v79
  %v350 = vunpack.c.l.b16 %v80
  %v351 = vunpack.c.l.b16 %v81
  %v352 = vunpack.c.h.b16 %v81
  %v353 = vunpack.c.l.b16 %v82
  %v354 = vunpack.c.l.b16 %v83
  %v355 = vunpack.c.h.b16 %v83
  %v356 = vunpack.c.l.b16 %v84
  %v357 = vunpack.c.l.b16 %v85
  %v358 = vunpack.c.h.b16 %v85
  %v359 = vunpack.c.l.b16 %v86
  %v360 = vunpack.c.l.b16 %v87
  %v361 = vunpack.c.h.b16 %v87
  %v362 = vunpack.c.l.b16 %v88
  %v363 = vunpack.c.l.b16 %v89
  %v364 = vunpack.c.h.b16 %v89
  %v365 = vunpack.c.l.b16 %v90
  %v366 = vunpack.c.l.b16 %v91
  %v367 = vunpack.c.h.b16 %v91
  %v368 = vunpack.c.l.b16 %v92
  %v369 = vunpack.c.l.b16 %v93
  %v370 = vunpack.c.h.b16 %v93
  %v371 = vunpack.c.l.b16 %v94
  %v372 = vunpack.c.l.b16 %v95
  %v373 = vunpack.c.h.b16 %v95
  %v374 = vunpack.c.l.b16 %v96
  %v375 = vunpack.c.l.b16 %v97
  %v376 = vunpack.c.h.b16 %v97
  %v377 = vunpack.c.l.b16 %v98
  %v378 = vunpack.c.l.b16 %v99
  %v379 = vunpack.c.h.b16 %v99
  %v380 = vunpack.c.l.b16 %v100
  %v381 = vunpack.c.l.b16 %v101
  %v382 = vunpack.c.h.b16 %v101
  %v383 = vunpack.c.l.b16 %v102
  %v384 = vunpack.c.l.b16 %v103
  %v385 = vunpack.c.h.b16 %v103
  %v386 = vunpack.c.l.b16 %v104
  %v387 = vunpack.c.l.b16 %v105
  %v388 = vunpack.c.h.b16 %v105
  %v389 = vunpack.c.l.b16 %v106
  %v390 = vunpack.c.l.b16 %v107
  %v391 = vunpack.c.h.b16 %v107
  %v392 = vunpack.c.l.b16 %v108
  %v393 = vunpack.c.l.b16 %v109
  %v394 = vunpack.c.h.b16 %v109
  %v395 = vunpack.c.l.b16 %v110
  %v396 = vunpack.c.l.b16 %v111
  %v397 = vunpack.c.h.b16 %v111
  %v398 = vunpack.c.l.b16 %v112
  %v399 = vunpack.c.l.b16 %v113
  %v400 = vunpack.c.h.b16 %v113
  %v401 = vunpack.c.l.b16 %v114
  %v402 = vunpack.c.l.b16 %v115
  %v403 = vunpack.c.h.b16 %v115
  %v404 = vunpack.c.l.b16 %v116
  %v405 = vunpack.c.l.b16 %v117
  %v406 = vunpack.c.h.b16 %v117
  %v407 = vunpack.c.l.b16 %v118
  %v408 = vpack.c.b16 %v267, %v264
  %v409 = vpack.c.b16 %v268, %v265
  %v410 = vpack.c.b16 %v269, %v266
  %v411 = vpack.c.b16 %v273, %v270
  %v412 = vpack.c.b16 %v274, %v271
  %v413 = vpack.c.b16 %v275, %v272
  %v414 = vpack.c.b16 %v279, %v276
  %v415 = vpack.c.b16 %v280, %v277
  %v416 = vpack.c.b16 %v281, %v278
  %v417 = vpack.c.b16 %v285, %v282
  %v418 = vpack.c.b16 %v286, %v283
  %v419 = vpack.c.b16 %v287, %v284
  %v420 = vpack.c.b16 %v291, %v288
  %v421 = vpack.c.b16 %v292, %v289
  %v422 = vpack.c.b16 %v293, %v290
  %v423 = vpack.c.b16 %v297, %v294
  %v424 = vpack.c.b16 %v298, %v295
  %v425 = vpack.c.b16 %v299, %v296
  %v426 = vpack.c.b16 %v303, %v300
  %v427 = vpack.c.b16 %v304, %v301
  %v428 = vpack.c.b16 %v305, %v302
  %v429 = vpack.c.b16 %v309, %v306
  %v430 = vpack.c.b16 %v310, %v307
  %v431 = vpack.c.b16 %v311, %v308
  %v432 = vpack.c.b16 %v315, %v312
  %v433 = vpack.c.b16 %v316, %v313
  %v434 = vpack.c.b16 %v317, %v314
  %v435 = vpack.c.b16 %v321, %v318
  %v436 = vpack.c.b16 %v322, %v319
  %v437 = vpack.c.b16 %v323, %v320
  %v438 = vpack.c.b16 %v327, %v324
  %v439 = vpack.c.b16 %v328, %v325
  %v440 = vpack.c.b16 %v329, %v326
  %v441 = vpack.c.b16 %v333, %v330
  %v442 = vpack.c.b16 %v334, %v331
  %v443 = vpack.c.b16 %v335, %v332
  %v444 = vpack.c.b16 %v339, %v336
  %v445 = vpack.c.b16 %v340, %v337
  %v446 = vpack.c.b16 %v341, %v338
  %v447 = vpack.c.b16 %v345, %v342
  %v448 = vpack.c.b16 %v346, %v343
  %v449 = vpack.c.b16 %v347, %v344
  %v450 = vpack.c.b16 %v351, %v348
  %v451 = vpack.c.b16 %v352, %v349
  %v452 = vpack.c.b16 %v353, %v350
  %v453 = vpack.c.b16 %v357, %v354
  %v454 = vpack.c.b16 %v358, %v355
  %v455 = vpack.c.b16 %v359, %v356
  %v456 = vpack.c.b16 %v363, %v360
  %v457 = vpack.c.b16 %v364, %v361
  %v458 = vpack.c.b16 %v365, %v362
  %v459 = vpack.c.b16 %v369, %v366
  %v460 = vpack.c.b16 %v370, %v367
  %v461 = vpack.c.b16 %v371, %v368
  %v462 = vpack.c.b16 %v375, %v372
  %v463 = vpack.c.b16 %v376, %v373
  %v464 = vpack.c.b16 %v377, %v374
  %v465 = vpack.c.b16 %v381, %v378
  %v466 = vpack.c.b16 %v382, %v379
  %v467 = vpack.c.b16 %v383, %v380
  %v468 = vpack.c.b16 %v387, %v384
  %v469 = vpack.c.b16 %v388, %v385
  %v470 = vpack.c.b16 %v389, %v386
  %v471 = vpack.c.b16 %v393, %v390
  %v472 = vpack.c.b16 %v394, %v391
  %v473 = vpack.c.b16 %v395, %v392
  %v474 = vpack.c.b16 %v399, %v396
  %v475 = vpack.c.b16 %v400, %v397
  %v476 = vpack.c.b16 %v401, %v398
  %v477 = vpack.c.b16 %v405, %v402
  %v478 = vpack.c.b16 %v406, %v403
  %v479 = vpack.c.b16 %v407, %v404
  %552 = vmatprep.subr.bf16.mxu0 %v409
  %553 = vmatpush1.bf16.msra.mxu0 %v408
  %554 = vmatprep.subr.bf16.mxu0 %v412
  %555 = vmatpush1.bf16.msra.mxu0 %v411
  %556 = vmatprep.subr.bf16.mxu0 %v415
  %557 = vmatpush1.bf16.msra.mxu0 %v414
  %558 = vmatprep.subr.bf16.mxu0 %v418
  %559 = vmatpush1.bf16.msra.mxu0 %v417
  %560 = vmatprep.subr.bf16.mxu0 %v421
  %561 = vmatpush1.bf16.msra.mxu0 %v420
  %562 = vmatprep.subr.bf16.mxu0 %v424
  %563 = vmatpush1.bf16.msra.mxu0 %v423
  %564 = vmatprep.subr.bf16.mxu0 %v427
  %565 = vmatpush1.bf16.msra.mxu0 %v426
  %566 = vmatprep.subr.bf16.mxu0 %v430
  %567 = vmatpush1.bf16.msra.mxu0 %v429
  %568 = vmatprep.subr.bf16.mxu0 %v433
  %569 = vmatpush1.bf16.msra.mxu0 %v432
  %570 = vmatprep.subr.bf16.mxu0 %v436
  %571 = vmatpush1.bf16.msra.mxu0 %v435
  %572 = vmatprep.subr.bf16.mxu0 %v439
  %573 = vmatpush1.bf16.msra.mxu0 %v438
  %574 = vmatprep.subr.bf16.mxu0 %v442
  %575 = vmatpush1.bf16.msra.mxu0 %v441
  %576 = vmatprep.subr.bf16.mxu0 %v445
  %577 = vmatpush1.bf16.msra.mxu0 %v444
  %578 = vmatprep.subr.bf16.mxu0 %v448
  %579 = vmatpush1.bf16.msra.mxu0 %v447
  %580 = vmatprep.subr.bf16.mxu0 %v451
  %581 = vmatpush1.bf16.msra.mxu0 %v450
  %582 = vmatprep.subr.bf16.mxu0 %v454
  %583 = vmatpush1.bf16.msra.mxu0 %v453
  %584 = vmatprep.mubr.bf16.mxu0 %v157
  %585 = vmatmul.mubr.bf16.gmra.mrb[0].mxu0 %v156
  %v586 = vpop.f32.mrb[0].mxu0
  %v587 = vadd.f32 %v124, %v586
  %v588 = vpop.f32.mrb[0].mxu0
  %v589 = vadd.f32 %v128, %v588
  %v590 = vpop.f32.mrb[0].mxu0
  %v591 = vadd.f32 %v124, %v590
  %v592 = vpop.f32.mrb[0].mxu0
  %v593 = vadd.f32 %v128, %v592
  %594 = vmatprep.mubr.bf16.mxu0 %v160
  %595 = vmatmul.mubr.bf16.gmra.mrb[0].mxu0 %v159
  %v596 = vpop.f32.mrb[0].mxu0
  %v597 = vadd.f32 %v124, %v596
  %v598 = vpop.f32.mrb[0].mxu0
  %v599 = vadd.f32 %v128, %v598
  %v600 = vpop.f32.mrb[0].mxu0
  %v601 = vadd.f32 %v124, %v600
  %v602 = vpop.f32.mrb[0].mxu0
  %v603 = vadd.f32 %v128, %v602
  %604 = vdwg.mxu0
  %605 = vmatprep.subr.bf16.mxu0 %v457
  %606 = vmatpush1.bf16.msra.mxu0 %v456
  %607 = vmatprep.subr.bf16.mxu0 %v460
  %608 = vmatpush1.bf16.msra.mxu0 %v459
  %609 = vmatprep.subr.bf16.mxu0 %v463
  %610 = vmatpush1.bf16.msra.mxu0 %v462
  %611 = vmatprep.subr.bf16.mxu0 %v466
  %612 = vmatpush1.bf16.msra.mxu0 %v465
  %613 = vmatprep.subr.bf16.mxu0 %v469
  %614 = vmatpush1.bf16.msra.mxu0 %v468
  %615 = vmatprep.subr.bf16.mxu0 %v472
  %616 = vmatpush1.bf16.msra.mxu0 %v471
  %617 = vmatprep.subr.bf16.mxu0 %v475
  %618 = vmatpush1.bf16.msra.mxu0 %v474
  %619 = vmatprep.subr.bf16.mxu0 %v478
  %620 = vmatpush1.bf16.msra.mxu0 %v477
  %621 = vmatprep.subr.bf16.mxu0 0
  %622 = vmatpush1.bf16.msra.mxu0 0
  %623 = vmatprep.subr.bf16.mxu0 0
  %624 = vmatpush1.bf16.msra.mxu0 0
  %625 = vmatprep.subr.bf16.mxu0 0
  %626 = vmatpush1.bf16.msra.mxu0 0
  %627 = vmatprep.subr.bf16.mxu0 0
  %628 = vmatpush1.bf16.msra.mxu0 0
  %629 = vmatprep.subr.bf16.mxu0 0
  %630 = vmatpush1.bf16.msra.mxu0 0
  %631 = vmatprep.subr.bf16.mxu0 0
  %632 = vmatpush1.bf16.msra.mxu0 0
  %633 = vmatprep.subr.bf16.mxu0 0
  %634 = vmatpush1.bf16.msra.mxu0 0
  %635 = vmatprep.subr.bf16.mxu0 0
  %636 = vmatpush1.bf16.msra.mxu0 0
  %637 = vmatprep.mubr.bf16.mxu0 0
  %638 = vmatmul.mubr.bf16.gmra.mrb[0].mxu0 %v158
  %v639 = vpop.f32.mrb[0].mxu0
  %v640 = vadd.f32 %v587, %v639
  %v641 = vpop.f32.mrb[0].mxu0
  %v642 = vadd.f32 %v589, %v641
  %v643 = vpop.f32.mrb[0].mxu0
  %v644 = vadd.f32 %v591, %v643
  %v645 = vpop.f32.mrb[0].mxu0
  %v646 = vadd.f32 %v593, %v645
  %647 = vmatprep.mubr.bf16.mxu0 0
  %648 = vmatmul.mubr.bf16.gmra.mrb[0].mxu0 %v161
  %v649 = vpop.f32.mrb[0].mxu0
  %v650 = vadd.f32 %v597, %v649
  %v651 = vpop.f32.mrb[0].mxu0
  %v652 = vadd.f32 %v599, %v651
  %v653 = vpop.f32.mrb[0].mxu0
  %v654 = vadd.f32 %v601, %v653
  %v655 = vpop.f32.mrb[0].mxu0
  %v656 = vadd.f32 %v603, %v655
  %657 = vdwg.mxu0
  %658 = vmatprep.subr.bf16.mxu0 0
  %659 = vmatpush1.bf16.msra.mxu0 %v410
  %660 = vmatprep.subr.bf16.mxu0 0
  %661 = vmatpush1.bf16.msra.mxu0 %v413
  %662 = vmatprep.subr.bf16.mxu0 0
  %663 = vmatpush1.bf16.msra.mxu0 %v416
  %664 = vmatprep.subr.bf16.mxu0 0
  %665 = vmatpush1.bf16.msra.mxu0 %v419
  %666 = vmatprep.subr.bf16.mxu0 0
  %667 = vmatpush1.bf16.msra.mxu0 %v422
  %668 = vmatprep.subr.bf16.mxu0 0
  %669 = vmatpush1.bf16.msra.mxu0 %v425
  %670 = vmatprep.subr.bf16.mxu0 0
  %671 = vmatpush1.bf16.msra.mxu0 %v428
  %672 = vmatprep.subr.bf16.mxu0 0
  %673 = vmatpush1.bf16.msra.mxu0 %v431
  %674 = vmatprep.subr.bf16.mxu0 0
  %675 = vmatpush1.bf16.msra.mxu0 %v434
  %676 = vmatprep.subr.bf16.mxu0 0
  %677 = vmatpush1.bf16.msra.mxu0 %v437
  %678 = vmatprep.subr.bf16.mxu0 0
  %679 = vmatpush1.bf16.msra.mxu0 %v440
  %680 = vmatprep.subr.bf16.mxu0 0
  %681 = vmatpush1.bf16.msra.mxu0 %v443
  %682 = vmatprep.subr.bf16.mxu0 0
  %683 = vmatpush1.bf16.msra.mxu0 %v446
  %684 = vmatprep.subr.bf16.mxu0 0
  %685 = vmatpush1.bf16.msra.mxu0 %v449
  %686 = vmatprep.subr.bf16.mxu0 0
  %687 = vmatpush1.bf16.msra.mxu0 %v452
  %688 = vmatprep.subr.bf16.mxu0 0
  %689 = vmatpush1.bf16.msra.mxu0 %v455
  %690 = vmatprep.mubr.bf16.mxu0 %v157
  %691 = vmatmul.mubr.bf16.gmra.mrb[0].mxu0 %v156
  %v692 = vpop.f32.mrb[0].mxu0
  %v693 = vadd.f32 %v132, %v692
  %v694 = vpop.f32.mrb[0].mxu0
  %v695 = vpop.f32.mrb[0].mxu0
  %v696 = vadd.f32 %v132, %v695
  %v697 = vpop.f32.mrb[0].mxu0
  %698 = vmatprep.mubr.bf16.mxu0 %v160
  %699 = vmatmul.mubr.bf16.gmra.mrb[0].mxu0 %v159
  %v700 = vpop.f32.mrb[0].mxu0
  %v701 = vadd.f32 %v132, %v700
  %v702 = vpop.f32.mrb[0].mxu0
  %v703 = vpop.f32.mrb[0].mxu0
  %v704 = vadd.f32 %v132, %v703
  %v705 = vpop.f32.mrb[0].mxu0
  %706 = vdwg.mxu0
  %707 = vmatprep.subr.bf16.mxu0 0
  %708 = vmatpush1.bf16.msra.mxu0 %v458
  %709 = vmatprep.subr.bf16.mxu0 0
  %710 = vmatpush1.bf16.msra.mxu0 %v461
  %711 = vmatprep.subr.bf16.mxu0 0
  %712 = vmatpush1.bf16.msra.mxu0 %v464
  %713 = vmatprep.subr.bf16.mxu0 0
  %714 = vmatpush1.bf16.msra.mxu0 %v467
  %715 = vmatprep.subr.bf16.mxu0 0
  %716 = vmatpush1.bf16.msra.mxu0 %v470
  %717 = vmatprep.subr.bf16.mxu0 0
  %718 = vmatpush1.bf16.msra.mxu0 %v473
  %719 = vmatprep.subr.bf16.mxu0 0
  %720 = vmatpush1.bf16.msra.mxu0 %v476
  %721 = vmatprep.subr.bf16.mxu0 0
  %722 = vmatpush1.bf16.msra.mxu0 %v479
  %723 = vmatprep.subr.bf16.mxu0 0
  %724 = vmatpush1.bf16.msra.mxu0 0
  %725 = vmatprep.subr.bf16.mxu0 0
  %726 = vmatpush1.bf16.msra.mxu0 0
  %727 = vmatprep.subr.bf16.mxu0 0
  %728 = vmatpush1.bf16.msra.mxu0 0
  %729 = vmatprep.subr.bf16.mxu0 0
  %730 = vmatpush1.bf16.msra.mxu0 0
  %731 = vmatprep.subr.bf16.mxu0 0
  %732 = vmatpush1.bf16.msra.mxu0 0
  %733 = vmatprep.subr.bf16.mxu0 0
  %734 = vmatpush1.bf16.msra.mxu0 0
  %735 = vmatprep.subr.bf16.mxu0 0
  %736 = vmatpush1.bf16.msra.mxu0 0
  %737 = vmatprep.subr.bf16.mxu0 0
  %738 = vmatpush1.bf16.msra.mxu0 0
  %739 = vmatprep.mubr.bf16.mxu0 0
  %740 = vmatmul.mubr.bf16.gmra.mrb[0].mxu0 %v158
  %v741 = vpop.f32.mrb[0].mxu0
  %v742 = vadd.f32 %v693, %v741
  %v743 = vpop.f32.mrb[0].mxu0
  %v744 = vpop.f32.mrb[0].mxu0
  %v745 = vadd.f32 %v696, %v744
  %v746 = vpop.f32.mrb[0].mxu0
  %747 = vmatprep.mubr.bf16.mxu0 0
  %748 = vmatmul.mubr.bf16.gmra.mrb[0].mxu0 %v161
  %v749 = vpop.f32.mrb[0].mxu0
  %v750 = vadd.f32 %v701, %v749
  %v751 = vpop.f32.mrb[0].mxu0
  %v752 = vpop.f32.mrb[0].mxu0
  %v753 = vadd.f32 %v704, %v752
  %v754 = vpop.f32.mrb[0].mxu0
  %755 = vdwg.mxu0
  %756 = vst [vmem:[%s3] sm:$0xff] %v640
  %757 = vst [vmem:[%s3 + $0x8] sm:$0xff] %v642
  %758 = vst [vmem:[%s3 + $0x10] sm:$0xff] %v742
  %759 = vst [vmem:[%s3 + $0x18] sm:$0xff] %v644
  %760 = vst [vmem:[%s3 + $0x20] sm:$0xff] %v646
  %761 = vst [vmem:[%s3 + $0x28] sm:$0xff] %v745
  %762 = vst [vmem:[%s3 + $0x30] sm:$0xff] %v650
  %763 = vst [vmem:[%s3 + $0x38] sm:$0xff] %v652
  %764 = vst [vmem:[%s3 + $0x40] sm:$0xff] %v750
  %765 = vst [vmem:[%s3 + $0x48] sm:$0xff] %v654
  %766 = vst [vmem:[%s3 + $0x50] sm:$0xff] %v656
  %767 = vst [vmem:[%s3 + $0x58] sm:$0xff] %v753
  // Predicated region
  $region14: #{gpt_forward.19} parent=0 // pred_check
    _
  $region15: #{gpt_forward.19} parent=0 // pred_check_branch
    %769 = sbr.rel (0) target = $region17
  $region16: #{gpt_forward.19} parent=0 // pred_region
    _
  $region17: #{gpt_forward.19} parent=0 // pred_fallthru
    _
  // Predicated region
  $region18: #{gpt_forward.19} parent=0 // pred_check
    _
  $region19: #{gpt_forward.19} parent=0 // pred_check_branch
    %771 = sbr.rel (0) target = $region21
  $region20: #{gpt_forward.19} parent=0 // pred_region
    _
  $region21: #{gpt_forward.19} parent=0 // pred_fallthru
    _

// kernel: gpt_forward.22
$region0: #{gpt_forward.22}
  #allocation0 [shape = 'u32[]', space=smem, size = 0x4, offset = 0x4, fixed_abs, tag = 'smem constant byte address 0x4 - core index']
  #allocation1 [shape = 'u32[144,128]{1,0:T(1,128)}', space=vmem, size = 0x12000, scoped, tag = 'internal scratch']
  %s0 = inlined_call_operand.vmem [shape: bf16[12,16,64], index: 0, kind: input, shape index: {}]
  %s1 = inlined_call_operand.vmem [shape: bf16[12,16,64], index: 1, kind: input, shape index: {}]
  %s2 = inlined_call_operand.vmem [shape: bf16[12,16,64], index: 2, kind: input, shape index: {}]
  %s3 = inlined_call_operand.vmem [shape: f32[12,16,64], index: 3, kind: output, shape index: {}]
  %s4 = sld [smem:[#allocation0]]
  $region45: #{gpt_forward.22} parent=0
    _
  %s6 = ssub.s32 1, %s4
  %s7 = scalar_select 0, %s6, %s4
  loop: start=0, step=1, limit=14
  $region2: #{gpt_forward.22} parent=0 // loop_pre_header
    _
  $region3: #{gpt_forward.22} parent=0 // loop_header
    %s9 = sphi 0, %s13
    %p10 = scmp.ge.s32.totalorder %s9, 14
    %s19 = sphi 0, %s21
    %s22 = sphi 0, %s19
    %s23 = sphi 0, %s22
    %s39 = sphi 0, %s23
    %s45 = sphi 0, %s47
    %s48 = sphi 0, %s45
    %s49 = sphi 0, %s48
    %s65 = sphi 0, %s49
    %s71 = sphi 0, %s73
    %s74 = sphi 0, %s71
    %s75 = sphi 0, %s74
    %s91 = sphi 0, %s75
    %s97 = sphi 0, %s99
    %s100 = sphi 0, %s97
    %s101 = sphi 0, %s100
    %s117 = sphi 0, %s101
  $region4: #{gpt_forward.22} parent=0 // loop_header_branch
    %12 = sbr.rel (%p10) target = $region8
  $region5: #{gpt_forward.22} parent=0 // loop_body
    %s14 = ssub.s32 %s9, 1
    %s15 = ssub.s32 %s9, 2
    %s16 = sadd.s32 %s9, 1
    %s17 = ssub.s32 %s9, %s16
    %p18 = scmp.eq.s32.totalorder %s17, 0
    %s20 = sadd.s32 %s19, 1
    %s21 = scalar_select %p18, %s19, %s20
    %p24 = pneg %p18
    %p25 = scmp.eq.s32.totalorder %s9, 11
    %p26 = por %p24, %p25
    %p27 = scmp.ne.s32.totalorder %s19, %s22
    %p28 = scmp.eq.s32.totalorder %s9, 0
    %p29 = por %p27, %p28
    %p30 = scmp.ne.s32.totalorder %s19, %s22
    %p31 = scmp.eq.s32.totalorder %s14, 11
    %p32 = por %p30, %p31
    %p33 = scmp.ne.s32.totalorder %s22, %s23
    %p34 = scmp.eq.s32.totalorder %s14, 0
    %p35 = por %p33, %p34
    %p36 = scmp.ne.s32.totalorder %s22, %s23
    %p37 = scmp.eq.s32.totalorder %s15, 11
    %p38 = por %p36, %p37
    %p40 = scmp.ne.s32.totalorder %s23, %s39
    %p41 = scmp.eq.s32.totalorder %s15, 0
    %p42 = por %p40, %p41
    %s43 = ssub.s32 %s9, %s16
    %p44 = scmp.eq.s32.totalorder %s43, 0
    %s46 = sadd.s32 %s45, 1
    %s47 = scalar_select %p44, %s45, %s46
    %p50 = pneg %p44
    %p51 = scmp.eq.s32.totalorder %s9, 11
    %p52 = por %p50, %p51
    %p53 = scmp.ne.s32.totalorder %s45, %s48
    %p54 = scmp.eq.s32.totalorder %s9, 0
    %p55 = por %p53, %p54
    %p56 = scmp.ne.s32.totalorder %s45, %s48
    %p57 = scmp.eq.s32.totalorder %s14, 11
    %p58 = por %p56, %p57
    %p59 = scmp.ne.s32.totalorder %s48, %s49
    %p60 = scmp.eq.s32.totalorder %s14, 0
    %p61 = por %p59, %p60
    %p62 = scmp.ne.s32.totalorder %s48, %s49
    %p63 = scmp.eq.s32.totalorder %s15, 11
    %p64 = por %p62, %p63
    %p66 = scmp.ne.s32.totalorder %s49, %s65
    %p67 = scmp.eq.s32.totalorder %s15, 0
    %p68 = por %p66, %p67
    %s69 = ssub.s32 %s9, %s16
    %p70 = scmp.eq.s32.totalorder %s69, 0
    %s72 = sadd.s32 %s71, 1
    %s73 = scalar_select %p70, %s71, %s72
    %p76 = pneg %p70
    %p77 = scmp.eq.s32.totalorder %s9, 11
    %p78 = por %p76, %p77
    %p79 = scmp.ne.s32.totalorder %s71, %s74
    %p80 = scmp.eq.s32.totalorder %s9, 0
    %p81 = por %p79, %p80
    %p82 = scmp.ne.s32.totalorder %s71, %s74
    %p83 = scmp.eq.s32.totalorder %s14, 11
    %p84 = por %p82, %p83
    %p85 = scmp.ne.s32.totalorder %s74, %s75
    %p86 = scmp.eq.s32.totalorder %s14, 0
    %p87 = por %p85, %p86
    %p88 = scmp.ne.s32.totalorder %s74, %s75
    %p89 = scmp.eq.s32.totalorder %s15, 11
    %p90 = por %p88, %p89
    %p92 = scmp.ne.s32.totalorder %s75, %s91
    %p93 = scmp.eq.s32.totalorder %s15, 0
    %p94 = por %p92, %p93
    %s95 = ssub.s32 %s9, %s16
    %p96 = scmp.eq.s32.totalorder %s95, 0
    %s98 = sadd.s32 %s97, 1
    %s99 = scalar_select %p96, %s97, %s98
    %p102 = pneg %p96
    %p103 = scmp.eq.s32.totalorder %s9, 11
    %p104 = por %p102, %p103
    %p105 = scmp.ne.s32.totalorder %s97, %s100
    %p106 = scmp.eq.s32.totalorder %s9, 0
    %p107 = por %p105, %p106
    %p108 = scmp.ne.s32.totalorder %s97, %s100
    %p109 = scmp.eq.s32.totalorder %s14, 11
    %p110 = por %p108, %p109
    %p111 = scmp.ne.s32.totalorder %s100, %s101
    %p112 = scmp.eq.s32.totalorder %s14, 0
    %p113 = por %p111, %p112
    %p114 = scmp.ne.s32.totalorder %s100, %s101
    %p115 = scmp.eq.s32.totalorder %s15, 11
    %p116 = por %p114, %p115
    %p118 = scmp.ne.s32.totalorder %s101, %s117
    %p119 = scmp.eq.s32.totalorder %s15, 0
    %p120 = por %p118, %p119
    %p121 = scmp.le.s32.totalorder 1, %s9
    %p122 = scmp.lt.s32.totalorder %s9, 13
    %p123 = pnand %p121, %p122
    %p124 = pneg %p123
    // Predicated region
    $region9: #{gpt_forward.22} parent=5 // pred_check
      _
    $region10: #{gpt_forward.22} parent=5 // pred_check_branch
      %126 = sbr.rel (%p123) target = $region12
    $region11: #{gpt_forward.22} parent=5 // pred_region
      %s127 = ssub.s32 %s9, 1
    $region12: #{gpt_forward.22} parent=5 // pred_fallthru
      _
    %p128 = scmp.lt.s32.totalorder %s9, 12
    // Predicated region
    $region13: #{gpt_forward.22} parent=5 // pred_check
      %p129 = pneg %p128
    $region14: #{gpt_forward.22} parent=5 // pred_check_branch
      %131 = sbr.rel (%p129) target = $region16
    $region15: #{gpt_forward.22} parent=5 // pred_region
      // Predicated region
      $region17: #{gpt_forward.22} parent=15 // pred_check
        %p132 = pneg %p29
      $region18: #{gpt_forward.22} parent=15 // pred_check_branch
        %134 = sbr.rel (%p132) target = $region20
      $region19: #{gpt_forward.22} parent=15 // pred_region
        %p135 = scmp.lt.s32.totalorder %s9, 11
        %s136 = scalar_select %p135, %s9, 11
        %s137 = smul.addr %s136, 2
        %s138 = smul.addr %s137, 4
        %s139 = scalar_lea.vmem %s0, %s138
      $region20: #{gpt_forward.22} parent=15 // pred_fallthru
        _
      // Predicated region
      $region21: #{gpt_forward.22} parent=15 // pred_check
        %p140 = pneg %p55
      $region22: #{gpt_forward.22} parent=15 // pred_check_branch
        %142 = sbr.rel (%p140) target = $region24
      $region23: #{gpt_forward.22} parent=15 // pred_region
        %p143 = scmp.lt.s32.totalorder %s9, 11
        %s144 = scalar_select %p143, %s9, 11
        %s145 = smul.addr %s144, 2
        %s146 = smul.addr %s145, 4
        %s147 = scalar_lea.vmem %s1, %s146
      $region24: #{gpt_forward.22} parent=15 // pred_fallthru
        _
      // Predicated region
      $region25: #{gpt_forward.22} parent=15 // pred_check
        %p148 = pneg %p81
      $region26: #{gpt_forward.22} parent=15 // pred_check_branch
        %150 = sbr.rel (%p148) target = $region28
      $region27: #{gpt_forward.22} parent=15 // pred_region
        %p151 = scmp.lt.s32.totalorder %s9, 11
        %s152 = scalar_select %p151, %s9, 11
        %s153 = smul.addr %s152, 2
        %s154 = smul.addr %s153, 4
        %s155 = scalar_lea.vmem %s2, %s154
      $region28: #{gpt_forward.22} parent=15 // pred_fallthru
        _
    $region16: #{gpt_forward.22} parent=5 // pred_fallthru
      _
    %p156 = scmp.le.s32.totalorder 1, %s9
    %p157 = scmp.lt.s32.totalorder %s9, 13
    %p158 = pnand %p156, %p157
    %p159 = pneg %p158
    // Predicated region
    $region29: #{gpt_forward.22} parent=5 // pred_check
      _
    $region30: #{gpt_forward.22} parent=5 // pred_check_branch
      %161 = sbr.rel (%p158) target = $region32
    $region31: #{gpt_forward.22} parent=5 // pred_region
      %s162 = ssub.s32 %s9, 1
      %p163 = scmp.lt.s32.totalorder %s14, 11
      %s164 = scalar_select %p163, %s14, 11
      %s165 = smul.addr %s164, 2
      %s166 = smul.addr %s165, 4
      %s167 = scalar_lea.vmem %s0, %s166
      %p168 = pneg %p35
      %p169 = pneg %p32
      %p170 = scmp.lt.s32.totalorder %s14, 11
      %s171 = scalar_select %p170, %s14, 11
      %s172 = smul.addr %s171, 2
      %s173 = smul.addr %s172, 4
      %s174 = scalar_lea.vmem %s1, %s173
      %p175 = pneg %p61
      %p176 = pneg %p58
      %p177 = scmp.lt.s32.totalorder %s14, 11
      %s178 = scalar_select %p177, %s14, 11
      %s179 = smul.addr %s178, 2
      %s180 = smul.addr %s179, 4
      %s181 = scalar_lea.vmem %s2, %s180
      %p182 = pneg %p87
      %p183 = pneg %p84
      %p184 = pneg %p113
      %p185 = pneg %p110
      %p186 = scmp.lt.s32.totalorder %s14, 11
      %s187 = scalar_select %p186, %s14, 11
      %s188 = smul.addr %s187, 2
      %s189 = smul.addr %s188, 8
      %s190 = scalar_lea.vmem %s3, %s189
      %p191 = scmp.lt.s32.totalorder %s14, 11
      %s192 = scalar_select %p191, %s14, 11
      %s193 = smul.addr %s192, 2
      %s194 = smul.addr %s193, 4
      %s195 = scalar_lea.vmem %s0, %s194
      %p196 = scmp.lt.s32.totalorder %s14, 11
      %s197 = scalar_select %p196, %s14, 11
      %s198 = smul.addr %s197, 2
      %s199 = smul.addr %s198, 4
      %s200 = scalar_lea.vmem %s1, %s199
      %p201 = scmp.lt.s32.totalorder %s14, 11
      %s202 = scalar_select %p201, %s14, 11
      %s203 = smul.addr %s202, 2
      %s204 = smul.addr %s203, 4
      %s205 = scalar_lea.vmem %s2, %s204
      %p206 = scmp.lt.s32.totalorder %s14, 11
      %s207 = scalar_select %p206, %s14, 11
      %s208 = smul.addr %s207, 2
      %s209 = smul.addr %s208, 8
      %s210 = scalar_lea.vmem %s3, %s209
      %v212 = vld [vmem:[%s195] sm:$0xf]
      %v213 = vld [vmem:[%s195 + $0x4] sm:$0xf]
      %v214 = vld [vmem:[%s200] sm:$0xf]
      %v215 = vld [vmem:[%s200 + $0x4] sm:$0xf]
      %v216 = vld [vmem:[%s205] sm:$0xf]
      %v217 = vld [vmem:[%s205 + $0x4] sm:$0xf]
      %v220 = vunpack.c.l.b16 %v212
      %v221 = vunpack.c.l.b16 %v213
      %v222 = vpack.c.b16 %v221, %v220
      %v225 = vunpack.c.l.b16 %v214
      %v226 = vunpack.c.l.b16 %v215
      %v227 = vpack.c.b16 %v226, %v225
      %vm228 = vcmask 523264
      %v230 = vsel %vm228, %v222, 0
      %v233 = vsel %vm228, %v227, 0
      %235 = vmatprep.subr.bf16.mxu0 0
      %236 = vmatpush1.bf16.xpose.msra.mxu0 %v233
      %237 = vmatprep.subr.bf16.mxu0 0
      %238 = vmatpush1.bf16.xpose.msra.mxu0 0
      %239 = vmatprep.subr.bf16.mxu0 0
      %240 = vmatpush1.bf16.xpose.msra.mxu0 0
      %241 = vmatprep.subr.bf16.mxu0 0
      %242 = vmatpush1.bf16.xpose.msra.mxu0 0
      %243 = vmatprep.subr.bf16.mxu0 0
      %244 = vmatpush1.bf16.xpose.msra.mxu0 0
      %245 = vmatprep.subr.bf16.mxu0 0
      %246 = vmatpush1.bf16.xpose.msra.mxu0 0
      %247 = vmatprep.subr.bf16.mxu0 0
      %248 = vmatpush1.bf16.xpose.msra.mxu0 0
      %249 = vmatprep.subr.bf16.mxu0 0
      %250 = vmatpush1.bf16.xpose.msra.mxu0 0
      %251 = vmatprep.subr.bf16.mxu0 0
      %252 = vmatpush1.bf16.xpose.msra.mxu0 0
      %253 = vmatprep.subr.bf16.mxu0 0
      %254 = vmatpush1.bf16.xpose.msra.mxu0 0
      %255 = vmatprep.subr.bf16.mxu0 0
      %256 = vmatpush1.bf16.xpose.msra.mxu0 0
      %257 = vmatprep.subr.bf16.mxu0 0
      %258 = vmatpush1.bf16.xpose.msra.mxu0 0
      %259 = vmatprep.subr.bf16.mxu0 0
      %260 = vmatpush1.bf16.xpose.msra.mxu0 0
      %261 = vmatprep.subr.bf16.mxu0 0
      %262 = vmatpush1.bf16.xpose.msra.mxu0 0
      %263 = vmatprep.subr.bf16.mxu0 0
      %264 = vmatpush1.bf16.xpose.msra.mxu0 0
      %265 = vmatprep.subr.bf16.mxu0 0
      %266 = vmatpush1.bf16.xpose.msra.mxu0 0
      %267 = vmatprep.mubr.bf16.mxu0 0
      %268 = vmatmul.mubr.bf16.gmra.mrb[0].mxu0 %v230
      %v269 = vpop.f32.mrb[0].mxu0
      %v270 = vadd.f32 0.0, %v269
      %v271 = vpop.f32.mrb[0].mxu0
      %v272 = vpop.f32.mrb[0].mxu0
      %v273 = vadd.f32 0.0, %v272
      %v274 = vpop.f32.mrb[0].mxu0
      %275 = vdwg.mxu0
      %v276 = vmul.f32 %v270, 0.125
      %v277 = vmul.f32 %v273, 0.125
      %v278 = vlaneseq
      %v279 = vshrl.u32 %v278, 7
      %v280 = vadd.s32 %v279, 8
      %v281 = vlaneseq
      %v282 = vand.u32 %v281, 127
      %vm283 = vcmp.le.s32.totalorder %v282, %v279
      %vm284 = vcmp.le.s32.totalorder %v282, %v280
      %v285 = vsel %vm283, %v276, -inf
      %v286 = vsel %vm284, %v277, -inf
      %vm287 = vcmask 130048
      %v288 = vsel %vm287, %v285, -inf
      %289 = vmax.xlane.f32.xlu0 %v288
      %v290 = vpop.xlane.xlu0 %289
      %v291 = vsel %vm287, %v286, -inf
      %292 = vmax.xlane.f32.xlu0 %v291
      %v293 = vpop.xlane.xlu0 %292
      %v294 = vsub.f32 %v285, %v290
      %v295 = vsub.f32 %v286, %v293
      %v296 = vmul.f32 %v294, 1.442695
      %v297 = vpow.pop %v296
      %v298 = vmul.f32 %v295, 1.442695
      %v299 = vpow.pop %v298
      %v300 = vsel %vm287, %v297, 0.0
      %301 = vadd.xlane.f32.xlu0 %v300
      %v302 = vpop.xlane.xlu0 %301
      %v303 = vsel %vm287, %v299, 0.0
      %304 = vadd.xlane.f32.xlu0 %v303
      %v305 = vpop.xlane.xlu0 %304
      %v306 = vrcp.pop %v302
      %v307 = vmul.f32 %v297, %v306
      %v308 = vrcp.pop %v305
      %v309 = vmul.f32 %v299, %v308
      %v310 = vpack.c.bf16 %v309, %v307
      %v313 = vunpack.c.l.b16 %v216
      %v314 = vunpack.c.l.b16 %v217
      %v315 = vpack.c.b16 %v314, %v313
      %v318 = vsel %vm287, %v310, 0
      %320 = vmatprep.subr.bf16.mxu0 0
      %321 = vmatpush1.bf16.msra.mxu0 %v315
      %322 = vmatprep.subr.bf16.mxu0 0
      %323 = vmatpush1.bf16.msra.mxu0 0
      %324 = vmatprep.subr.bf16.mxu0 0
      %325 = vmatpush1.bf16.msra.mxu0 0
      %326 = vmatprep.subr.bf16.mxu0 0
      %327 = vmatpush1.bf16.msra.mxu0 0
      %328 = vmatprep.subr.bf16.mxu0 0
      %329 = vmatpush1.bf16.msra.mxu0 0
      %330 = vmatprep.subr.bf16.mxu0 0
      %331 = vmatpush1.bf16.msra.mxu0 0
      %332 = vmatprep.subr.bf16.mxu0 0
      %333 = vmatpush1.bf16.msra.mxu0 0
      %334 = vmatprep.subr.bf16.mxu0 0
      %335 = vmatpush1.bf16.msra.mxu0 0
      %336 = vmatprep.subr.bf16.mxu0 0
      %337 = vmatpush1.bf16.msra.mxu0 0
      %338 = vmatprep.subr.bf16.mxu0 0
      %339 = vmatpush1.bf16.msra.mxu0 0
      %340 = vmatprep.subr.bf16.mxu0 0
      %341 = vmatpush1.bf16.msra.mxu0 0
      %342 = vmatprep.subr.bf16.mxu0 0
      %343 = vmatpush1.bf16.msra.mxu0 0
      %344 = vmatprep.subr.bf16.mxu0 0
      %345 = vmatpush1.bf16.msra.mxu0 0
      %346 = vmatprep.subr.bf16.mxu0 0
      %347 = vmatpush1.bf16.msra.mxu0 0
      %348 = vmatprep.subr.bf16.mxu0 0
      %349 = vmatpush1.bf16.msra.mxu0 0
      %350 = vmatprep.subr.bf16.mxu0 0
      %351 = vmatpush1.bf16.msra.mxu0 0
      %352 = vmatprep.mubr.bf16.mxu0 0
      %353 = vmatmul.mubr.bf16.gmra.mrb[0].mxu0 %v318
      %v354 = vpop.f32.mrb[0].mxu0
      %v355 = vadd.f32 0.0, %v354
      %v356 = vpop.f32.mrb[0].mxu0
      %v357 = vpop.f32.mrb[0].mxu0
      %v358 = vadd.f32 0.0, %v357
      %v359 = vpop.f32.mrb[0].mxu0
      %360 = vdwg.mxu0
      %361 = vst.msk [vmem:[%s210] sm:$0xff] %vm228, %v355
      %362 = vst.msk [vmem:[%s210 + $0x8] sm:$0xff] %vm228, %v358
      %p363 = scmp.lt.s32.totalorder %s14, 11
      %s364 = scalar_select %p363, %s14, 11
      %s365 = smul.addr %s364, 2
      %s366 = smul.addr %s365, 8
      %s367 = scalar_lea.vmem %s3, %s366
      // Predicated region
      $region33: #{gpt_forward.22} parent=31 // pred_check
        %p368 = pneg %p110
      $region34: #{gpt_forward.22} parent=31 // pred_check_branch
        %370 = sbr.rel (%p368) target = $region36
      $region35: #{gpt_forward.22} parent=31 // pred_region
        _
      $region36: #{gpt_forward.22} parent=31 // pred_fallthru
        _
    $region32: #{gpt_forward.22} parent=5 // pred_fallthru
      _
    %p371 = scmp.le.s32.totalorder 2, %s9
    // Predicated region
    $region37: #{gpt_forward.22} parent=5 // pred_check
      %p372 = pneg %p371
    $region38: #{gpt_forward.22} parent=5 // pred_check_branch
      %374 = sbr.rel (%p372) target = $region40
    $region39: #{gpt_forward.22} parent=5 // pred_region
      %s375 = ssub.s32 %s9, 2
      // Predicated region
      $region41: #{gpt_forward.22} parent=39 // pred_check
        %p376 = pneg %p116
      $region42: #{gpt_forward.22} parent=39 // pred_check_branch
        %378 = sbr.rel (%p376) target = $region44
      $region43: #{gpt_forward.22} parent=39 // pred_region
        %p379 = scmp.lt.s32.totalorder %s15, 11
        %s380 = scalar_select %p379, %s15, 11
        %s381 = smul.addr %s380, 2
        %s382 = smul.addr %s381, 8
        %s383 = scalar_lea.vmem %s3, %s382
      $region44: #{gpt_forward.22} parent=39 // pred_fallthru
        _
    $region40: #{gpt_forward.22} parent=5 // pred_fallthru
      _
  $region6: #{gpt_forward.22} parent=0 // loop_footer
    %s13 = sadd.s32 1, %s9
  $region7: #{gpt_forward.22} parent=0 // loop_footer_branch
    %8 = sbr.rel target = $region3
  $region8: #{gpt_forward.22} parent=0 // loop_exit
    _

// kernel: gpt_forward.35
$region0: #{gpt_forward.35}
  #allocation0 [shape = 'u32[]', space=smem, size = 0x4, offset = 0x4, fixed_abs, tag = 'smem constant byte address 0x4 - core index']
  #allocation1 [shape = 'u32[144,128]{1,0:T(1,128)}', space=vmem, size = 0x12000, scoped, tag = 'internal scratch']
  %s0 = inlined_call_operand.vmem [shape: bf16[32,384], index: 0, kind: input, shape index: {}]
  %s1 = inlined_call_operand.vmem [shape: bf16[384,128], index: 1, kind: input, shape index: {}]
  %s2 = inlined_call_operand.vmem [shape: f32[1,128], index: 2, kind: input, shape index: {}]
  %s3 = inlined_call_operand.hbm [shape: f32[32,128], index: 3, kind: output, shape index: {}]
  %s4 = sld [smem:[#allocation0]]
  $region22: #{gpt_forward.35} parent=0
    _
  %s6 = ssub.s32 1, %s4
  %s7 = scalar_select 0, %s6, %s4
  $region1: #{gpt_forward.35} parent=0
    #allocation2 [shape = 'u8[16384]{0}', space=vmem, size = 0x4000, scoped, tag = 'output window, operand 0, single buffered']
    #allocation3 [shape = 's32[1]{0}', space=sflag, size = 0x4, scoped, tag = 'scoped memory for gpt_forward.35']
    %8 = vsyncpa [#allocation3], 0
    // Predicated region
    $region2: #{gpt_forward.35} parent=1 // pred_check
      _
    $region3: #{gpt_forward.35} parent=1 // pred_check_branch
      %10 = sbr.rel (0) target = $region5
    $region4: #{gpt_forward.35} parent=1 // pred_region
      _
    $region5: #{gpt_forward.35} parent=1 // pred_fallthru
      _
    // Predicated region
    $region6: #{gpt_forward.35} parent=1 // pred_check
      _
    $region7: #{gpt_forward.35} parent=1 // pred_check_branch
      %12 = sbr.rel (0) target = $region9
    $region8: #{gpt_forward.35} parent=1 // pred_region
      _
    $region9: #{gpt_forward.35} parent=1 // pred_fallthru
      _
    // Predicated region
    $region10: #{gpt_forward.35} parent=1 // pred_check
      _
    $region11: #{gpt_forward.35} parent=1 // pred_check_branch
      %14 = sbr.rel (0) target = $region13
    $region12: #{gpt_forward.35} parent=1 // pred_region
      _
    $region13: #{gpt_forward.35} parent=1 // pred_fallthru
      _
    %v16 = vld [vmem:[%s0] sm:$0xff]
    %v17 = vld [vmem:[%s0 + $0x8] sm:$0xf]
    %v18 = vld [vmem:[%s0 + $0xc] sm:$0xff]
    %v19 = vld [vmem:[%s0 + $0x14] sm:$0xf]
    %v20 = vld [vmem:[%s0 + $0x18] sm:$0xff]
    %v21 = vld [vmem:[%s0 + $0x20] sm:$0xf]
    %v22 = vld [vmem:[%s0 + $0x24] sm:$0xff]
    %v23 = vld [vmem:[%s0 + $0x2c] sm:$0xf]
    %v24 = vld [vmem:[%s1] sm:$0xf]
    %v25 = vld [vmem:[%s1 + $0x4] sm:$0xf]
    %v26 = vld [vmem:[%s1 + $0x8] sm:$0xf]
    %v27 = vld [vmem:[%s1 + $0xc] sm:$0xf]
    %v28 = vld [vmem:[%s1 + $0x10] sm:$0xf]
    %v29 = vld [vmem:[%s1 + $0x14] sm:$0xf]
    %v30 = vld [vmem:[%s1 + $0x18] sm:$0xf]
    %v31 = vld [vmem:[%s1 + $0x1c] sm:$0xf]
    %v32 = vld [vmem:[%s1 + $0x20] sm:$0xf]
    %v33 = vld [vmem:[%s1 + $0x24] sm:$0xf]
    %v34 = vld [vmem:[%s1 + $0x28] sm:$0xf]
    %v35 = vld [vmem:[%s1 + $0x2c] sm:$0xf]
    %v36 = vld [vmem:[%s1 + $0x30] sm:$0xf]
    %v37 = vld [vmem:[%s1 + $0x34] sm:$0xf]
    %v38 = vld [vmem:[%s1 + $0x38] sm:$0xf]
    %v39 = vld [vmem:[%s1 + $0x3c] sm:$0xf]
    %v40 = vld [vmem:[%s1 + $0x40] sm:$0xf]
    %v41 = vld [vmem:[%s1 + $0x44] sm:$0xf]
    %v42 = vld [vmem:[%s1 + $0x48] sm:$0xf]
    %v43 = vld [vmem:[%s1 + $0x4c] sm:$0xf]
    %v44 = vld [vmem:[%s1 + $0x50] sm:$0xf]
    %v45 = vld [vmem:[%s1 + $0x54] sm:$0xf]
    %v46 = vld [vmem:[%s1 + $0x58] sm:$0xf]
    %v47 = vld [vmem:[%s1 + $0x5c] sm:$0xf]
    %v48 = vld [vmem:[%s1 + $0x60] sm:$0xf]
    %v49 = vld [vmem:[%s1 + $0x64] sm:$0xf]
    %v50 = vld [vmem:[%s1 + $0x68] sm:$0xf]
    %v51 = vld [vmem:[%s1 + $0x6c] sm:$0xf]
    %v52 = vld [vmem:[%s1 + $0x70] sm:$0xf]
    %v53 = vld [vmem:[%s1 + $0x74] sm:$0xf]
    %v54 = vld [vmem:[%s1 + $0x78] sm:$0xf]
    %v55 = vld [vmem:[%s1 + $0x7c] sm:$0xf]
    %v56 = vld [vmem:[%s1 + $0x80] sm:$0xf]
    %v57 = vld [vmem:[%s1 + $0x84] sm:$0xf]
    %v58 = vld [vmem:[%s1 + $0x88] sm:$0xf]
    %v59 = vld [vmem:[%s1 + $0x8c] sm:$0xf]
    %v60 = vld [vmem:[%s1 + $0x90] sm:$0xf]
    %v61 = vld [vmem:[%s1 + $0x94] sm:$0xf]
    %v62 = vld [vmem:[%s1 + $0x98] sm:$0xf]
    %v63 = vld [vmem:[%s1 + $0x9c] sm:$0xf]
    %v64 = vld [vmem:[%s1 + $0xa0] sm:$0xf]
    %v65 = vld [vmem:[%s1 + $0xa4] sm:$0xf]
    %v66 = vld [vmem:[%s1 + $0xa8] sm:$0xf]
    %v67 = vld [vmem:[%s1 + $0xac] sm:$0xf]
    %v68 = vld [vmem:[%s1 + $0xb0] sm:$0xf]
    %v69 = vld [vmem:[%s1 + $0xb4] sm:$0xf]
    %v70 = vld [vmem:[%s1 + $0xb8] sm:$0xf]
    %v71 = vld [vmem:[%s1 + $0xbc] sm:$0xf]
    %v72 = vld [vmem:[%s2] sm:$0x1]
    %v74 = vlaneseq
    %v75 = vshrl.u32 %v74, 7
    %v76 = vsub.s32 0, %v75
    %v77 = vrot.slane %v72, %v76
    %v87 = vunpack.c.l.b16 %v16
    %v88 = vunpack.c.h.b16 %v16
    %v89 = vunpack.c.l.b16 %v17
    %v90 = vunpack.c.l.b16 %v18
    %v91 = vunpack.c.h.b16 %v18
    %v92 = vunpack.c.l.b16 %v19
    %v93 = vunpack.c.l.b16 %v20
    %v94 = vunpack.c.h.b16 %v20
    %v95 = vunpack.c.l.b16 %v21
    %v96 = vunpack.c.l.b16 %v22
    %v97 = vunpack.c.h.b16 %v22
    %v98 = vunpack.c.l.b16 %v23
    %v99 = vpack.c.b16 %v90, %v87
    %v100 = vpack.c.b16 %v91, %v88
    %v101 = vpack.c.b16 %v92, %v89
    %v102 = vpack.c.b16 %v96, %v93
    %v103 = vpack.c.b16 %v97, %v94
    %v104 = vpack.c.b16 %v98, %v95
    %v159 = vunpack.c.l.b16 %v24
    %v160 = vunpack.c.l.b16 %v25
    %v161 = vunpack.c.l.b16 %v26
    %v162 = vunpack.c.l.b16 %v27
    %v163 = vunpack.c.l.b16 %v28
    %v164 = vunpack.c.l.b16 %v29
    %v165 = vunpack.c.l.b16 %v30
    %v166 = vunpack.c.l.b16 %v31
    %v167 = vunpack.c.l.b16 %v32
    %v168 = vunpack.c.l.b16 %v33
    %v169 = vunpack.c.l.b16 %v34
    %v170 = vunpack.c.l.b16 %v35
    %v171 = vunpack.c.l.b16 %v36
    %v172 = vunpack.c.l.b16 %v37
    %v173 = vunpack.c.l.b16 %v38
    %v174 = vunpack.c.l.b16 %v39
    %v175 = vunpack.c.l.b16 %v40
    %v176 = vunpack.c.l.b16 %v41
    %v177 = vunpack.c.l.b16 %v42
    %v178 = vunpack.c.l.b16 %v43
    %v179 = vunpack.c.l.b16 %v44
    %v180 = vunpack.c.l.b16 %v45
    %v181 = vunpack.c.l.b16 %v46
    %v182 = vunpack.c.l.b16 %v47
    %v183 = vunpack.c.l.b16 %v48
    %v184 = vunpack.c.l.b16 %v49
    %v185 = vunpack.c.l.b16 %v50
    %v186 = vunpack.c.l.b16 %v51
    %v187 = vunpack.c.l.b16 %v52
    %v188 = vunpack.c.l.b16 %v53
    %v189 = vunpack.c.l.b16 %v54
    %v190 = vunpack.c.l.b16 %v55
    %v191 = vunpack.c.l.b16 %v56
    %v192 = vunpack.c.l.b16 %v57
    %v193 = vunpack.c.l.b16 %v58
    %v194 = vunpack.c.l.b16 %v59
    %v195 = vunpack.c.l.b16 %v60
    %v196 = vunpack.c.l.b16 %v61
    %v197 = vunpack.c.l.b16 %v62
    %v198 = vunpack.c.l.b16 %v63
    %v199 = vunpack.c.l.b16 %v64
    %v200 = vunpack.c.l.b16 %v65
    %v201 = vunpack.c.l.b16 %v66
    %v202 = vunpack.c.l.b16 %v67
    %v203 = vunpack.c.l.b16 %v68
    %v204 = vunpack.c.l.b16 %v69
    %v205 = vunpack.c.l.b16 %v70
    %v206 = vunpack.c.l.b16 %v71
    %v207 = vpack.c.b16 %v160, %v159
    %v208 = vpack.c.b16 %v162, %v161
    %v209 = vpack.c.b16 %v164, %v163
    %v210 = vpack.c.b16 %v166, %v165
    %v211 = vpack.c.b16 %v168, %v167
    %v212 = vpack.c.b16 %v170, %v169
    %v213 = vpack.c.b16 %v172, %v171
    %v214 = vpack.c.b16 %v174, %v173
    %v215 = vpack.c.b16 %v176, %v175
    %v216 = vpack.c.b16 %v178, %v177
    %v217 = vpack.c.b16 %v180, %v179
    %v218 = vpack.c.b16 %v182, %v181
    %v219 = vpack.c.b16 %v184, %v183
    %v220 = vpack.c.b16 %v186, %v185
    %v221 = vpack.c.b16 %v188, %v187
    %v222 = vpack.c.b16 %v190, %v189
    %v223 = vpack.c.b16 %v192, %v191
    %v224 = vpack.c.b16 %v194, %v193
    %v225 = vpack.c.b16 %v196, %v195
    %v226 = vpack.c.b16 %v198, %v197
    %v227 = vpack.c.b16 %v200, %v199
    %v228 = vpack.c.b16 %v202, %v201
    %v229 = vpack.c.b16 %v204, %v203
    %v230 = vpack.c.b16 %v206, %v205
    %255 = vmatprep.subr.bf16.mxu0 0
    %256 = vmatpush1.bf16.msra.mxu0 %v207
    %257 = vmatprep.subr.bf16.mxu0 0
    %258 = vmatpush1.bf16.msra.mxu0 %v208
    %259 = vmatprep.subr.bf16.mxu0 0
    %260 = vmatpush1.bf16.msra.mxu0 %v209
    %261 = vmatprep.subr.bf16.mxu0 0
    %262 = vmatpush1.bf16.msra.mxu0 %v210
    %263 = vmatprep.subr.bf16.mxu0 0
    %264 = vmatpush1.bf16.msra.mxu0 %v211
    %265 = vmatprep.subr.bf16.mxu0 0
    %266 = vmatpush1.bf16.msra.mxu0 %v212
    %267 = vmatprep.subr.bf16.mxu0 0
    %268 = vmatpush1.bf16.msra.mxu0 %v213
    %269 = vmatprep.subr.bf16.mxu0 0
    %270 = vmatpush1.bf16.msra.mxu0 %v214
    %271 = vmatprep.subr.bf16.mxu0 0
    %272 = vmatpush1.bf16.msra.mxu0 %v215
    %273 = vmatprep.subr.bf16.mxu0 0
    %274 = vmatpush1.bf16.msra.mxu0 %v216
    %275 = vmatprep.subr.bf16.mxu0 0
    %276 = vmatpush1.bf16.msra.mxu0 %v217
    %277 = vmatprep.subr.bf16.mxu0 0
    %278 = vmatpush1.bf16.msra.mxu0 %v218
    %279 = vmatprep.subr.bf16.mxu0 0
    %280 = vmatpush1.bf16.msra.mxu0 %v219
    %281 = vmatprep.subr.bf16.mxu0 0
    %282 = vmatpush1.bf16.msra.mxu0 %v220
    %283 = vmatprep.subr.bf16.mxu0 0
    %284 = vmatpush1.bf16.msra.mxu0 %v221
    %285 = vmatprep.subr.bf16.mxu0 0
    %286 = vmatpush1.bf16.msra.mxu0 %v222
    %287 = vmatprep.mubr.bf16.mxu0 %v100
    %288 = vmatmul.mubr.bf16.gmra.mrb[0].mxu0 %v99
    %v289 = vpop.f32.mrb[0].mxu0
    %v290 = vadd.f32 %v77, %v289
    %v291 = vpop.f32.mrb[0].mxu0
    %v292 = vpop.f32.mrb[0].mxu0
    %v293 = vadd.f32 %v77, %v292
    %v294 = vpop.f32.mrb[0].mxu0
    %295 = vmatprep.mubr.bf16.mxu0 %v103
    %296 = vmatmul.mubr.bf16.gmra.mrb[0].mxu0 %v102
    %v297 = vpop.f32.mrb[0].mxu0
    %v298 = vadd.f32 %v77, %v297
    %v299 = vpop.f32.mrb[0].mxu0
    %v300 = vpop.f32.mrb[0].mxu0
    %v301 = vadd.f32 %v77, %v300
    %v302 = vpop.f32.mrb[0].mxu0
    %303 = vdwg.mxu0
    %304 = vmatprep.subr.bf16.mxu0 0
    %305 = vmatpush1.bf16.msra.mxu0 %v223
    %306 = vmatprep.subr.bf16.mxu0 0
    %307 = vmatpush1.bf16.msra.mxu0 %v224
    %308 = vmatprep.subr.bf16.mxu0 0
    %309 = vmatpush1.bf16.msra.mxu0 %v225
    %310 = vmatprep.subr.bf16.mxu0 0
    %311 = vmatpush1.bf16.msra.mxu0 %v226
    %312 = vmatprep.subr.bf16.mxu0 0
    %313 = vmatpush1.bf16.msra.mxu0 %v227
    %314 = vmatprep.subr.bf16.mxu0 0
    %315 = vmatpush1.bf16.msra.mxu0 %v228
    %316 = vmatprep.subr.bf16.mxu0 0
    %317 = vmatpush1.bf16.msra.mxu0 %v229
    %318 = vmatprep.subr.bf16.mxu0 0
    %319 = vmatpush1.bf16.msra.mxu0 %v230
    %320 = vmatprep.subr.bf16.mxu0 0
    %321 = vmatpush1.bf16.msra.mxu0 0
    %322 = vmatprep.subr.bf16.mxu0 0
    %323 = vmatpush1.bf16.msra.mxu0 0
    %324 = vmatprep.subr.bf16.mxu0 0
    %325 = vmatpush1.bf16.msra.mxu0 0
    %326 = vmatprep.subr.bf16.mxu0 0
    %327 = vmatpush1.bf16.msra.mxu0 0
    %328 = vmatprep.subr.bf16.mxu0 0
    %329 = vmatpush1.bf16.msra.mxu0 0
    %330 = vmatprep.subr.bf16.mxu0 0
    %331 = vmatpush1.bf16.msra.mxu0 0
    %332 = vmatprep.subr.bf16.mxu0 0
    %333 = vmatpush1.bf16.msra.mxu0 0
    %334 = vmatprep.subr.bf16.mxu0 0
    %335 = vmatpush1.bf16.msra.mxu0 0
    %336 = vmatprep.mubr.bf16.mxu0 0
    %337 = vmatmul.mubr.bf16.gmra.mrb[0].mxu0 %v101
    %v338 = vpop.f32.mrb[0].mxu0
    %v339 = vadd.f32 %v290, %v338
    %v340 = vpop.f32.mrb[0].mxu0
    %v341 = vpop.f32.mrb[0].mxu0
    %v342 = vadd.f32 %v293, %v341
    %v343 = vpop.f32.mrb[0].mxu0
    %344 = vmatprep.mubr.bf16.mxu0 0
    %345 = vmatmul.mubr.bf16.gmra.mrb[0].mxu0 %v104
    %v346 = vpop.f32.mrb[0].mxu0
    %v347 = vadd.f32 %v298, %v346
    %v348 = vpop.f32.mrb[0].mxu0
    %v349 = vpop.f32.mrb[0].mxu0
    %v350 = vadd.f32 %v301, %v349
    %v351 = vpop.f32.mrb[0].mxu0
    %352 = vdwg.mxu0
    %353 = vst [vmem:[#allocation2] sm:$0xff] %v339
    %354 = vst [vmem:[#allocation2 + $0x8] sm:$0xff] %v342
    %355 = vst [vmem:[#allocation2 + $0x10] sm:$0xff] %v347
    %356 = vst [vmem:[#allocation2 + $0x18] sm:$0xff] %v350
    // Predicated region
    $region14: #{gpt_forward.35} parent=1 // pred_check
      _
    $region15: #{gpt_forward.35} parent=1 // pred_check_branch
      %358 = sbr.rel (0) target = $region17
    $region16: #{gpt_forward.35} parent=1 // pred_region
      %s360 = ssub.s32 512, 512
      %361 = vsyncadd [#allocation3], %s360
      %s362 = sshll.u32 [#allocation2], 4
      %s363 = int_to_ptr.vmem [resolvable:$true] %s362
      %368 = dma.vmem_to_hbm [thread:$0]  %s363, 512, %s3, [#allocation3], 128, 128, 8
    $region17: #{gpt_forward.35} parent=1 // pred_fallthru
      _
    // Predicated region
    $region18: #{gpt_forward.35} parent=1 // pred_check
      _
    $region19: #{gpt_forward.35} parent=1 // pred_check_branch
      %370 = sbr.rel (0) target = $region21
    $region20: #{gpt_forward.35} parent=1 // pred_region
      %371 = dma.done [#allocation3], 512
    $region21: #{gpt_forward.35} parent=1 // pred_fallthru
      _
    %372 = vsyncpa [#allocation3], 1

// kernel: gpt_forward.25
$region0: #{gpt_forward.25}
  #allocation0 [shape = 'u32[]', space=smem, size = 0x4, offset = 0x4, fixed_abs, tag = 'smem constant byte address 0x4 - core index']
  #allocation1 [shape = 'u32[144,128]{1,0:T(1,128)}', space=vmem, size = 0x12000, scoped, tag = 'internal scratch']
  #allocation2 [shape = 'f32[32,384]{1,0:T(8,128)}', space=vmem, size = 0xc000, scoped, tag = 'scratch operand']
  %s0 = inlined_call_operand.vmem [shape: bf16[32,384], index: 0, kind: input, shape index: {}]
  %s1 = inlined_call_operand.vmem [shape: bf16[384,1536], index: 1, kind: input, shape index: {}]
  %s2 = inlined_call_operand.vmem [shape: f32[1,1536], index: 2, kind: input, shape index: {}]
  %s3 = inlined_call_operand.vmem [shape: bf16[1536,384], index: 3, kind: input, shape index: {}]
  %s4 = inlined_call_operand.vmem [shape: f32[1,384], index: 4, kind: input, shape index: {}]
  %s5 = inlined_call_operand.vmem [shape: f32[32,384], index: 5, kind: output, shape index: {}]
  %s6 = sld [smem:[#allocation0]]
  $region84: #{gpt_forward.25} parent=0
    _
  %s8 = ssub.s32 1, %s6
  %s9 = scalar_select 0, %s8, %s6
  $region1: #{gpt_forward.25} parent=0
    #allocation3 [shape = 'u8[786432]{0}', space=vmem, size = 0xc0000, scoped, tag = 'input window, operand 1']
    loop: start=0, step=1, limit=5
    $region2: #{gpt_forward.25} parent=1 // loop_pre_header
      _
    $region3: #{gpt_forward.25} parent=1 // loop_header
      %s11 = sphi 0, %s15
      %p12 = scmp.ge.s32.totalorder %s11, 5
      %s18 = sphi 0, %s30
      %s19 = sphi 0, %s26
      %s20 = sphi 0, %s18
      %s21 = sphi 0, %s19
      %s22 = sphi 0, %s20
      %s23 = sphi 0, %s21
      %s33 = sphi 0, %s35
      %s36 = sphi 0, %s33
      %s37 = sphi 0, %s36
      %s53 = sphi 0, %s37
      %s59 = sphi 0, %s61
      %s62 = sphi 0, %s59
      %s63 = sphi 0, %s62
      %s79 = sphi 0, %s63
      %s85 = sphi 0, %s87
      %s88 = sphi 0, %s85
      %s89 = sphi 0, %s88
      %s105 = sphi 0, %s89
      %s111 = sphi 0, %s113
      %s114 = sphi 0, %s111
      %s115 = sphi 0, %s114
      %s131 = sphi 0, %s115
      %s135 = sphi 0, %s135
      %s137 = sphi 0, %s135
      %s138 = sphi 0, %s137
      %s152 = sphi 0, %s138
      %s158 = sphi 0, %s160
      %s161 = sphi 0, %s158
      %s162 = sphi 0, %s161
      %s178 = sphi 0, %s162
    $region4: #{gpt_forward.25} parent=1 // loop_header_branch
      %14 = sbr.rel (%p12) target = $region8
    $region5: #{gpt_forward.25} parent=1 // loop_body
      %s16 = ssub.s32 %s11, 1
      %s17 = ssub.s32 %s11, 2
      %s24 = sadd.s32 1, %s19
      %p25 = scmp.ge.s32.totalorder %s24, 3
      %s26 = scalar_select %p25, 0, %s24
      %s27 = sadd.s32 1, %s18
      %s28 = scalar_select %p25, %s27, %s18
      %p29 = scmp.ge.s32.totalorder %s28, 1
      %s30 = scalar_select %p29, 0, %s28
      %s31 = ssub.s32 %s18, %s30
      %p32 = scmp.eq.s32.totalorder %s31, 0
      %s34 = sadd.s32 %s33, 1
      %s35 = scalar_select %p32, %s33, %s34
      %p38 = pneg %p32
      %p39 = scmp.eq.s32.totalorder %s11, 2
      %p40 = por %p38, %p39
      %p41 = scmp.ne.s32.totalorder %s33, %s36
      %p42 = scmp.eq.s32.totalorder %s11, 0
      %p43 = por %p41, %p42
      %p44 = scmp.ne.s32.totalorder %s33, %s36
      %p45 = scmp.eq.s32.totalorder %s16, 2
      %p46 = por %p44, %p45
      %p47 = scmp.ne.s32.totalorder %s36, %s37
      %p48 = scmp.eq.s32.totalorder %s16, 0
      %p49 = por %p47, %p48
      %p50 = scmp.ne.s32.totalorder %s36, %s37
      %p51 = scmp.eq.s32.totalorder %s17, 2
      %p52 = por %p50, %p51
      %p54 = scmp.ne.s32.totalorder %s37, %s53
      %p55 = scmp.eq.s32.totalorder %s17, 0
      %p56 = por %p54, %p55
      %s57 = ssub.s32 %s19, %s26
      %p58 = scmp.eq.s32.totalorder %s57, 0
      %s60 = sadd.s32 %s59, 1
      %s61 = scalar_select %p58, %s59, %s60
      %p64 = pneg %p58
      %p65 = scmp.eq.s32.totalorder %s11, 2
      %p66 = por %p64, %p65
      %p67 = scmp.ne.s32.totalorder %s59, %s62
      %p68 = scmp.eq.s32.totalorder %s11, 0
      %p69 = por %p67, %p68
      %p70 = scmp.ne.s32.totalorder %s59, %s62
      %p71 = scmp.eq.s32.totalorder %s16, 2
      %p72 = por %p70, %p71
      %p73 = scmp.ne.s32.totalorder %s62, %s63
      %p74 = scmp.eq.s32.totalorder %s16, 0
      %p75 = por %p73, %p74
      %p76 = scmp.ne.s32.totalorder %s62, %s63
      %p77 = scmp.eq.s32.totalorder %s17, 2
      %p78 = por %p76, %p77
      %p80 = scmp.ne.s32.totalorder %s63, %s79
      %p81 = scmp.eq.s32.totalorder %s17, 0
      %p82 = por %p80, %p81
      %s83 = ssub.s32 %s19, %s26
      %p84 = scmp.eq.s32.totalorder %s83, 0
      %s86 = sadd.s32 %s85, 1
      %s87 = scalar_select %p84, %s85, %s86
      %p90 = pneg %p84
      %p91 = scmp.eq.s32.totalorder %s11, 2
      %p92 = por %p90, %p91
      %p93 = scmp.ne.s32.totalorder %s85, %s88
      %p94 = scmp.eq.s32.totalorder %s11, 0
      %p95 = por %p93, %p94
      %p96 = scmp.ne.s32.totalorder %s85, %s88
      %p97 = scmp.eq.s32.totalorder %s16, 2
      %p98 = por %p96, %p97
      %p99 = scmp.ne.s32.totalorder %s88, %s89
      %p100 = scmp.eq.s32.totalorder %s16, 0
      %p101 = por %p99, %p100
      %p102 = scmp.ne.s32.totalorder %s88, %s89
      %p103 = scmp.eq.s32.totalorder %s17, 2
      %p104 = por %p102, %p103
      %p106 = scmp.ne.s32.totalorder %s89, %s105
      %p107 = scmp.eq.s32.totalorder %s17, 0
      %p108 = por %p106, %p107
      %s109 = ssub.s32 %s19, %s26
      %p110 = scmp.eq.s32.totalorder %s109, 0
      %s112 = sadd.s32 %s111, 1
      %s113 = scalar_select %p110, %s111, %s112
      %p116 = pneg %p110
      %p117 = scmp.eq.s32.totalorder %s11, 2
      %p118 = por %p116, %p117
      %p119 = scmp.ne.s32.totalorder %s111, %s114
      %p120 = scmp.eq.s32.totalorder %s11, 0
      %p121 = por %p119, %p120
      %p122 = scmp.ne.s32.totalorder %s111, %s114
      %p123 = scmp.eq.s32.totalorder %s16, 2
      %p124 = por %p122, %p123
      %p125 = scmp.ne.s32.totalorder %s114, %s115
      %p126 = scmp.eq.s32.totalorder %s16, 0
      %p127 = por %p125, %p126
      %p128 = scmp.ne.s32.totalorder %s114, %s115
      %p129 = scmp.eq.s32.totalorder %s17, 2
      %p130 = por %p128, %p129
      %p132 = scmp.ne.s32.totalorder %s115, %s131
      %p133 = scmp.eq.s32.totalorder %s17, 0
      %p134 = por %p132, %p133
      %s136 = sadd.s32 %s135, 1
      %p139 = scmp.eq.s32.totalorder %s11, 2
      %p140 = scmp.ne.s32.totalorder %s135, %s137
      %p141 = scmp.eq.s32.totalorder %s11, 0
      %p142 = por %p140, %p141
      %p143 = scmp.ne.s32.totalorder %s135, %s137
      %p144 = scmp.eq.s32.totalorder %s16, 2
      %p145 = por %p143, %p144
      %p146 = scmp.ne.s32.totalorder %s137, %s138
      %p147 = scmp.eq.s32.totalorder %s16, 0
      %p148 = por %p146, %p147
      %p149 = scmp.ne.s32.totalorder %s137, %s138
      %p150 = scmp.eq.s32.totalorder %s17, 2
      %p151 = por %p149, %p150
      %p153 = scmp.ne.s32.totalorder %s138, %s152
      %p154 = scmp.eq.s32.totalorder %s17, 0
      %p155 = por %p153, %p154
      %s156 = ssub.s32 %s18, %s30
      %p157 = scmp.eq.s32.totalorder %s156, 0
      %s159 = sadd.s32 %s158, 1
      %s160 = scalar_select %p157, %s158, %s159
      %p163 = pneg %p157
      %p164 = scmp.eq.s32.totalorder %s11, 2
      %p165 = por %p163, %p164
      %p166 = scmp.ne.s32.totalorder %s158, %s161
      %p167 = scmp.eq.s32.totalorder %s11, 0
      %p168 = por %p166, %p167
      %p169 = scmp.ne.s32.totalorder %s158, %s161
      %p170 = scmp.eq.s32.totalorder %s16, 2
      %p171 = por %p169, %p170
      %p172 = scmp.ne.s32.totalorder %s161, %s162
      %p173 = scmp.eq.s32.totalorder %s16, 0
      %p174 = por %p172, %p173
      %p175 = scmp.ne.s32.totalorder %s161, %s162
      %p176 = scmp.eq.s32.totalorder %s17, 2
      %p177 = por %p175, %p176
      %p179 = scmp.ne.s32.totalorder %s162, %s178
      %p180 = scmp.eq.s32.totalorder %s17, 0
      %p181 = por %p179, %p180
      %p182 = scmp.le.s32.totalorder 1, %s11
      %p183 = scmp.lt.s32.totalorder %s11, 4
      %p184 = pnand %p182, %p183
      %p185 = pneg %p184
      // Predicated region
      $region9: #{gpt_forward.25} parent=5 // pred_check
        _
      $region10: #{gpt_forward.25} parent=5 // pred_check_branch
        %187 = sbr.rel (%p184) target = $region12
      $region11: #{gpt_forward.25} parent=5 // pred_region
        %s188 = ssub.s32 %s11, 1
        // Predicated region
        $region13: #{gpt_forward.25} parent=11 // pred_check
          %p189 = pneg %p49
        $region14: #{gpt_forward.25} parent=11 // pred_check_branch
          %191 = sbr.rel (%p189) target = $region16
        $region15: #{gpt_forward.25} parent=11 // pred_region
          %s192 = smul.u32 4, %s20
          %p193 = scmp.lt.s32.totalorder %s192, 3
          %s194 = scalar_select %p193, %s192, 3
          %s195 = smul.addr %s194, 3
          %s196 = smul.addr %s195, 4
          %s197 = scalar_lea.vmem %s0, %s196
          %s198 = smul.u32 4, %s20
        $region16: #{gpt_forward.25} parent=11 // pred_fallthru
          _
        // Predicated region
        $region17: #{gpt_forward.25} parent=11 // pred_check
          %p199 = pneg %p148
        $region18: #{gpt_forward.25} parent=11 // pred_check_branch
          %201 = sbr.rel (%p199) target = $region20
        $region19: #{gpt_forward.25} parent=11 // pred_region
          _
        $region20: #{gpt_forward.25} parent=11 // pred_fallthru
          _
      $region12: #{gpt_forward.25} parent=5 // pred_fallthru
        _
      %p202 = scmp.lt.s32.totalorder %s11, 3
      // Predicated region
      $region21: #{gpt_forward.25} parent=5 // pred_check
        %p203 = pneg %p202
      $region22: #{gpt_forward.25} parent=5 // pred_check_branch
        %205 = sbr.rel (%p203) target = $region24
      $region23: #{gpt_forward.25} parent=5 // pred_region
        // Predicated region
        $region25: #{gpt_forward.25} parent=23 // pred_check
          %p206 = pneg %p69
        $region26: #{gpt_forward.25} parent=23 // pred_check_branch
          %208 = sbr.rel (%p206) target = $region28
        $region27: #{gpt_forward.25} parent=23 // pred_region
          %s209 = sand.u32 %s59, 1
          %s210 = sand.u32 %s59, 1
          %s211 = smul.addr %s210, 768
          %s212 = scalar_lea.vmem [#allocation3], %s211
          %s213 = smul.u32 4, %s19
          %s214 = smul.addr %s213, 4
          %s215 = scalar_lea.vmem %s1, %s214
          // Predicated region
          $region29: #{gpt_forward.25} parent=27 // pred_check
            _
          $region30: #{gpt_forward.25} parent=27 // pred_check_branch
            %217 = sbr.rel (0) target = $region32
          $region31: #{gpt_forward.25} parent=27 // pred_region
            // Predicated region
            $region33: #{gpt_forward.25} parent=31 // pred_check
              _
            $region34: #{gpt_forward.25} parent=31 // pred_check_branch
              %219 = sbr.rel (0) target = $region36
            $region35: #{gpt_forward.25} parent=31 // pred_region
              loop: start=0, step=1, limit=1
              $region37: #{gpt_forward.25} parent=35 // loop_pre_header
                _
              $region38: #{gpt_forward.25} parent=35 // loop_header
                %s221 = sphi 0, %s225
                %p222 = scmp.ge.s32.totalorder %s221, 1
                %s226 = sphi %s215, %s215
                %s227 = sphi %s212, %s212
              $region39: #{gpt_forward.25} parent=35 // loop_header_branch
                %224 = sbr.rel (%p222) target = $region43
              $region40: #{gpt_forward.25} parent=35 // loop_body
                %v228 = vld [vmem:[%s226] sm:$0xff]
                %229 = vst [vmem:[%s227] sm:$0xff] %v228
                %v230 = vld [vmem:[%s226 + $0x8] sm:$0xff]
                %231 = vst [vmem:[%s227 + $0x8] sm:$0xff] %v230
                %v232 = vld [vmem:[%s226 + $0x30] sm:$0xff]
                %233 = vst [vmem:[%s227 + $0x10] sm:$0xff] %v232
                %v234 = vld [vmem:[%s226 + $0x38] sm:$0xff]
                %235 = vst [vmem:[%s227 + $0x18] sm:$0xff] %v234
                %v236 = vld [vmem:[%s226 + $0x60] sm:$0xff]
                %237 = vst [vmem:[%s227 + $0x20] sm:$0xff] %v236
                %v238 = vld [vmem:[%s226 + $0x68] sm:$0xff]
                %239 = vst [vmem:[%s227 + $0x28] sm:$0xff] %v238
                %v240 = vld [vmem:[%s226 + $0x90] sm:$0xff]
                %241 = vst [vmem:[%s227 + $0x30] sm:$0xff] %v240
                %v242 = vld [vmem:[%s226 + $0x98] sm:$0xff]
                %243 = vst [vmem:[%s227 + $0x38] sm:$0xff] %v242
                %v244 = vld [vmem:[%s226 + $0xc0] sm:$0xff]
                %245 = vst [vmem:[%s227 + $0x40] sm:$0xff] %v244
                %v246 = vld [vmem:[%s226 + $0xc8] sm:$0xff]
                %247 = vst [vmem:[%s227 + $0x48] sm:$0xff] %v246
                %v248 = vld [vmem:[%s226 + $0xf0] sm:$0xff]
                %249 = vst [vmem:[%s227 + $0x50] sm:$0xff] %v248
                %v250 = vld [vmem:[%s226 + $0xf8] sm:$0xff]
                %251 = vst [vmem:[%s227 + $0x58] sm:$0xff] %v250
                %v252 = vld [vmem:[%s226 + $0x120] sm:$0xff]
                %253 = vst [vmem:[%s227 + $0x60] sm:$0xff] %v252
                %v254 = vld [vmem:[%s226 + $0x128] sm:$0xff]
                %255 = vst [vmem:[%s227 + $0x68] sm:$0xff] %v254
                %v256 = vld [vmem:[%s226 + $0x150] sm:$0xff]
                %257 = vst [vmem:[%s227 + $0x70] sm:$0xff] %v256
                %v258 = vld [vmem:[%s226 + $0x158] sm:$0xff]
                %259 = vst [vmem:[%s227 + $0x78] sm:$0xff] %v258
                %v260 = vld [vmem:[%s226 + $0x180] sm:$0xff]
                %261 = vst [vmem:[%s227 + $0x80] sm:$0xff] %v260
                %v262 = vld [vmem:[%s226 + $0x188] sm:$0xff]
                %263 = vst [vmem:[%s227 + $0x88] sm:$0xff] %v262
                %v264 = vld [vmem:[%s226 + $0x1b0] sm:$0xff]
                %265 = vst [vmem:[%s227 + $0x90] sm:$0xff] %v264
                %v266 = vld [vmem:[%s226 + $0x1b8] sm:$0xff]
                %267 = vst [vmem:[%s227 + $0x98] sm:$0xff] %v266
                %v268 = vld [vmem:[%s226 + $0x1e0] sm:$0xff]
                %269 = vst [vmem:[%s227 + $0xa0] sm:$0xff] %v268
                %v270 = vld [vmem:[%s226 + $0x1e8] sm:$0xff]
                %271 = vst [vmem:[%s227 + $0xa8] sm:$0xff] %v270
                %v272 = vld [vmem:[%s226 + $0x210] sm:$0xff]
                %273 = vst [vmem:[%s227 + $0xb0] sm:$0xff] %v272
                %v274 = vld [vmem:[%s226 + $0x218] sm:$0xff]
                %275 = vst [vmem:[%s227 + $0xb8] sm:$0xff] %v274
                %v276 = vld [vmem:[%s226 + $0x240] sm:$0xff]
                %277 = vst [vmem:[%s227 + $0xc0] sm:$0xff] %v276
                %v278 = vld [vmem:[%s226 + $0x248] sm:$0xff]
                %279 = vst [vmem:[%s227 + $0xc8] sm:$0xff] %v278
                %v280 = vld [vmem:[%s226 + $0x270] sm:$0xff]
                %281 = vst [vmem:[%s227 + $0xd0] sm:$0xff] %v280
                %v282 = vld [vmem:[%s226 + $0x278] sm:$0xff]
                %283 = vst [vmem:[%s227 + $0xd8] sm:$0xff] %v282
                %v284 = vld [vmem:[%s226 + $0x2a0] sm:$0xff]
                %285 = vst [vmem:[%s227 + $0xe0] sm:$0xff] %v284
                %v286 = vld [vmem:[%s226 + $0x2a8] sm:$0xff]
                %287 = vst [vmem:[%s227 + $0xe8] sm:$0xff] %v286
                %v288 = vld [vmem:[%s226 + $0x2d0] sm:$0xff]
                %289 = vst [vmem:[%s227 + $0xf0] sm:$0xff] %v288
                %v290 = vld [vmem:[%s226 + $0x2d8] sm:$0xff]
                %291 = vst [vmem:[%s227 + $0xf8] sm:$0xff] %v290
                %v292 = vld [vmem:[%s226 + $0x300] sm:$0xff]
                %293 = vst [vmem:[%s227 + $0x100] sm:$0xff] %v292
                %v294 = vld [vmem:[%s226 + $0x308] sm:$0xff]
                %295 = vst [vmem:[%s227 + $0x108] sm:$0xff] %v294
                %v296 = vld [vmem:[%s226 + $0x330] sm:$0xff]
                %297 = vst [vmem:[%s227 + $0x110] sm:$0xff] %v296
                %v298 = vld [vmem:[%s226 + $0x338] sm:$0xff]
                %299 = vst [vmem:[%s227 + $0x118] sm:$0xff] %v298
                %v300 = vld [vmem:[%s226 + $0x360] sm:$0xff]
                %301 = vst [vmem:[%s227 + $0x120] sm:$0xff] %v300
                %v302 = vld [vmem:[%s226 + $0x368] sm:$0xff]
                %303 = vst [vmem:[%s227 + $0x128] sm:$0xff] %v302
                %v304 = vld [vmem:[%s226 + $0x390] sm:$0xff]
                %305 = vst [vmem:[%s227 + $0x130] sm:$0xff] %v304
                %v306 = vld [vmem:[%s226 + $0x398] sm:$0xff]
                %307 = vst [vmem:[%s227 + $0x138] sm:$0xff] %v306
                %v308 = vld [vmem:[%s226 + $0x3c0] sm:$0xff]
                %309 = vst [vmem:[%s227 + $0x140] sm:$0xff] %v308
                %v310 = vld [vmem:[%s226 + $0x3c8] sm:$0xff]
                %311 = vst [vmem:[%s227 + $0x148] sm:$0xff] %v310
                %v312 = vld [vmem:[%s226 + $0x3f0] sm:$0xff]
                %313 = vst [vmem:[%s227 + $0x150] sm:$0xff] %v312
                %v314 = vld [vmem:[%s226 + $0x3f8] sm:$0xff]
                %315 = vst [vmem:[%s227 + $0x158] sm:$0xff] %v314
                %v316 = vld [vmem:[%s226 + $0x420] sm:$0xff]
                %317 = vst [vmem:[%s227 + $0x160] sm:$0xff] %v316
                %v318 = vld [vmem:[%s226 + $0x428] sm:$0xff]
                %319 = vst [vmem:[%s227 + $0x168] sm:$0xff] %v318
                %v320 = vld [vmem:[%s226 + $0x450] sm:$0xff]
                %321 = vst [vmem:[%s227 + $0x170] sm:$0xff] %v320
                %v322 = vld [vmem:[%s226 + $0x458] sm:$0xff]
                %323 = vst [vmem:[%s227 + $0x178] sm:$0xff] %v322
                %v324 = vld [vmem:[%s226 + $0x480] sm:$0xff]
                %325 = vst [vmem:[%s227 + $0x180] sm:$0xff] %v324
                %v326 = vld [vmem:[%s226 + $0x488] sm:$0xff]
                %327 = vst [vmem:[%s227 + $0x188] sm:$0xff] %v326
                %v328 = vld [vmem:[%s226 + $0x4b0] sm:$0xff]
                %329 = vst [vmem:[%s227 + $0x190] sm:$0xff] %v328
                %v330 = vld [vmem:[%s226 + $0x4b8] sm:$0xff]
                %331 = vst [vmem:[%s227 + $0x198] sm:$0xff] %v330
                %v332 = vld [vmem:[%s226 + $0x4e0] sm:$0xff]
                %333 = vst [vmem:[%s227 + $0x1a0] sm:$0xff] %v332
                %v334 = vld [vmem:[%s226 + $0x4e8] sm:$0xff]
                %335 = vst [vmem:[%s227 + $0x1a8] sm:$0xff] %v334
                %v336 = vld [vmem:[%s226 + $0x510] sm:$0xff]
                %337 = vst [vmem:[%s227 + $0x1b0] sm:$0xff] %v336
                %v338 = vld [vmem:[%s226 + $0x518] sm:$0xff]
                %339 = vst [vmem:[%s227 + $0x1b8] sm:$0xff] %v338
                %v340 = vld [vmem:[%s226 + $0x540] sm:$0xff]
                %341 = vst [vmem:[%s227 + $0x1c0] sm:$0xff] %v340
                %v342 = vld [vmem:[%s226 + $0x548] sm:$0xff]
                %343 = vst [vmem:[%s227 + $0x1c8] sm:$0xff] %v342
                %v344 = vld [vmem:[%s226 + $0x570] sm:$0xff]
                %345 = vst [vmem:[%s227 + $0x1d0] sm:$0xff] %v344
                %v346 = vld [vmem:[%s226 + $0x578] sm:$0xff]
                %347 = vst [vmem:[%s227 + $0x1d8] sm:$0xff] %v346
                %v348 = vld [vmem:[%s226 + $0x5a0] sm:$0xff]
                %349 = vst [vmem:[%s227 + $0x1e0] sm:$0xff] %v348
                %v350 = vld [vmem:[%s226 + $0x5a8] sm:$0xff]
                %351 = vst [vmem:[%s227 + $0x1e8] sm:$0xff] %v350
                %v352 = vld [vmem:[%s226 + $0x5d0] sm:$0xff]
                %353 = vst [vmem:[%s227 + $0x1f0] sm:$0xff] %v352
                %v354 = vld [vmem:[%s226 + $0x5d8] sm:$0xff]
                %355 = vst [vmem:[%s227 + $0x1f8] sm:$0xff] %v354
                %v356 = vld [vmem:[%s226 + $0x600] sm:$0xff]
                %357 = vst [vmem:[%s227 + $0x200] sm:$0xff] %v356
                %v358 = vld [vmem:[%s226 + $0x608] sm:$0xff]
                %359 = vst [vmem:[%s227 + $0x208] sm:$0xff] %v358
                %v360 = vld [vmem:[%s226 + $0x630] sm:$0xff]
                %361 = vst [vmem:[%s227 + $0x210] sm:$0xff] %v360
                %v362 = vld [vmem:[%s226 + $0x638] sm:$0xff]
                %363 = vst [vmem:[%s227 + $0x218] sm:$0xff] %v362
                %v364 = vld [vmem:[%s226 + $0x660] sm:$0xff]
                %365 = vst [vmem:[%s227 + $0x220] sm:$0xff] %v364
                %v366 = vld [vmem:[%s226 + $0x668] sm:$0xff]
                %367 = vst [vmem:[%s227 + $0x228] sm:$0xff] %v366
                %v368 = vld [vmem:[%s226 + $0x690] sm:$0xff]
                %369 = vst [vmem:[%s227 + $0x230] sm:$0xff] %v368
                %v370 = vld [vmem:[%s226 + $0x698] sm:$0xff]
                %371 = vst [vmem:[%s227 + $0x238] sm:$0xff] %v370
                %v372 = vld [vmem:[%s226 + $0x6c0] sm:$0xff]
                %373 = vst [vmem:[%s227 + $0x240] sm:$0xff] %v372
                %v374 = vld [vmem:[%s226 + $0x6c8] sm:$0xff]
                %375 = vst [vmem:[%s227 + $0x248] sm:$0xff] %v374
                %v376 = vld [vmem:[%s226 + $0x6f0] sm:$0xff]
                %377 = vst [vmem:[%s227 + $0x250] sm:$0xff] %v376
                %v378 = vld [vmem:[%s226 + $0x6f8] sm:$0xff]
                %379 = vst [vmem:[%s227 + $0x258] sm:$0xff] %v378
                %v380 = vld [vmem:[%s226 + $0x720] sm:$0xff]
                %381 = vst [vmem:[%s227 + $0x260] sm:$0xff] %v380
                %v382 = vld [vmem:[%s226 + $0x728] sm:$0xff]
                %383 = vst [vmem:[%s227 + $0x268] sm:$0xff] %v382
                %v384 = vld [vmem:[%s226 + $0x750] sm:$0xff]
                %385 = vst [vmem:[%s227 + $0x270] sm:$0xff] %v384
                %v386 = vld [vmem:[%s226 + $0x758] sm:$0xff]
                %387 = vst [vmem:[%s227 + $0x278] sm:$0xff] %v386
                %v388 = vld [vmem:[%s226 + $0x780] sm:$0xff]
                %389 = vst [vmem:[%s227 + $0x280] sm:$0xff] %v388
                %v390 = vld [vmem:[%s226 + $0x788] sm:$0xff]
                %391 = vst [vmem:[%s227 + $0x288] sm:$0xff] %v390
                %v392 = vld [vmem:[%s226 + $0x7b0] sm:$0xff]
                %393 = vst [vmem:[%s227 + $0x290] sm:$0xff] %v392
                %v394 = vld [vmem:[%s226 + $0x7b8] sm:$0xff]
                %395 = vst [vmem:[%s227 + $0x298] sm:$0xff] %v394
                %v396 = vld [vmem:[%s226 + $0x7e0] sm:$0xff]
                %397 = vst [vmem:[%s227 + $0x2a0] sm:$0xff] %v396
                %v398 = vld [vmem:[%s226 + $0x7e8] sm:$0xff]
                %399 = vst [vmem:[%s227 + $0x2a8] sm:$0xff] %v398
                %v400 = vld [vmem:[%s226 + $0x810] sm:$0xff]
                %401 = vst [vmem:[%s227 + $0x2b0] sm:$0xff] %v400
                %v402 = vld [vmem:[%s226 + $0x818] sm:$0xff]
                %403 = vst [vmem:[%s227 + $0x2b8] sm:$0xff] %v402
                %v404 = vld [vmem:[%s226 + $0x840] sm:$0xff]
                %405 = vst [vmem:[%s227 + $0x2c0] sm:$0xff] %v404
                %v406 = vld [vmem:[%s226 + $0x848] sm:$0xff]
                %407 = vst [vmem:[%s227 + $0x2c8] sm:$0xff] %v406
                %v408 = vld [vmem:[%s226 + $0x870] sm:$0xff]
                %409 = vst [vmem:[%s227 + $0x2d0] sm:$0xff] %v408
                %v410 = vld [vmem:[%s226 + $0x878] sm:$0xff]
                %411 = vst [vmem:[%s227 + $0x2d8] sm:$0xff] %v410
                %v412 = vld [vmem:[%s226 + $0x8a0] sm:$0xff]
                %413 = vst [vmem:[%s227 + $0x2e0] sm:$0xff] %v412
                %v414 = vld [vmem:[%s226 + $0x8a8] sm:$0xff]
                %415 = vst [vmem:[%s227 + $0x2e8] sm:$0xff] %v414
                %v416 = vld [vmem:[%s226 + $0x8d0] sm:$0xff]
                %417 = vst [vmem:[%s227 + $0x2f0] sm:$0xff] %v416
                %v418 = vld [vmem:[%s226 + $0x8d8] sm:$0xff]
                %419 = vst [vmem:[%s227 + $0x2f8] sm:$0xff] %v418
              $region41: #{gpt_forward.25} parent=35 // loop_footer
                %s225 = sadd.s32 1, %s221
              $region42: #{gpt_forward.25} parent=35 // loop_footer_branch
                %220 = sbr.rel target = $region38
              $region43: #{gpt_forward.25} parent=35 // loop_exit
                _
            $region36: #{gpt_forward.25} parent=31 // pred_fallthru
              _
            // Predicated region
            $region44: #{gpt_forward.25} parent=31 // pred_check
              _
            $region45: #{gpt_forward.25} parent=31 // pred_check_branch
              %421 = sbr.rel target = $region47
            $region46: #{gpt_forward.25} parent=31 // pred_region
              _
            $region47: #{gpt_forward.25} parent=31 // pred_fallthru
              _
          $region32: #{gpt_forward.25} parent=27 // pred_fallthru
            _
          %422 = vnop
        $region28: #{gpt_forward.25} parent=23 // pred_fallthru
          _
        // Predicated region
        $region48: #{gpt_forward.25} parent=23 // pred_check
          %p423 = pneg %p95
        $region49: #{gpt_forward.25} parent=23 // pred_check_branch
          %425 = sbr.rel (%p423) target = $region51
        $region50: #{gpt_forward.25} parent=23 // pred_region
          %s426 = smul.u32 4, %s19
          %p427 = scmp.lt.s32.totalorder %s426, 11
          %s428 = scalar_select %p427, %s426, 11
          %s429 = scalar_lea.vmem %s2, %s428
          %s430 = smul.u32 4, %s19
        $region51: #{gpt_forward.25} parent=23 // pred_fallthru
          _
        // Predicated region
        $region52: #{gpt_forward.25} parent=23 // pred_check
          %p431 = pneg %p121
        $region53: #{gpt_forward.25} parent=23 // pred_check_branch
          %433 = sbr.rel (%p431) target = $region55
        $region54: #{gpt_forward.25} parent=23 // pred_region
          %s434 = smul.u32 64, %s19
          %p435 = scmp.lt.s32.totalorder %s434, 191
          %s436 = scalar_select %p435, %s434, 191
          %s437 = smul.addr %s436, 3
          %s438 = smul.addr %s437, 4
          %s439 = scalar_lea.vmem %s3, %s438
          %s440 = smul.u32 64, %s19
        $region55: #{gpt_forward.25} parent=23 // pred_fallthru
          _
      $region24: #{gpt_forward.25} parent=5 // pred_fallthru
        _
      %p441 = scmp.le.s32.totalorder 1, %s11
      %p442 = scmp.lt.s32.totalorder %s11, 4
      %p443 = pnand %p441, %p442
      %p444 = pneg %p443
      // Predicated region
      $region56: #{gpt_forward.25} parent=5 // pred_check
        _
      $region57: #{gpt_forward.25} parent=5 // pred_check_branch
        %446 = sbr.rel (%p443) target = $region59
      $region58: #{gpt_forward.25} parent=5 // pred_region
        %s447 = ssub.s32 %s11, 1
        %s448 = sand.u32 %s62, 1
        %s449 = sand.u32 %s62, 1
        %s450 = smul.addr %s449, 768
        %s451 = scalar_lea.vmem [#allocation3], %s450
        // Predicated region
        $region60: #{gpt_forward.25} parent=58 // pred_check
          %p452 = pneg %p75
        $region61: #{gpt_forward.25} parent=58 // pred_check_branch
          %454 = sbr.rel (%p452) target = $region63
        $region62: #{gpt_forward.25} parent=58 // pred_region
          _
        $region63: #{gpt_forward.25} parent=58 // pred_fallthru
          _
        %s455 = smul.u32 4, %s20
        %p456 = scmp.lt.s32.totalorder %s455, 3
        %s457 = scalar_select %p456, %s455, 3
        %s458 = smul.addr %s457, 3
        %s459 = smul.addr %s458, 4
        %s460 = scalar_lea.vmem %s0, %s459
        %p461 = pneg %p49
        %p462 = pneg %p46
        %s463 = sand.u32 %s62, 1
        %s464 = sand.u32 %s62, 1
        %s465 = smul.addr %s464, 768
        %s466 = scalar_lea.vmem [#allocation3], %s465
        %p467 = pneg %p75
        %p468 = pneg %p72
        %s469 = smul.u32 4, %s21
        %p470 = scmp.lt.s32.totalorder %s469, 11
        %s471 = scalar_select %p470, %s469, 11
        %s472 = scalar_lea.vmem %s2, %s471
        %p473 = pneg %p101
        %p474 = pneg %p98
        %s475 = smul.u32 64, %s21
        %p476 = scmp.lt.s32.totalorder %s475, 191
        %s477 = scalar_select %p476, %s475, 191
        %s478 = smul.addr %s477, 3
        %s479 = smul.addr %s478, 4
        %s480 = scalar_lea.vmem %s3, %s479
        %p481 = pneg %p127
        %p482 = pneg %p124
        %p483 = pneg %p148
        %p484 = pneg %p145
        %p485 = pneg %p174
        %p486 = pneg %p171
        %s487 = smul.u32 4, %s20
        %p488 = scmp.lt.s32.totalorder %s487, 3
        %s489 = scalar_select %p488, %s487, 3
        %s490 = smul.addr %s489, 3
        %s491 = smul.addr %s490, 8
        %s492 = scalar_lea.vmem %s5, %s491
        %s493 = smul.u32 4, %s20
        %p494 = scmp.lt.s32.totalorder %s493, 3
        %s495 = scalar_select %p494, %s493, 3
        %s496 = smul.addr %s495, 3
        %s497 = smul.addr %s496, 4
        %s498 = scalar_lea.vmem %s0, %s497
        %s499 = smul.u32 4, %s20
        %s500 = smul.u32 4, %s21
        %s501 = smul.u32 4, %s21
        %p502 = scmp.lt.s32.totalorder %s501, 11
        %s503 = scalar_select %p502, %s501, 11
        %s504 = scalar_lea.vmem %s2, %s503
        %s505 = smul.u32 4, %s21
        %s506 = smul.u32 64, %s21
        %p507 = scmp.lt.s32.totalorder %s506, 191
        %s508 = scalar_select %p507, %s506, 191
        %s509 = smul.addr %s508, 3
        %s510 = smul.addr %s509, 4
        %s511 = scalar_lea.vmem %s3, %s510
        %s512 = smul.u32 64, %s21
        %s513 = smul.u32 4, %s20
        %p514 = scmp.lt.s32.totalorder %s513, 3
        %s515 = scalar_select %p514, %s513, 3
        %s516 = smul.addr %s515, 3
        %s517 = smul.addr %s516, 8
        %s518 = scalar_lea.vmem %s5, %s517
        %s519 = smul.u32 4, %s20
        %p521 = scmp.eq.s32.totalorder %s21, 0
        // Predicated region
        $region64: #{gpt_forward.25} parent=58 // pred_check
          %p522 = pneg %p521
        $region65: #{gpt_forward.25} parent=58 // pred_check_branch
          %524 = sbr.rel (%p522) target = $region67
        $region66: #{gpt_forward.25} parent=58 // pred_region
          %525 = vst [vmem:[#allocation2] sm:$0xff] 0.0
          %526 = vst [vmem:[#allocation2 + $0x8] sm:$0xff] 0.0
          %527 = vst [vmem:[#allocation2 + $0x10] sm:$0xff] 0.0
          %528 = vst [vmem:[#allocation2 + $0x18] sm:$0xff] 0.0
          %529 = vst [vmem:[#allocation2 + $0x20] sm:$0xff] 0.0
          %530 = vst [vmem:[#allocation2 + $0x28] sm:$0xff] 0.0
          %531 = vst [vmem:[#allocation2 + $0x30] sm:$0xff] 0.0
          %532 = vst [vmem:[#allocation2 + $0x38] sm:$0xff] 0.0
          %533 = vst [vmem:[#allocation2 + $0x40] sm:$0xff] 0.0
          %534 = vst [vmem:[#allocation2 + $0x48] sm:$0xff] 0.0
          %535 = vst [vmem:[#allocation2 + $0x50] sm:$0xff] 0.0
          %536 = vst [vmem:[#allocation2 + $0x58] sm:$0xff] 0.0
        $region67: #{gpt_forward.25} parent=58 // pred_fallthru
          _
        %v537 = vld [vmem:[%s498] sm:$0xff]
        %v538 = vld [vmem:[%s498 + $0x8] sm:$0xf]
        %v539 = vld [vmem:[%s498 + $0xc] sm:$0xff]
        %v540 = vld [vmem:[%s498 + $0x14] sm:$0xf]
        %v541 = vld [vmem:[%s498 + $0x18] sm:$0xff]
        %v542 = vld [vmem:[%s498 + $0x20] sm:$0xf]
        %v543 = vld [vmem:[%s498 + $0x24] sm:$0xff]
        %v544 = vld [vmem:[%s498 + $0x2c] sm:$0xf]
        %v545 = vld [vmem:[%s451] sm:$0xff]
        %v546 = vld [vmem:[%s451 + $0x8] sm:$0xff]
        %v547 = vld [vmem:[%s451 + $0x10] sm:$0xff]
        %v548 = vld [vmem:[%s451 + $0x18] sm:$0xff]
        %v549 = vld [vmem:[%s451 + $0x20] sm:$0xff]
        %v550 = vld [vmem:[%s451 + $0x28] sm:$0xff]
        %v551 = vld [vmem:[%s451 + $0x30] sm:$0xff]
        %v552 = vld [vmem:[%s451 + $0x38] sm:$0xff]
        %v553 = vld [vmem:[%s451 + $0x40] sm:$0xff]
        %v554 = vld [vmem:[%s451 + $0x48] sm:$0xff]
        %v555 = vld [vmem:[%s451 + $0x50] sm:$0xff]
        %v556 = vld [vmem:[%s451 + $0x58] sm:$0xff]
        %v557 = vld [vmem:[%s451 + $0x60] sm:$0xff]
        %v558 = vld [vmem:[%s451 + $0x68] sm:$0xff]
        %v559 = vld [vmem:[%s451 + $0x70] sm:$0xff]
        %v560 = vld [vmem:[%s451 + $0x78] sm:$0xff]
        %v561 = vld [vmem:[%s451 + $0x80] sm:$0xff]
        %v562 = vld [vmem:[%s451 + $0x88] sm:$0xff]
        %v563 = vld [vmem:[%s451 + $0x90] sm:$0xff]
        %v564 = vld [vmem:[%s451 + $0x98] sm:$0xff]
        %v565 = vld [vmem:[%s451 + $0xa0] sm:$0xff]
        %v566 = vld [vmem:[%s451 + $0xa8] sm:$0xff]
        %v567 = vld [vmem:[%s451 + $0xb0] sm:$0xff]
        %v568 = vld [vmem:[%s451 + $0xb8] sm:$0xff]
        %v569 = vld [vmem:[%s451 + $0xc0] sm:$0xff]
        %v570 = vld [vmem:[%s451 + $0xc8] sm:$0xff]
        %v571 = vld [vmem:[%s451 + $0xd0] sm:$0xff]
        %v572 = vld [vmem:[%s451 + $0xd8] sm:$0xff]
        %v573 = vld [vmem:[%s451 + $0xe0] sm:$0xff]
        %v574 = vld [vmem:[%s451 + $0xe8] sm:$0xff]
        %v575 = vld [vmem:[%s451 + $0xf0] sm:$0xff]
        %v576 = vld [vmem:[%s451 + $0xf8] sm:$0xff]
        %v577 = vld [vmem:[%s451 + $0x100] sm:$0xff]
        %v578 = vld [vmem:[%s451 + $0x108] sm:$0xff]
        %v579 = vld [vmem:[%s451 + $0x110] sm:$0xff]
        %v580 = vld [vmem:[%s451 + $0x118] sm:$0xff]
        %v581 = vld [vmem:[%s451 + $0x120] sm:$0xff]
        %v582 = vld [vmem:[%s451 + $0x128] sm:$0xff]
        %v583 = vld [vmem:[%s451 + $0x130] sm:$0xff]
        %v584 = vld [vmem:[%s451 + $0x138] sm:$0xff]
        %v585 = vld [vmem:[%s451 + $0x140] sm:$0xff]
        %v586 = vld [vmem:[%s451 + $0x148] sm:$0xff]
        %v587 = vld [vmem:[%s451 + $0x150] sm:$0xff]
        %v588 = vld [vmem:[%s451 + $0x158] sm:$0xff]
        %v589 = vld [vmem:[%s451 + $0x160] sm:$0xff]
        %v590 = vld [vmem:[%s451 + $0x168] sm:$0xff]
        %v591 = vld [vmem:[%s451 + $0x170] sm:$0xff]
        %v592 = vld [vmem:[%s451 + $0x178] sm:$0xff]
        %v593 = vld [vmem:[%s451 + $0x180] sm:$0xff]
        %v594 = vld [vmem:[%s451 + $0x188] sm:$0xff]
        %v595 = vld [vmem:[%s451 + $0x190] sm:$0xff]
        %v596 = vld [vmem:[%s451 + $0x198] sm:$0xff]
        %v597 = vld [vmem:[%s451 + $0x1a0] sm:$0xff]
        %v598 = vld [vmem:[%s451 + $0x1a8] sm:$0xff]
        %v599 = vld [vmem:[%s451 + $0x1b0] sm:$0xff]
        %v600 = vld [vmem:[%s451 + $0x1b8] sm:$0xff]
        %v601 = vld [vmem:[%s451 + $0x1c0] sm:$0xff]
        %v602 = vld [vmem:[%s451 + $0x1c8] sm:$0xff]
        %v603 = vld [vmem:[%s451 + $0x1d0] sm:$0xff]
        %v604 = vld [vmem:[%s451 + $0x1d8] sm:$0xff]
        %v605 = vld [vmem:[%s451 + $0x1e0] sm:$0xff]
        %v606 = vld [vmem:[%s451 + $0x1e8] sm:$0xff]
        %v607 = vld [vmem:[%s451 + $0x1f0] sm:$0xff]
        %v608 = vld [vmem:[%s451 + $0x1f8] sm:$0xff]
        %v609 = vld [vmem:[%s451 + $0x200] sm:$0xff]
        %v610 = vld [vmem:[%s451 + $0x208] sm:$0xff]
        %v611 = vld [vmem:[%s451 + $0x210] sm:$0xff]
        %v612 = vld [vmem:[%s451 + $0x218] sm:$0xff]
        %v613 = vld [vmem:[%s451 + $0x220] sm:$0xff]
        %v614 = vld [vmem:[%s451 + $0x228] sm:$0xff]
        %v615 = vld [vmem:[%s451 + $0x230] sm:$0xff]
        %v616 = vld [vmem:[%s451 + $0x238] sm:$0xff]
        %v617 = vld [vmem:[%s451 + $0x240] sm:$0xff]
        %v618 = vld [vmem:[%s451 + $0x248] sm:$0xff]
        %v619 = vld [vmem:[%s451 + $0x250] sm:$0xff]
        %v620 = vld [vmem:[%s451 + $0x258] sm:$0xff]
        %v621 = vld [vmem:[%s451 + $0x260] sm:$0xff]
        %v622 = vld [vmem:[%s451 + $0x268] sm:$0xff]
        %v623 = vld [vmem:[%s451 + $0x270] sm:$0xff]
        %v624 = vld [vmem:[%s451 + $0x278] sm:$0xff]
        %v625 = vld [vmem:[%s451 + $0x280] sm:$0xff]
        %v626 = vld [vmem:[%s451 + $0x288] sm:$0xff]
        %v627 = vld [vmem:[%s451 + $0x290] sm:$0xff]
        %v628 = vld [vmem:[%s451 + $0x298] sm:$0xff]
        %v629 = vld [vmem:[%s451 + $0x2a0] sm:$0xff]
        %v630 = vld [vmem:[%s451 + $0x2a8] sm:$0xff]
        %v631 = vld [vmem:[%s451 + $0x2b0] sm:$0xff]
        %v632 = vld [vmem:[%s451 + $0x2b8] sm:$0xff]
        %v633 = vld [vmem:[%s451 + $0x2c0] sm:$0xff]
        %v634 = vld [vmem:[%s451 + $0x2c8] sm:$0xff]
        %v635 = vld [vmem:[%s451 + $0x2d0] sm:$0xff]
        %v636 = vld [vmem:[%s451 + $0x2d8] sm:$0xff]
        %v637 = vld [vmem:[%s451 + $0x2e0] sm:$0xff]
        %v638 = vld [vmem:[%s451 + $0x2e8] sm:$0xff]
        %v639 = vld [vmem:[%s451 + $0x2f0] sm:$0xff]
        %v640 = vld [vmem:[%s451 + $0x2f8] sm:$0xff]
        %v641 = vld [vmem:[%s504] sm:$0xf]
        %v643 = vlaneseq
        %v644 = vshrl.u32 %v643, 7
        %v645 = vsub.s32 0, %v644
        %v646 = vrot.slane %v641, %v645
        %v647 = vlaneseq
        %v648 = vshrl.u32 %v647, 7
        %v649 = vsub.s32 1, %v648
        %v650 = vrot.slane %v641, %v649
        %v651 = vlaneseq
        %v652 = vshrl.u32 %v651, 7
        %v653 = vsub.s32 2, %v652
        %v654 = vrot.slane %v641, %v653
        %v655 = vlaneseq
        %v656 = vshrl.u32 %v655, 7
        %v657 = vsub.s32 3, %v656
        %v658 = vrot.slane %v641, %v657
        %v671 = vunpack.c.l.b16 %v537
        %v672 = vunpack.c.h.b16 %v537
        %v673 = vunpack.c.l.b16 %v538
        %v674 = vunpack.c.l.b16 %v539
        %v675 = vunpack.c.h.b16 %v539
        %v676 = vunpack.c.l.b16 %v540
        %v677 = vunpack.c.l.b16 %v541
        %v678 = vunpack.c.h.b16 %v541
        %v679 = vunpack.c.l.b16 %v542
        %v680 = vunpack.c.l.b16 %v543
        %v681 = vunpack.c.h.b16 %v543
        %v682 = vunpack.c.l.b16 %v544
        %v683 = vpack.c.b16 %v674, %v671
        %v684 = vpack.c.b16 %v675, %v672
        %v685 = vpack.c.b16 %v676, %v673
        %v686 = vpack.c.b16 %v680, %v677
        %v687 = vpack.c.b16 %v681, %v678
        %v688 = vpack.c.b16 %v682, %v679
        %v791 = vunpack.c.l.b16 %v545
        %v792 = vunpack.c.h.b16 %v545
        %v793 = vunpack.c.l.b16 %v546
        %v794 = vunpack.c.h.b16 %v546
        %v795 = vunpack.c.l.b16 %v547
        %v796 = vunpack.c.h.b16 %v547
        %v797 = vunpack.c.l.b16 %v548
        %v798 = vunpack.c.h.b16 %v548
        %v799 = vunpack.c.l.b16 %v549
        %v800 = vunpack.c.h.b16 %v549
        %v801 = vunpack.c.l.b16 %v550
        %v802 = vunpack.c.h.b16 %v550
        %v803 = vunpack.c.l.b16 %v551
        %v804 = vunpack.c.h.b16 %v551
        %v805 = vunpack.c.l.b16 %v552
        %v806 = vunpack.c.h.b16 %v552
        %v807 = vunpack.c.l.b16 %v553
        %v808 = vunpack.c.h.b16 %v553
        %v809 = vunpack.c.l.b16 %v554
        %v810 = vunpack.c.h.b16 %v554
        %v811 = vunpack.c.l.b16 %v555
        %v812 = vunpack.c.h.b16 %v555
        %v813 = vunpack.c.l.b16 %v556
        %v814 = vunpack.c.h.b16 %v556
        %v815 = vunpack.c.l.b16 %v557
        %v816 = vunpack.c.h.b16 %v557
        %v817 = vunpack.c.l.b16 %v558
        %v818 = vunpack.c.h.b16 %v558
        %v819 = vunpack.c.l.b16 %v559
        %v820 = vunpack.c.h.b16 %v559
        %v821 = vunpack.c.l.b16 %v560
        %v822 = vunpack.c.h.b16 %v560
        %v823 = vunpack.c.l.b16 %v561
        %v824 = vunpack.c.h.b16 %v561
        %v825 = vunpack.c.l.b16 %v562
        %v826 = vunpack.c.h.b16 %v562
        %v827 = vunpack.c.l.b16 %v563
        %v828 = vunpack.c.h.b16 %v563
        %v829 = vunpack.c.l.b16 %v564
        %v830 = vunpack.c.h.b16 %v564
        %v831 = vunpack.c.l.b16 %v565
        %v832 = vunpack.c.h.b16 %v565
        %v833 = vunpack.c.l.b16 %v566
        %v834 = vunpack.c.h.b16 %v566
        %v835 = vunpack.c.l.b16 %v567
        %v836 = vunpack.c.h.b16 %v567
        %v837 = vunpack.c.l.b16 %v568
        %v838 = vunpack.c.h.b16 %v568
        %v839 = vunpack.c.l.b16 %v569
        %v840 = vunpack.c.h.b16 %v569
        %v841 = vunpack.c.l.b16 %v570
        %v842 = vunpack.c.h.b16 %v570
        %v843 = vunpack.c.l.b16 %v571
        %v844 = vunpack.c.h.b16 %v571
        %v845 = vunpack.c.l.b16 %v572
        %v846 = vunpack.c.h.b16 %v572
        %v847 = vunpack.c.l.b16 %v573
        %v848 = vunpack.c.h.b16 %v573
        %v849 = vunpack.c.l.b16 %v574
        %v850 = vunpack.c.h.b16 %v574
        %v851 = vunpack.c.l.b16 %v575
        %v852 = vunpack.c.h.b16 %v575
        %v853 = vunpack.c.l.b16 %v576
        %v854 = vunpack.c.h.b16 %v576
        %v855 = vunpack.c.l.b16 %v577
        %v856 = vunpack.c.h.b16 %v577
        %v857 = vunpack.c.l.b16 %v578
        %v858 = vunpack.c.h.b16 %v578
        %v859 = vunpack.c.l.b16 %v579
        %v860 = vunpack.c.h.b16 %v579
        %v861 = vunpack.c.l.b16 %v580
        %v862 = vunpack.c.h.b16 %v580
        %v863 = vunpack.c.l.b16 %v581
        %v864 = vunpack.c.h.b16 %v581
        %v865 = vunpack.c.l.b16 %v582
        %v866 = vunpack.c.h.b16 %v582
        %v867 = vunpack.c.l.b16 %v583
        %v868 = vunpack.c.h.b16 %v583
        %v869 = vunpack.c.l.b16 %v584
        %v870 = vunpack.c.h.b16 %v584
        %v871 = vunpack.c.l.b16 %v585
        %v872 = vunpack.c.h.b16 %v585
        %v873 = vunpack.c.l.b16 %v586
        %v874 = vunpack.c.h.b16 %v586
        %v875 = vunpack.c.l.b16 %v587
        %v876 = vunpack.c.h.b16 %v587
        %v877 = vunpack.c.l.b16 %v588
        %v878 = vunpack.c.h.b16 %v588
        %v879 = vunpack.c.l.b16 %v589
        %v880 = vunpack.c.h.b16 %v589
        %v881 = vunpack.c.l.b16 %v590
        %v882 = vunpack.c.h.b16 %v590
        %v883 = vunpack.c.l.b16 %v591
        %v884 = vunpack.c.h.b16 %v591
        %v885 = vunpack.c.l.b16 %v592
        %v886 = vunpack.c.h.b16 %v592
        %v887 = vunpack.c.l.b16 %v593
        %v888 = vunpack.c.h.b16 %v593
        %v889 = vunpack.c.l.b16 %v594
        %v890 = vunpack.c.h.b16 %v594
        %v891 = vunpack.c.l.b16 %v595
        %v892 = vunpack.c.h.b16 %v595
        %v893 = vunpack.c.l.b16 %v596
        %v894 = vunpack.c.h.b16 %v596
        %v895 = vunpack.c.l.b16 %v597
        %v896 = vunpack.c.h.b16 %v597
        %v897 = vunpack.c.l.b16 %v598
        %v898 = vunpack.c.h.b16 %v598
        %v899 = vunpack.c.l.b16 %v599
        %v900 = vunpack.c.h.b16 %v599
        %v901 = vunpack.c.l.b16 %v600
        %v902 = vunpack.c.h.b16 %v600
        %v903 = vunpack.c.l.b16 %v601
        %v904 = vunpack.c.h.b16 %v601
        %v905 = vunpack.c.l.b16 %v602
        %v906 = vunpack.c.h.b16 %v602
        %v907 = vunpack.c.l.b16 %v603
        %v908 = vunpack.c.h.b16 %v603
        %v909 = vunpack.c.l.b16 %v604
        %v910 = vunpack.c.h.b16 %v604
        %v911 = vunpack.c.l.b16 %v605
        %v912 = vunpack.c.h.b16 %v605
        %v913 = vunpack.c.l.b16 %v606
        %v914 = vunpack.c.h.b16 %v606
        %v915 = vunpack.c.l.b16 %v607
        %v916 = vunpack.c.h.b16 %v607
        %v917 = vunpack.c.l.b16 %v608
        %v918 = vunpack.c.h.b16 %v608
        %v919 = vunpack.c.l.b16 %v609
        %v920 = vunpack.c.h.b16 %v609
        %v921 = vunpack.c.l.b16 %v610
        %v922 = vunpack.c.h.b16 %v610
        %v923 = vunpack.c.l.b16 %v611
        %v924 = vunpack.c.h.b16 %v611
        %v925 = vunpack.c.l.b16 %v612
        %v926 = vunpack.c.h.b16 %v612
        %v927 = vunpack.c.l.b16 %v613
        %v928 = vunpack.c.h.b16 %v613
        %v929 = vunpack.c.l.b16 %v614
        %v930 = vunpack.c.h.b16 %v614
        %v931 = vunpack.c.l.b16 %v615
        %v932 = vunpack.c.h.b16 %v615
        %v933 = vunpack.c.l.b16 %v616
        %v934 = vunpack.c.h.b16 %v616
        %v935 = vunpack.c.l.b16 %v617
        %v936 = vunpack.c.h.b16 %v617
        %v937 = vunpack.c.l.b16 %v618
        %v938 = vunpack.c.h.b16 %v618
        %v939 = vunpack.c.l.b16 %v619
        %v940 = vunpack.c.h.b16 %v619
        %v941 = vunpack.c.l.b16 %v620
        %v942 = vunpack.c.h.b16 %v620
        %v943 = vunpack.c.l.b16 %v621
        %v944 = vunpack.c.h.b16 %v621
        %v945 = vunpack.c.l.b16 %v622
        %v946 = vunpack.c.h.b16 %v622
        %v947 = vunpack.c.l.b16 %v623
        %v948 = vunpack.c.h.b16 %v623
        %v949 = vunpack.c.l.b16 %v624
        %v950 = vunpack.c.h.b16 %v624
        %v951 = vunpack.c.l.b16 %v625
        %v952 = vunpack.c.h.b16 %v625
        %v953 = vunpack.c.l.b16 %v626
        %v954 = vunpack.c.h.b16 %v626
        %v955 = vunpack.c.l.b16 %v627
        %v956 = vunpack.c.h.b16 %v627
        %v957 = vunpack.c.l.b16 %v628
        %v958 = vunpack.c.h.b16 %v628
        %v959 = vunpack.c.l.b16 %v629
        %v960 = vunpack.c.h.b16 %v629
        %v961 = vunpack.c.l.b16 %v630
        %v962 = vunpack.c.h.b16 %v630
        %v963 = vunpack.c.l.b16 %v631
        %v964 = vunpack.c.h.b16 %v631
        %v965 = vunpack.c.l.b16 %v632
        %v966 = vunpack.c.h.b16 %v632
        %v967 = vunpack.c.l.b16 %v633
        %v968 = vunpack.c.h.b16 %v633
        %v969 = vunpack.c.l.b16 %v634
        %v970 = vunpack.c.h.b16 %v634
        %v971 = vunpack.c.l.b16 %v635
        %v972 = vunpack.c.h.b16 %v635
        %v973 = vunpack.c.l.b16 %v636
        %v974 = vunpack.c.h.b16 %v636
        %v975 = vunpack.c.l.b16 %v637
        %v976 = vunpack.c.h.b16 %v637
        %v977 = vunpack.c.l.b16 %v638
        %v978 = vunpack.c.h.b16 %v638
        %v979 = vunpack.c.l.b16 %v639
        %v980 = vunpack.c.h.b16 %v639
        %v981 = vunpack.c.l.b16 %v640
        %v982 = vunpack.c.h.b16 %v640
        %v983 = vpack.c.b16 %v795, %v791
        %v984 = vpack.c.b16 %v796, %v792
        %v985 = vpack.c.b16 %v797, %v793
        %v986 = vpack.c.b16 %v798, %v794
        %v987 = vpack.c.b16 %v803, %v799
        %v988 = vpack.c.b16 %v804, %v800
        %v989 = vpack.c.b16 %v805, %v801
        %v990 = vpack.c.b16 %v806, %v802
        %v991 = vpack.c.b16 %v811, %v807
        %v992 = vpack.c.b16 %v812, %v808
        %v993 = vpack.c.b16 %v813, %v809
        %v994 = vpack.c.b16 %v814, %v810
        %v995 = vpack.c.b16 %v819, %v815
        %v996 = vpack.c.b16 %v820, %v816
        %v997 = vpack.c.b16 %v821, %v817
        %v998 = vpack.c.b16 %v822, %v818
        %v999 = vpack.c.b16 %v827, %v823
        %v1000 = vpack.c.b16 %v828, %v824
        %v1001 = vpack.c.b16 %v829, %v825
        %v1002 = vpack.c.b16 %v830, %v826
        %v1003 = vpack.c.b16 %v835, %v831
        %v1004 = vpack.c.b16 %v836, %v832
        %v1005 = vpack.c.b16 %v837, %v833
        %v1006 = vpack.c.b16 %v838, %v834
        %v1007 = vpack.c.b16 %v843, %v839
        %v1008 = vpack.c.b16 %v844, %v840
        %v1009 = vpack.c.b16 %v845, %v841
        %v1010 = vpack.c.b16 %v846, %v842
        %v1011 = vpack.c.b16 %v851, %v847
        %v1012 = vpack.c.b16 %v852, %v848
        %v1013 = vpack.c.b16 %v853, %v849
        %v1014 = vpack.c.b16 %v854, %v850
        %v1015 = vpack.c.b16 %v859, %v855
        %v1016 = vpack.c.b16 %v860, %v856
        %v1017 = vpack.c.b16 %v861, %v857
        %v1018 = vpack.c.b16 %v862, %v858
        %v1019 = vpack.c.b16 %v867, %v863
        %v1020 = vpack.c.b16 %v868, %v864
        %v1021 = vpack.c.b16 %v869, %v865
        %v1022 = vpack.c.b16 %v870, %v866
        %v1023 = vpack.c.b16 %v875, %v871
        %v1024 = vpack.c.b16 %v876, %v872
        %v1025 = vpack.c.b16 %v877, %v873
        %v1026 = vpack.c.b16 %v878, %v874
        %v1027 = vpack.c.b16 %v883, %v879
        %v1028 = vpack.c.b16 %v884, %v880
        %v1029 = vpack.c.b16 %v885, %v881
        %v1030 = vpack.c.b16 %v886, %v882
        %v1031 = vpack.c.b16 %v891, %v887
        %v1032 = vpack.c.b16 %v892, %v888
        %v1033 = vpack.c.b16 %v893, %v889
        %v1034 = vpack.c.b16 %v894, %v890
        %v1035 = vpack.c.b16 %v899, %v895
        %v1036 = vpack.c.b16 %v900, %v896
        %v1037 = vpack.c.b16 %v901, %v897
        %v1038 = vpack.c.b16 %v902, %v898
        %v1039 = vpack.c.b16 %v907, %v903
        %v1040 = vpack.c.b16 %v908, %v904
        %v1041 = vpack.c.b16 %v909, %v905
        %v1042 = vpack.c.b16 %v910, %v906
        %v1043 = vpack.c.b16 %v915, %v911
        %v1044 = vpack.c.b16 %v916, %v912
        %v1045 = vpack.c.b16 %v917, %v913
        %v1046 = vpack.c.b16 %v918, %v914
        %v1047 = vpack.c.b16 %v923, %v919
        %v1048 = vpack.c.b16 %v924, %v920
        %v1049 = vpack.c.b16 %v925, %v921
        %v1050 = vpack.c.b16 %v926, %v922
        %v1051 = vpack.c.b16 %v931, %v927
        %v1052 = vpack.c.b16 %v932, %v928
        %v1053 = vpack.c.b16 %v933, %v929
        %v1054 = vpack.c.b16 %v934, %v930
        %v1055 = vpack.c.b16 %v939, %v935
        %v1056 = vpack.c.b16 %v940, %v936
        %v1057 = vpack.c.b16 %v941, %v937
        %v1058 = vpack.c.b16 %v942, %v938
        %v1059 = vpack.c.b16 %v947, %v943
        %v1060 = vpack.c.b16 %v948, %v944
        %v1061 = vpack.c.b16 %v949, %v945
        %v1062 = vpack.c.b16 %v950, %v946
        %v1063 = vpack.c.b16 %v955, %v951
        %v1064 = vpack.c.b16 %v956, %v952
        %v1065 = vpack.c.b16 %v957, %v953
        %v1066 = vpack.c.b16 %v958, %v954
        %v1067 = vpack.c.b16 %v963, %v959
        %v1068 = vpack.c.b16 %v964, %v960
        %v1069 = vpack.c.b16 %v965, %v961
        %v1070 = vpack.c.b16 %v966, %v962
        %v1071 = vpack.c.b16 %v971, %v967
        %v1072 = vpack.c.b16 %v972, %v968
        %v1073 = vpack.c.b16 %v973, %v969
        %v1074 = vpack.c.b16 %v974, %v970
        %v1075 = vpack.c.b16 %v979, %v975
        %v1076 = vpack.c.b16 %v980, %v976
        %v1077 = vpack.c.b16 %v981, %v977
        %v1078 = vpack.c.b16 %v982, %v978
        %1175 = vmatprep.subr.bf16.mxu0 %v984
        %1176 = vmatpush1.bf16.msra.mxu0 %v983
        %1177 = vmatprep.subr.bf16.mxu0 %v988
        %1178 = vmatpush1.bf16.msra.mxu0 %v987
        %1179 = vmatprep.subr.bf16.mxu0 %v992
        %1180 = vmatpush1.bf16.msra.mxu0 %v991
        %1181 = vmatprep.subr.bf16.mxu0 %v996
        %1182 = vmatpush1.bf16.msra.mxu0 %v995
        %1183 = vmatprep.subr.bf16.mxu0 %v1000
        %1184 = vmatpush1.bf16.msra.mxu0 %v999
        %1185 = vmatprep.subr.bf16.mxu0 %v1004
        %1186 = vmatpush1.bf16.msra.mxu0 %v1003
        %1187 = vmatprep.subr.bf16.mxu0 %v1008
        %1188 = vmatpush1.bf16.msra.mxu0 %v1007
        %1189 = vmatprep.subr.bf16.mxu0 %v1012
        %1190 = vmatpush1.bf16.msra.mxu0 %v1011
        %1191 = vmatprep.subr.bf16.mxu0 %v1016
        %1192 = vmatpush1.bf16.msra.mxu0 %v1015
        %1193 = vmatprep.subr.bf16.mxu0 %v1020
        %1194 = vmatpush1.bf16.msra.mxu0 %v1019
        %1195 = vmatprep.subr.bf16.mxu0 %v1024
        %1196 = vmatpush1.bf16.msra.mxu0 %v1023
        %1197 = vmatprep.subr.bf16.mxu0 %v1028
        %1198 = vmatpush1.bf16.msra.mxu0 %v1027
        %1199 = vmatprep.subr.bf16.mxu0 %v1032
        %1200 = vmatpush1.bf16.msra.mxu0 %v1031
        %1201 = vmatprep.subr.bf16.mxu0 %v1036
        %1202 = vmatpush1.bf16.msra.mxu0 %v1035
        %1203 = vmatprep.subr.bf16.mxu0 %v1040
        %1204 = vmatpush1.bf16.msra.mxu0 %v1039
        %1205 = vmatprep.subr.bf16.mxu0 %v1044
        %1206 = vmatpush1.bf16.msra.mxu0 %v1043
        %1207 = vmatprep.mubr.bf16.mxu0 %v684
        %1208 = vmatmul.mubr.bf16.gmra.mrb[0].mxu0 %v683
        %v1209 = vpop.f32.mrb[0].mxu0
        %v1210 = vadd.f32 %v646, %v1209
        %v1211 = vpop.f32.mrb[0].mxu0
        %v1212 = vadd.f32 %v650, %v1211
        %v1213 = vpop.f32.mrb[0].mxu0
        %v1214 = vadd.f32 %v646, %v1213
        %v1215 = vpop.f32.mrb[0].mxu0
        %v1216 = vadd.f32 %v650, %v1215
        %1217 = vmatprep.mubr.bf16.mxu0 %v687
        %1218 = vmatmul.mubr.bf16.gmra.mrb[0].mxu0 %v686
        %v1219 = vpop.f32.mrb[0].mxu0
        %v1220 = vadd.f32 %v646, %v1219
        %v1221 = vpop.f32.mrb[0].mxu0
        %v1222 = vadd.f32 %v650, %v1221
        %v1223 = vpop.f32.mrb[0].mxu0
        %v1224 = vadd.f32 %v646, %v1223
        %v1225 = vpop.f32.mrb[0].mxu0
        %v1226 = vadd.f32 %v650, %v1225
        %1227 = vdwg.mxu0
        %1228 = vmatprep.subr.bf16.mxu0 %v1048
        %1229 = vmatpush1.bf16.msra.mxu0 %v1047
        %1230 = vmatprep.subr.bf16.mxu0 %v1052
        %1231 = vmatpush1.bf16.msra.mxu0 %v1051
        %1232 = vmatprep.subr.bf16.mxu0 %v1056
        %1233 = vmatpush1.bf16.msra.mxu0 %v1055
        %1234 = vmatprep.subr.bf16.mxu0 %v1060
        %1235 = vmatpush1.bf16.msra.mxu0 %v1059
        %1236 = vmatprep.subr.bf16.mxu0 %v1064
        %1237 = vmatpush1.bf16.msra.mxu0 %v1063
        %1238 = vmatprep.subr.bf16.mxu0 %v1068
        %1239 = vmatpush1.bf16.msra.mxu0 %v1067
        %1240 = vmatprep.subr.bf16.mxu0 %v1072
        %1241 = vmatpush1.bf16.msra.mxu0 %v1071
        %1242 = vmatprep.subr.bf16.mxu0 %v1076
        %1243 = vmatpush1.bf16.msra.mxu0 %v1075
        %1244 = vmatprep.subr.bf16.mxu0 0
        %1245 = vmatpush1.bf16.msra.mxu0 0
        %1246 = vmatprep.subr.bf16.mxu0 0
        %1247 = vmatpush1.bf16.msra.mxu0 0
        %1248 = vmatprep.subr.bf16.mxu0 0
        %1249 = vmatpush1.bf16.msra.mxu0 0
        %1250 = vmatprep.subr.bf16.mxu0 0
        %1251 = vmatpush1.bf16.msra.mxu0 0
        %1252 = vmatprep.subr.bf16.mxu0 0
        %1253 = vmatpush1.bf16.msra.mxu0 0
        %1254 = vmatprep.subr.bf16.mxu0 0
        %1255 = vmatpush1.bf16.msra.mxu0 0
        %1256 = vmatprep.subr.bf16.mxu0 0
        %1257 = vmatpush1.bf16.msra.mxu0 0
        %1258 = vmatprep.subr.bf16.mxu0 0
        %1259 = vmatpush1.bf16.msra.mxu0 0
        %1260 = vmatprep.mubr.bf16.mxu0 0
        %1261 = vmatmul.mubr.bf16.gmra.mrb[0].mxu0 %v685
        %v1262 = vpop.f32.mrb[0].mxu0
        %v1263 = vadd.f32 %v1210, %v1262
        %v1264 = vpop.f32.mrb[0].mxu0
        %v1265 = vadd.f32 %v1212, %v1264
        %v1266 = vpop.f32.mrb[0].mxu0
        %v1267 = vadd.f32 %v1214, %v1266
        %v1268 = vpop.f32.mrb[0].mxu0
        %v1269 = vadd.f32 %v1216, %v1268
        %1270 = vmatprep.mubr.bf16.mxu0 0
        %1271 = vmatmul.mubr.bf16.gmra.mrb[0].mxu0 %v688
        %v1272 = vpop.f32.mrb[0].mxu0
        %v1273 = vadd.f32 %v1220, %v1272
        %v1274 = vpop.f32.mrb[0].mxu0
        %v1275 = vadd.f32 %v1222, %v1274
        %v1276 = vpop.f32.mrb[0].mxu0
        %v1277 = vadd.f32 %v1224, %v1276
        %v1278 = vpop.f32.mrb[0].mxu0
        %v1279 = vadd.f32 %v1226, %v1278
        %1280 = vdwg.mxu0
        %1281 = vmatprep.subr.bf16.mxu0 %v986
        %1282 = vmatpush1.bf16.msra.mxu0 %v985
        %1283 = vmatprep.subr.bf16.mxu0 %v990
        %1284 = vmatpush1.bf16.msra.mxu0 %v989
        %1285 = vmatprep.subr.bf16.mxu0 %v994
        %1286 = vmatpush1.bf16.msra.mxu0 %v993
        %1287 = vmatprep.subr.bf16.mxu0 %v998
        %1288 = vmatpush1.bf16.msra.mxu0 %v997
        %1289 = vmatprep.subr.bf16.mxu0 %v1002
        %1290 = vmatpush1.bf16.msra.mxu0 %v1001
        %1291 = vmatprep.subr.bf16.mxu0 %v1006
        %1292 = vmatpush1.bf16.msra.mxu0 %v1005
        %1293 = vmatprep.subr.bf16.mxu0 %v1010
        %1294 = vmatpush1.bf16.msra.mxu0 %v1009
        %1295 = vmatprep.subr.bf16.mxu0 %v1014
        %1296 = vmatpush1.bf16.msra.mxu0 %v1013
        %1297 = vmatprep.subr.bf16.mxu0 %v1018
        %1298 = vmatpush1.bf16.msra.mxu0 %v1017
        %1299 = vmatprep.subr.bf16.mxu0 %v1022
        %1300 = vmatpush1.bf16.msra.mxu0 %v1021
        %1301 = vmatprep.subr.bf16.mxu0 %v1026
        %1302 = vmatpush1.bf16.msra.mxu0 %v1025
        %1303 = vmatprep.subr.bf16.mxu0 %v1030
        %1304 = vmatpush1.bf16.msra.mxu0 %v1029
        %1305 = vmatprep.subr.bf16.mxu0 %v1034
        %1306 = vmatpush1.bf16.msra.mxu0 %v1033
        %1307 = vmatprep.subr.bf16.mxu0 %v1038
        %1308 = vmatpush1.bf16.msra.mxu0 %v1037
        %1309 = vmatprep.subr.bf16.mxu0 %v1042
        %1310 = vmatpush1.bf16.msra.mxu0 %v1041
        %1311 = vmatprep.subr.bf16.mxu0 %v1046
        %1312 = vmatpush1.bf16.msra.mxu0 %v1045
        %1313 = vmatprep.mubr.bf16.mxu0 %v684
        %1314 = vmatmul.mubr.bf16.gmra.mrb[0].mxu0 %v683
        %v1315 = vpop.f32.mrb[0].mxu0
        %v1316 = vadd.f32 %v654, %v1315
        %v1317 = vpop.f32.mrb[0].mxu0
        %v1318 = vadd.f32 %v658, %v1317
        %v1319 = vpop.f32.mrb[0].mxu0
        %v1320 = vadd.f32 %v654, %v1319
        %v1321 = vpop.f32.mrb[0].mxu0
        %v1322 = vadd.f32 %v658, %v1321
        %1323 = vmatprep.mubr.bf16.mxu0 %v687
        %1324 = vmatmul.mubr.bf16.gmra.mrb[0].mxu0 %v686
        %v1325 = vpop.f32.mrb[0].mxu0
        %v1326 = vadd.f32 %v654, %v1325
        %v1327 = vpop.f32.mrb[0].mxu0
        %v1328 = vadd.f32 %v658, %v1327
        %v1329 = vpop.f32.mrb[0].mxu0
        %v1330 = vadd.f32 %v654, %v1329
        %v1331 = vpop.f32.mrb[0].mxu0
        %v1332 = vadd.f32 %v658, %v1331
        %1333 = vdwg.mxu0
        %1334 = vmatprep.subr.bf16.mxu0 %v1050
        %1335 = vmatpush1.bf16.msra.mxu0 %v1049
        %1336 = vmatprep.subr.bf16.mxu0 %v1054
        %1337 = vmatpush1.bf16.msra.mxu0 %v1053
        %1338 = vmatprep.subr.bf16.mxu0 %v1058
        %1339 = vmatpush1.bf16.msra.mxu0 %v1057
        %1340 = vmatprep.subr.bf16.mxu0 %v1062
        %1341 = vmatpush1.bf16.msra.mxu0 %v1061
        %1342 = vmatprep.subr.bf16.mxu0 %v1066
        %1343 = vmatpush1.bf16.msra.mxu0 %v1065
        %1344 = vmatprep.subr.bf16.mxu0 %v1070
        %1345 = vmatpush1.bf16.msra.mxu0 %v1069
        %1346 = vmatprep.subr.bf16.mxu0 %v1074
        %1347 = vmatpush1.bf16.msra.mxu0 %v1073
        %1348 = vmatprep.subr.bf16.mxu0 %v1078
        %1349 = vmatpush1.bf16.msra.mxu0 %v1077
        %1350 = vmatprep.subr.bf16.mxu0 0
        %1351 = vmatpush1.bf16.msra.mxu0 0
        %1352 = vmatprep.subr.bf16.mxu0 0
        %1353 = vmatpush1.bf16.msra.mxu0 0
        %1354 = vmatprep.subr.bf16.mxu0 0
        %1355 = vmatpush1.bf16.msra.mxu0 0
        %1356 = vmatprep.subr.bf16.mxu0 0
        %1357 = vmatpush1.bf16.msra.mxu0 0
        %1358 = vmatprep.subr.bf16.mxu0 0
        %1359 = vmatpush1.bf16.msra.mxu0 0
        %1360 = vmatprep.subr.bf16.mxu0 0
        %1361 = vmatpush1.bf16.msra.mxu0 0
        %1362 = vmatprep.subr.bf16.mxu0 0
        %1363 = vmatpush1.bf16.msra.mxu0 0
        %1364 = vmatprep.subr.bf16.mxu0 0
        %1365 = vmatpush1.bf16.msra.mxu0 0
        %1366 = vmatprep.mubr.bf16.mxu0 0
        %1367 = vmatmul.mubr.bf16.gmra.mrb[0].mxu0 %v685
        %v1368 = vpop.f32.mrb[0].mxu0
        %v1369 = vadd.f32 %v1316, %v1368
        %v1370 = vpop.f32.mrb[0].mxu0
        %v1371 = vadd.f32 %v1318, %v1370
        %v1372 = vpop.f32.mrb[0].mxu0
        %v1373 = vadd.f32 %v1320, %v1372
        %v1374 = vpop.f32.mrb[0].mxu0
        %v1375 = vadd.f32 %v1322, %v1374
        %1376 = vmatprep.mubr.bf16.mxu0 0
        %1377 = vmatmul.mubr.bf16.gmra.mrb[0].mxu0 %v688
        %v1378 = vpop.f32.mrb[0].mxu0
        %v1379 = vadd.f32 %v1326, %v1378
        %v1380 = vpop.f32.mrb[0].mxu0
        %v1381 = vadd.f32 %v1328, %v1380
        %v1382 = vpop.f32.mrb[0].mxu0
        %v1383 = vadd.f32 %v1330, %v1382
        %v1384 = vpop.f32.mrb[0].mxu0
        %v1385 = vadd.f32 %v1332, %v1384
        %1386 = vdwg.mxu0
        %v1387 = vmax.f32 %v1263, 0.0
        %v1388 = vmax.f32 %v1265, 0.0
        %v1389 = vmax.f32 %v1369, 0.0
        %v1390 = vmax.f32 %v1371, 0.0
        %v1391 = vmax.f32 %v1267, 0.0
        %v1392 = vmax.f32 %v1269, 0.0
        %v1393 = vmax.f32 %v1373, 0.0
        %v1394 = vmax.f32 %v1375, 0.0
        %v1395 = vmax.f32 %v1273, 0.0
        %v1396 = vmax.f32 %v1275, 0.0
        %v1397 = vmax.f32 %v1379, 0.0
        %v1398 = vmax.f32 %v1381, 0.0
        %v1399 = vmax.f32 %v1277, 0.0
        %v1400 = vmax.f32 %v1279, 0.0
        %v1401 = vmax.f32 %v1383, 0.0
        %v1402 = vmax.f32 %v1385, 0.0
        %v1403 = vld [vmem:[#allocation2] sm:$0xff]
        %v1404 = vld [vmem:[#allocation2 + $0x8] sm:$0xff]
        %v1405 = vld [vmem:[#allocation2 + $0x10] sm:$0xff]
        %v1406 = vld [vmem:[#allocation2 + $0x18] sm:$0xff]
        %v1407 = vld [vmem:[#allocation2 + $0x20] sm:$0xff]
        %v1408 = vld [vmem:[#allocation2 + $0x28] sm:$0xff]
        %v1409 = vld [vmem:[#allocation2 + $0x30] sm:$0xff]
        %v1410 = vld [vmem:[#allocation2 + $0x38] sm:$0xff]
        %v1411 = vld [vmem:[#allocation2 + $0x40] sm:$0xff]
        %v1412 = vld [vmem:[#allocation2 + $0x48] sm:$0xff]
        %v1413 = vld [vmem:[#allocation2 + $0x50] sm:$0xff]
        %v1414 = vld [vmem:[#allocation2 + $0x58] sm:$0xff]
        %v1415 = vpack.c.bf16 %v1391, %v1387
        %v1416 = vpack.c.bf16 %v1392, %v1388
        %v1417 = vpack.c.bf16 %v1393, %v1389
        %v1418 = vpack.c.bf16 %v1394, %v1390
        %v1419 = vpack.c.bf16 %v1399, %v1395
        %v1420 = vpack.c.bf16 %v1400, %v1396
        %v1421 = vpack.c.bf16 %v1401, %v1397
        %v1422 = vpack.c.bf16 %v1402, %v1398
        %v1423 = vld [vmem:[%s511] sm:$0xff]
        %v1424 = vld [vmem:[%s511 + $0x8] sm:$0xf]
        %v1425 = vld [vmem:[%s511 + $0xc] sm:$0xff]
        %v1426 = vld [vmem:[%s511 + $0x14] sm:$0xf]
        %v1427 = vld [vmem:[%s511 + $0x18] sm:$0xff]
        %v1428 = vld [vmem:[%s511 + $0x20] sm:$0xf]
        %v1429 = vld [vmem:[%s511 + $0x24] sm:$0xff]
        %v1430 = vld [vmem:[%s511 + $0x2c] sm:$0xf]
        %v1431 = vld [vmem:[%s511 + $0x30] sm:$0xff]
        %v1432 = vld [vmem:[%s511 + $0x38] sm:$0xf]
        %v1433 = vld [vmem:[%s511 + $0x3c] sm:$0xff]
        %v1434 = vld [vmem:[%s511 + $0x44] sm:$0xf]
        %v1435 = vld [vmem:[%s511 + $0x48] sm:$0xff]
        %v1436 = vld [vmem:[%s511 + $0x50] sm:$0xf]
        %v1437 = vld [vmem:[%s511 + $0x54] sm:$0xff]
        %v1438 = vld [vmem:[%s511 + $0x5c] sm:$0xf]
        %v1439 = vld [vmem:[%s511 + $0x60] sm:$0xff]
        %v1440 = vld [vmem:[%s511 + $0x68] sm:$0xf]
        %v1441 = vld [vmem:[%s511 + $0x6c] sm:$0xff]
        %v1442 = vld [vmem:[%s511 + $0x74] sm:$0xf]
        %v1443 = vld [vmem:[%s511 + $0x78] sm:$0xff]
        %v1444 = vld [vmem:[%s511 + $0x80] sm:$0xf]
        %v1445 = vld [vmem:[%s511 + $0x84] sm:$0xff]
        %v1446 = vld [vmem:[%s511 + $0x8c] sm:$0xf]
        %v1447 = vld [vmem:[%s511 + $0x90] sm:$0xff]
        %v1448 = vld [vmem:[%s511 + $0x98] sm:$0xf]
        %v1449 = vld [vmem:[%s511 + $0x9c] sm:$0xff]
        %v1450 = vld [vmem:[%s511 + $0xa4] sm:$0xf]
        %v1451 = vld [vmem:[%s511 + $0xa8] sm:$0xff]
        %v1452 = vld [vmem:[%s511 + $0xb0] sm:$0xf]
        %v1453 = vld [vmem:[%s511 + $0xb4] sm:$0xff]
        %v1454 = vld [vmem:[%s511 + $0xbc] sm:$0xf]
        %v1455 = vld [vmem:[%s511 + $0xc0] sm:$0xff]
        %v1456 = vld [vmem:[%s511 + $0xc8] sm:$0xf]
        %v1457 = vld [vmem:[%s511 + $0xcc] sm:$0xff]
        %v1458 = vld [vmem:[%s511 + $0xd4] sm:$0xf]
        %v1459 = vld [vmem:[%s511 + $0xd8] sm:$0xff]
        %v1460 = vld [vmem:[%s511 + $0xe0] sm:$0xf]
        %v1461 = vld [vmem:[%s511 + $0xe4] sm:$0xff]
        %v1462 = vld [vmem:[%s511 + $0xec] sm:$0xf]
        %v1463 = vld [vmem:[%s511 + $0xf0] sm:$0xff]
        %v1464 = vld [vmem:[%s511 + $0xf8] sm:$0xf]
        %v1465 = vld [vmem:[%s511 + $0xfc] sm:$0xff]
        %v1466 = vld [vmem:[%s511 + $0x104] sm:$0xf]
        %v1467 = vld [vmem:[%s511 + $0x108] sm:$0xff]
        %v1468 = vld [vmem:[%s511 + $0x110] sm:$0xf]
        %v1469 = vld [vmem:[%s511 + $0x114] sm:$0xff]
        %v1470 = vld [vmem:[%s511 + $0x11c] sm:$0xf]
        %v1471 = vld [vmem:[%s511 + $0x120] sm:$0xff]
        %v1472 = vld [vmem:[%s511 + $0x128] sm:$0xf]
        %v1473 = vld [vmem:[%s511 + $0x12c] sm:$0xff]
        %v1474 = vld [vmem:[%s511 + $0x134] sm:$0xf]
        %v1475 = vld [vmem:[%s511 + $0x138] sm:$0xff]
        %v1476 = vld [vmem:[%s511 + $0x140] sm:$0xf]
        %v1477 = vld [vmem:[%s511 + $0x144] sm:$0xff]
        %v1478 = vld [vmem:[%s511 + $0x14c] sm:$0xf]
        %v1479 = vld [vmem:[%s511 + $0x150] sm:$0xff]
        %v1480 = vld [vmem:[%s511 + $0x158] sm:$0xf]
        %v1481 = vld [vmem:[%s511 + $0x15c] sm:$0xff]
        %v1482 = vld [vmem:[%s511 + $0x164] sm:$0xf]
        %v1483 = vld [vmem:[%s511 + $0x168] sm:$0xff]
        %v1484 = vld [vmem:[%s511 + $0x170] sm:$0xf]
        %v1485 = vld [vmem:[%s511 + $0x174] sm:$0xff]
        %v1486 = vld [vmem:[%s511 + $0x17c] sm:$0xf]
        %v1487 = vld [vmem:[%s511 + $0x180] sm:$0xff]
        %v1488 = vld [vmem:[%s511 + $0x188] sm:$0xf]
        %v1489 = vld [vmem:[%s511 + $0x18c] sm:$0xff]
        %v1490 = vld [vmem:[%s511 + $0x194] sm:$0xf]
        %v1491 = vld [vmem:[%s511 + $0x198] sm:$0xff]
        %v1492 = vld [vmem:[%s511 + $0x1a0] sm:$0xf]
        %v1493 = vld [vmem:[%s511 + $0x1a4] sm:$0xff]
        %v1494 = vld [vmem:[%s511 + $0x1ac] sm:$0xf]
        %v1495 = vld [vmem:[%s511 + $0x1b0] sm:$0xff]
        %v1496 = vld [vmem:[%s511 + $0x1b8] sm:$0xf]
        %v1497 = vld [vmem:[%s511 + $0x1bc] sm:$0xff]
        %v1498 = vld [vmem:[%s511 + $0x1c4] sm:$0xf]
        %v1499 = vld [vmem:[%s511 + $0x1c8] sm:$0xff]
        %v1500 = vld [vmem:[%s511 + $0x1d0] sm:$0xf]
        %v1501 = vld [vmem:[%s511 + $0x1d4] sm:$0xff]
        %v1502 = vld [vmem:[%s511 + $0x1dc] sm:$0xf]
        %v1503 = vld [vmem:[%s511 + $0x1e0] sm:$0xff]
        %v1504 = vld [vmem:[%s511 + $0x1e8] sm:$0xf]
        %v1505 = vld [vmem:[%s511 + $0x1ec] sm:$0xff]
        %v1506 = vld [vmem:[%s511 + $0x1f4] sm:$0xf]
        %v1507 = vld [vmem:[%s511 + $0x1f8] sm:$0xff]
        %v1508 = vld [vmem:[%s511 + $0x200] sm:$0xf]
        %v1509 = vld [vmem:[%s511 + $0x204] sm:$0xff]
        %v1510 = vld [vmem:[%s511 + $0x20c] sm:$0xf]
        %v1511 = vld [vmem:[%s511 + $0x210] sm:$0xff]
        %v1512 = vld [vmem:[%s511 + $0x218] sm:$0xf]
        %v1513 = vld [vmem:[%s511 + $0x21c] sm:$0xff]
        %v1514 = vld [vmem:[%s511 + $0x224] sm:$0xf]
        %v1515 = vld [vmem:[%s511 + $0x228] sm:$0xff]
        %v1516 = vld [vmem:[%s511 + $0x230] sm:$0xf]
        %v1517 = vld [vmem:[%s511 + $0x234] sm:$0xff]
        %v1518 = vld [vmem:[%s511 + $0x23c] sm:$0xf]
        %v1519 = vld [vmem:[%s511 + $0x240] sm:$0xff]
        %v1520 = vld [vmem:[%s511 + $0x248] sm:$0xf]
        %v1521 = vld [vmem:[%s511 + $0x24c] sm:$0xff]
        %v1522 = vld [vmem:[%s511 + $0x254] sm:$0xf]
        %v1523 = vld [vmem:[%s511 + $0x258] sm:$0xff]
        %v1524 = vld [vmem:[%s511 + $0x260] sm:$0xf]
        %v1525 = vld [vmem:[%s511 + $0x264] sm:$0xff]
        %v1526 = vld [vmem:[%s511 + $0x26c] sm:$0xf]
        %v1527 = vld [vmem:[%s511 + $0x270] sm:$0xff]
        %v1528 = vld [vmem:[%s511 + $0x278] sm:$0xf]
        %v1529 = vld [vmem:[%s511 + $0x27c] sm:$0xff]
        %v1530 = vld [vmem:[%s511 + $0x284] sm:$0xf]
        %v1531 = vld [vmem:[%s511 + $0x288] sm:$0xff]
        %v1532 = vld [vmem:[%s511 + $0x290] sm:$0xf]
        %v1533 = vld [vmem:[%s511 + $0x294] sm:$0xff]
        %v1534 = vld [vmem:[%s511 + $0x29c] sm:$0xf]
        %v1535 = vld [vmem:[%s511 + $0x2a0] sm:$0xff]
        %v1536 = vld [vmem:[%s511 + $0x2a8] sm:$0xf]
        %v1537 = vld [vmem:[%s511 + $0x2ac] sm:$0xff]
        %v1538 = vld [vmem:[%s511 + $0x2b4] sm:$0xf]
        %v1539 = vld [vmem:[%s511 + $0x2b8] sm:$0xff]
        %v1540 = vld [vmem:[%s511 + $0x2c0] sm:$0xf]
        %v1541 = vld [vmem:[%s511 + $0x2c4] sm:$0xff]
        %v1542 = vld [vmem:[%s511 + $0x2cc] sm:$0xf]
        %v1543 = vld [vmem:[%s511 + $0x2d0] sm:$0xff]
        %v1544 = vld [vmem:[%s511 + $0x2d8] sm:$0xf]
        %v1545 = vld [vmem:[%s511 + $0x2dc] sm:$0xff]
        %v1546 = vld [vmem:[%s511 + $0x2e4] sm:$0xf]
        %v1547 = vld [vmem:[%s511 + $0x2e8] sm:$0xff]
        %v1548 = vld [vmem:[%s511 + $0x2f0] sm:$0xf]
        %v1549 = vld [vmem:[%s511 + $0x2f4] sm:$0xff]
        %v1550 = vld [vmem:[%s511 + $0x2fc] sm:$0xf]
        %v1679 = vunpack.c.l.b16 %v1423
        %v1680 = vunpack.c.h.b16 %v1423
        %v1681 = vunpack.c.l.b16 %v1424
        %v1682 = vunpack.c.l.b16 %v1425
        %v1683 = vunpack.c.h.b16 %v1425
        %v1684 = vunpack.c.l.b16 %v1426
        %v1685 = vunpack.c.l.b16 %v1427
        %v1686 = vunpack.c.h.b16 %v1427
        %v1687 = vunpack.c.l.b16 %v1428
        %v1688 = vunpack.c.l.b16 %v1429
        %v1689 = vunpack.c.h.b16 %v1429
        %v1690 = vunpack.c.l.b16 %v1430
        %v1691 = vunpack.c.l.b16 %v1431
        %v1692 = vunpack.c.h.b16 %v1431
        %v1693 = vunpack.c.l.b16 %v1432
        %v1694 = vunpack.c.l.b16 %v1433
        %v1695 = vunpack.c.h.b16 %v1433
        %v1696 = vunpack.c.l.b16 %v1434
        %v1697 = vunpack.c.l.b16 %v1435
        %v1698 = vunpack.c.h.b16 %v1435
        %v1699 = vunpack.c.l.b16 %v1436
        %v1700 = vunpack.c.l.b16 %v1437
        %v1701 = vunpack.c.h.b16 %v1437
        %v1702 = vunpack.c.l.b16 %v1438
        %v1703 = vunpack.c.l.b16 %v1439
        %v1704 = vunpack.c.h.b16 %v1439
        %v1705 = vunpack.c.l.b16 %v1440
        %v1706 = vunpack.c.l.b16 %v1441
        %v1707 = vunpack.c.h.b16 %v1441
        %v1708 = vunpack.c.l.b16 %v1442
        %v1709 = vunpack.c.l.b16 %v1443
        %v1710 = vunpack.c.h.b16 %v1443
        %v1711 = vunpack.c.l.b16 %v1444
        %v1712 = vunpack.c.l.b16 %v1445
        %v1713 = vunpack.c.h.b16 %v1445
        %v1714 = vunpack.c.l.b16 %v1446
        %v1715 = vunpack.c.l.b16 %v1447
        %v1716 = vunpack.c.h.b16 %v1447
        %v1717 = vunpack.c.l.b16 %v1448
        %v1718 = vunpack.c.l.b16 %v1449
        %v1719 = vunpack.c.h.b16 %v1449
        %v1720 = vunpack.c.l.b16 %v1450
        %v1721 = vunpack.c.l.b16 %v1451
        %v1722 = vunpack.c.h.b16 %v1451
        %v1723 = vunpack.c.l.b16 %v1452
        %v1724 = vunpack.c.l.b16 %v1453
        %v1725 = vunpack.c.h.b16 %v1453
        %v1726 = vunpack.c.l.b16 %v1454
        %v1727 = vunpack.c.l.b16 %v1455
        %v1728 = vunpack.c.h.b16 %v1455
        %v1729 = vunpack.c.l.b16 %v1456
        %v1730 = vunpack.c.l.b16 %v1457
        %v1731 = vunpack.c.h.b16 %v1457
        %v1732 = vunpack.c.l.b16 %v1458
        %v1733 = vunpack.c.l.b16 %v1459
        %v1734 = vunpack.c.h.b16 %v1459
        %v1735 = vunpack.c.l.b16 %v1460
        %v1736 = vunpack.c.l.b16 %v1461
        %v1737 = vunpack.c.h.b16 %v1461
        %v1738 = vunpack.c.l.b16 %v1462
        %v1739 = vunpack.c.l.b16 %v1463
        %v1740 = vunpack.c.h.b16 %v1463
        %v1741 = vunpack.c.l.b16 %v1464
        %v1742 = vunpack.c.l.b16 %v1465
        %v1743 = vunpack.c.h.b16 %v1465
        %v1744 = vunpack.c.l.b16 %v1466
        %v1745 = vunpack.c.l.b16 %v1467
        %v1746 = vunpack.c.h.b16 %v1467
        %v1747 = vunpack.c.l.b16 %v1468
        %v1748 = vunpack.c.l.b16 %v1469
        %v1749 = vunpack.c.h.b16 %v1469
        %v1750 = vunpack.c.l.b16 %v1470
        %v1751 = vunpack.c.l.b16 %v1471
        %v1752 = vunpack.c.h.b16 %v1471
        %v1753 = vunpack.c.l.b16 %v1472
        %v1754 = vunpack.c.l.b16 %v1473
        %v1755 = vunpack.c.h.b16 %v1473
        %v1756 = vunpack.c.l.b16 %v1474
        %v1757 = vunpack.c.l.b16 %v1475
        %v1758 = vunpack.c.h.b16 %v1475
        %v1759 = vunpack.c.l.b16 %v1476
        %v1760 = vunpack.c.l.b16 %v1477
        %v1761 = vunpack.c.h.b16 %v1477
        %v1762 = vunpack.c.l.b16 %v1478
        %v1763 = vunpack.c.l.b16 %v1479
        %v1764 = vunpack.c.h.b16 %v1479
        %v1765 = vunpack.c.l.b16 %v1480
        %v1766 = vunpack.c.l.b16 %v1481
        %v1767 = vunpack.c.h.b16 %v1481
        %v1768 = vunpack.c.l.b16 %v1482
        %v1769 = vunpack.c.l.b16 %v1483
        %v1770 = vunpack.c.h.b16 %v1483
        %v1771 = vunpack.c.l.b16 %v1484
        %v1772 = vunpack.c.l.b16 %v1485
        %v1773 = vunpack.c.h.b16 %v1485
        %v1774 = vunpack.c.l.b16 %v1486
        %v1775 = vunpack.c.l.b16 %v1487
        %v1776 = vunpack.c.h.b16 %v1487
        %v1777 = vunpack.c.l.b16 %v1488
        %v1778 = vunpack.c.l.b16 %v1489
        %v1779 = vunpack.c.h.b16 %v1489
        %v1780 = vunpack.c.l.b16 %v1490
        %v1781 = vunpack.c.l.b16 %v1491
        %v1782 = vunpack.c.h.b16 %v1491
        %v1783 = vunpack.c.l.b16 %v1492
        %v1784 = vunpack.c.l.b16 %v1493
        %v1785 = vunpack.c.h.b16 %v1493
        %v1786 = vunpack.c.l.b16 %v1494
        %v1787 = vunpack.c.l.b16 %v1495
        %v1788 = vunpack.c.h.b16 %v1495
        %v1789 = vunpack.c.l.b16 %v1496
        %v1790 = vunpack.c.l.b16 %v1497
        %v1791 = vunpack.c.h.b16 %v1497
        %v1792 = vunpack.c.l.b16 %v1498
        %v1793 = vunpack.c.l.b16 %v1499
        %v1794 = vunpack.c.h.b16 %v1499
        %v1795 = vunpack.c.l.b16 %v1500
        %v1796 = vunpack.c.l.b16 %v1501
        %v1797 = vunpack.c.h.b16 %v1501
        %v1798 = vunpack.c.l.b16 %v1502
        %v1799 = vunpack.c.l.b16 %v1503
        %v1800 = vunpack.c.h.b16 %v1503
        %v1801 = vunpack.c.l.b16 %v1504
        %v1802 = vunpack.c.l.b16 %v1505
        %v1803 = vunpack.c.h.b16 %v1505
        %v1804 = vunpack.c.l.b16 %v1506
        %v1805 = vunpack.c.l.b16 %v1507
        %v1806 = vunpack.c.h.b16 %v1507
        %v1807 = vunpack.c.l.b16 %v1508
        %v1808 = vunpack.c.l.b16 %v1509
        %v1809 = vunpack.c.h.b16 %v1509
        %v1810 = vunpack.c.l.b16 %v1510
        %v1811 = vunpack.c.l.b16 %v1511
        %v1812 = vunpack.c.h.b16 %v1511
        %v1813 = vunpack.c.l.b16 %v1512
        %v1814 = vunpack.c.l.b16 %v1513
        %v1815 = vunpack.c.h.b16 %v1513
        %v1816 = vunpack.c.l.b16 %v1514
        %v1817 = vunpack.c.l.b16 %v1515
        %v1818 = vunpack.c.h.b16 %v1515
        %v1819 = vunpack.c.l.b16 %v1516
        %v1820 = vunpack.c.l.b16 %v1517
        %v1821 = vunpack.c.h.b16 %v1517
        %v1822 = vunpack.c.l.b16 %v1518
        %v1823 = vunpack.c.l.b16 %v1519
        %v1824 = vunpack.c.h.b16 %v1519
        %v1825 = vunpack.c.l.b16 %v1520
        %v1826 = vunpack.c.l.b16 %v1521
        %v1827 = vunpack.c.h.b16 %v1521
        %v1828 = vunpack.c.l.b16 %v1522
        %v1829 = vunpack.c.l.b16 %v1523
        %v1830 = vunpack.c.h.b16 %v1523
        %v1831 = vunpack.c.l.b16 %v1524
        %v1832 = vunpack.c.l.b16 %v1525
        %v1833 = vunpack.c.h.b16 %v1525
        %v1834 = vunpack.c.l.b16 %v1526
        %v1835 = vunpack.c.l.b16 %v1527
        %v1836 = vunpack.c.h.b16 %v1527
        %v1837 = vunpack.c.l.b16 %v1528
        %v1838 = vunpack.c.l.b16 %v1529
        %v1839 = vunpack.c.h.b16 %v1529
        %v1840 = vunpack.c.l.b16 %v1530
        %v1841 = vunpack.c.l.b16 %v1531
        %v1842 = vunpack.c.h.b16 %v1531
        %v1843 = vunpack.c.l.b16 %v1532
        %v1844 = vunpack.c.l.b16 %v1533
        %v1845 = vunpack.c.h.b16 %v1533
        %v1846 = vunpack.c.l.b16 %v1534
        %v1847 = vunpack.c.l.b16 %v1535
        %v1848 = vunpack.c.h.b16 %v1535
        %v1849 = vunpack.c.l.b16 %v1536
        %v1850 = vunpack.c.l.b16 %v1537
        %v1851 = vunpack.c.h.b16 %v1537
        %v1852 = vunpack.c.l.b16 %v1538
        %v1853 = vunpack.c.l.b16 %v1539
        %v1854 = vunpack.c.h.b16 %v1539
        %v1855 = vunpack.c.l.b16 %v1540
        %v1856 = vunpack.c.l.b16 %v1541
        %v1857 = vunpack.c.h.b16 %v1541
        %v1858 = vunpack.c.l.b16 %v1542
        %v1859 = vunpack.c.l.b16 %v1543
        %v1860 = vunpack.c.h.b16 %v1543
        %v1861 = vunpack.c.l.b16 %v1544
        %v1862 = vunpack.c.l.b16 %v1545
        %v1863 = vunpack.c.h.b16 %v1545
        %v1864 = vunpack.c.l.b16 %v1546
        %v1865 = vunpack.c.l.b16 %v1547
        %v1866 = vunpack.c.h.b16 %v1547
        %v1867 = vunpack.c.l.b16 %v1548
        %v1868 = vunpack.c.l.b16 %v1549
        %v1869 = vunpack.c.h.b16 %v1549
        %v1870 = vunpack.c.l.b16 %v1550
        %v1871 = vpack.c.b16 %v1682, %v1679
        %v1872 = vpack.c.b16 %v1683, %v1680
        %v1873 = vpack.c.b16 %v1684, %v1681
        %v1874 = vpack.c.b16 %v1688, %v1685
        %v1875 = vpack.c.b16 %v1689, %v1686
        %v1876 = vpack.c.b16 %v1690, %v1687
        %v1877 = vpack.c.b16 %v1694, %v1691
        %v1878 = vpack.c.b16 %v1695, %v1692
        %v1879 = vpack.c.b16 %v1696, %v1693
        %v1880 = vpack.c.b16 %v1700, %v1697
        %v1881 = vpack.c.b16 %v1701, %v1698
        %v1882 = vpack.c.b16 %v1702, %v1699
        %v1883 = vpack.c.b16 %v1706, %v1703
        %v1884 = vpack.c.b16 %v1707, %v1704
        %v1885 = vpack.c.b16 %v1708, %v1705
        %v1886 = vpack.c.b16 %v1712, %v1709
        %v1887 = vpack.c.b16 %v1713, %v1710
        %v1888 = vpack.c.b16 %v1714, %v1711
        %v1889 = vpack.c.b16 %v1718, %v1715
        %v1890 = vpack.c.b16 %v1719, %v1716
        %v1891 = vpack.c.b16 %v1720, %v1717
        %v1892 = vpack.c.b16 %v1724, %v1721
        %v1893 = vpack.c.b16 %v1725, %v1722
        %v1894 = vpack.c.b16 %v1726, %v1723
        %v1895 = vpack.c.b16 %v1730, %v1727
        %v1896 = vpack.c.b16 %v1731, %v1728
        %v1897 = vpack.c.b16 %v1732, %v1729
        %v1898 = vpack.c.b16 %v1736, %v1733
        %v1899 = vpack.c.b16 %v1737, %v1734
        %v1900 = vpack.c.b16 %v1738, %v1735
        %v1901 = vpack.c.b16 %v1742, %v1739
        %v1902 = vpack.c.b16 %v1743, %v1740
        %v1903 = vpack.c.b16 %v1744, %v1741
        %v1904 = vpack.c.b16 %v1748, %v1745
        %v1905 = vpack.c.b16 %v1749, %v1746
        %v1906 = vpack.c.b16 %v1750, %v1747
        %v1907 = vpack.c.b16 %v1754, %v1751
        %v1908 = vpack.c.b16 %v1755, %v1752
        %v1909 = vpack.c.b16 %v1756, %v1753
        %v1910 = vpack.c.b16 %v1760, %v1757
        %v1911 = vpack.c.b16 %v1761, %v1758
        %v1912 = vpack.c.b16 %v1762, %v1759
        %v1913 = vpack.c.b16 %v1766, %v1763
        %v1914 = vpack.c.b16 %v1767, %v1764
        %v1915 = vpack.c.b16 %v1768, %v1765
        %v1916 = vpack.c.b16 %v1772, %v1769
        %v1917 = vpack.c.b16 %v1773, %v1770
        %v1918 = vpack.c.b16 %v1774, %v1771
        %v1919 = vpack.c.b16 %v1778, %v1775
        %v1920 = vpack.c.b16 %v1779, %v1776
        %v1921 = vpack.c.b16 %v1780, %v1777
        %v1922 = vpack.c.b16 %v1784, %v1781
        %v1923 = vpack.c.b16 %v1785, %v1782
        %v1924 = vpack.c.b16 %v1786, %v1783
        %v1925 = vpack.c.b16 %v1790, %v1787
        %v1926 = vpack.c.b16 %v1791, %v1788
        %v1927 = vpack.c.b16 %v1792, %v1789
        %v1928 = vpack.c.b16 %v1796, %v1793
        %v1929 = vpack.c.b16 %v1797, %v1794
        %v1930 = vpack.c.b16 %v1798, %v1795
        %v1931 = vpack.c.b16 %v1802, %v1799
        %v1932 = vpack.c.b16 %v1803, %v1800
        %v1933 = vpack.c.b16 %v1804, %v1801
        %v1934 = vpack.c.b16 %v1808, %v1805
        %v1935 = vpack.c.b16 %v1809, %v1806
        %v1936 = vpack.c.b16 %v1810, %v1807
        %v1937 = vpack.c.b16 %v1814, %v1811
        %v1938 = vpack.c.b16 %v1815, %v1812
        %v1939 = vpack.c.b16 %v1816, %v1813
        %v1940 = vpack.c.b16 %v1820, %v1817
        %v1941 = vpack.c.b16 %v1821, %v1818
        %v1942 = vpack.c.b16 %v1822, %v1819
        %v1943 = vpack.c.b16 %v1826, %v1823
        %v1944 = vpack.c.b16 %v1827, %v1824
        %v1945 = vpack.c.b16 %v1828, %v1825
        %v1946 = vpack.c.b16 %v1832, %v1829
        %v1947 = vpack.c.b16 %v1833, %v1830
        %v1948 = vpack.c.b16 %v1834, %v1831
        %v1949 = vpack.c.b16 %v1838, %v1835
        %v1950 = vpack.c.b16 %v1839, %v1836
        %v1951 = vpack.c.b16 %v1840, %v1837
        %v1952 = vpack.c.b16 %v1844, %v1841
        %v1953 = vpack.c.b16 %v1845, %v1842
        %v1954 = vpack.c.b16 %v1846, %v1843
        %v1955 = vpack.c.b16 %v1850, %v1847
        %v1956 = vpack.c.b16 %v1851, %v1848
        %v1957 = vpack.c.b16 %v1852, %v1849
        %v1958 = vpack.c.b16 %v1856, %v1853
        %v1959 = vpack.c.b16 %v1857, %v1854
        %v1960 = vpack.c.b16 %v1858, %v1855
        %v1961 = vpack.c.b16 %v1862, %v1859
        %v1962 = vpack.c.b16 %v1863, %v1860
        %v1963 = vpack.c.b16 %v1864, %v1861
        %v1964 = vpack.c.b16 %v1868, %v1865
        %v1965 = vpack.c.b16 %v1869, %v1866
        %v1966 = vpack.c.b16 %v1870, %v1867
        %2063 = vmatprep.subr.bf16.mxu0 %v1872
        %2064 = vmatpush1.bf16.msra.mxu0 %v1871
        %2065 = vmatprep.subr.bf16.mxu0 %v1875
        %2066 = vmatpush1.bf16.msra.mxu0 %v1874
        %2067 = vmatprep.subr.bf16.mxu0 %v1878
        %2068 = vmatpush1.bf16.msra.mxu0 %v1877
        %2069 = vmatprep.subr.bf16.mxu0 %v1881
        %2070 = vmatpush1.bf16.msra.mxu0 %v1880
        %2071 = vmatprep.subr.bf16.mxu0 %v1884
        %2072 = vmatpush1.bf16.msra.mxu0 %v1883
        %2073 = vmatprep.subr.bf16.mxu0 %v1887
        %2074 = vmatpush1.bf16.msra.mxu0 %v1886
        %2075 = vmatprep.subr.bf16.mxu0 %v1890
        %2076 = vmatpush1.bf16.msra.mxu0 %v1889
        %2077 = vmatprep.subr.bf16.mxu0 %v1893
        %2078 = vmatpush1.bf16.msra.mxu0 %v1892
        %2079 = vmatprep.subr.bf16.mxu0 %v1896
        %2080 = vmatpush1.bf16.msra.mxu0 %v1895
        %2081 = vmatprep.subr.bf16.mxu0 %v1899
        %2082 = vmatpush1.bf16.msra.mxu0 %v1898
        %2083 = vmatprep.subr.bf16.mxu0 %v1902
        %2084 = vmatpush1.bf16.msra.mxu0 %v1901
        %2085 = vmatprep.subr.bf16.mxu0 %v1905
        %2086 = vmatpush1.bf16.msra.mxu0 %v1904
        %2087 = vmatprep.subr.bf16.mxu0 %v1908
        %2088 = vmatpush1.bf16.msra.mxu0 %v1907
        %2089 = vmatprep.subr.bf16.mxu0 %v1911
        %2090 = vmatpush1.bf16.msra.mxu0 %v1910
        %2091 = vmatprep.subr.bf16.mxu0 %v1914
        %2092 = vmatpush1.bf16.msra.mxu0 %v1913
        %2093 = vmatprep.subr.bf16.mxu0 %v1917
        %2094 = vmatpush1.bf16.msra.mxu0 %v1916
        %2095 = vmatprep.mubr.bf16.mxu0 %v1416
        %2096 = vmatmul.mubr.bf16.gmra.mrb[0].mxu0 %v1415
        %v2097 = vpop.f32.mrb[0].mxu0
        %v2098 = vadd.f32 0.0, %v2097
        %v2099 = vpop.f32.mrb[0].mxu0
        %v2100 = vadd.f32 0.0, %v2099
        %v2101 = vpop.f32.mrb[0].mxu0
        %v2102 = vadd.f32 0.0, %v2101
        %v2103 = vpop.f32.mrb[0].mxu0
        %v2104 = vadd.f32 0.0, %v2103
        %2105 = vmatprep.mubr.bf16.mxu0 %v1420
        %2106 = vmatmul.mubr.bf16.gmra.mrb[0].mxu0 %v1419
        %v2107 = vpop.f32.mrb[0].mxu0
        %v2108 = vadd.f32 0.0, %v2107
        %v2109 = vpop.f32.mrb[0].mxu0
        %v2110 = vadd.f32 0.0, %v2109
        %v2111 = vpop.f32.mrb[0].mxu0
        %v2112 = vadd.f32 0.0, %v2111
        %v2113 = vpop.f32.mrb[0].mxu0
        %v2114 = vadd.f32 0.0, %v2113
        %2115 = vdwg.mxu0
        %2116 = vmatprep.subr.bf16.mxu0 %v1920
        %2117 = vmatpush1.bf16.msra.mxu0 %v1919
        %2118 = vmatprep.subr.bf16.mxu0 %v1923
        %2119 = vmatpush1.bf16.msra.mxu0 %v1922
        %2120 = vmatprep.subr.bf16.mxu0 %v1926
        %2121 = vmatpush1.bf16.msra.mxu0 %v1925
        %2122 = vmatprep.subr.bf16.mxu0 %v1929
        %2123 = vmatpush1.bf16.msra.mxu0 %v1928
        %2124 = vmatprep.subr.bf16.mxu0 %v1932
        %2125 = vmatpush1.bf16.msra.mxu0 %v1931
        %2126 = vmatprep.subr.bf16.mxu0 %v1935
        %2127 = vmatpush1.bf16.msra.mxu0 %v1934
        %2128 = vmatprep.subr.bf16.mxu0 %v1938
        %2129 = vmatpush1.bf16.msra.mxu0 %v1937
        %2130 = vmatprep.subr.bf16.mxu0 %v1941
        %2131 = vmatpush1.bf16.msra.mxu0 %v1940
        %2132 = vmatprep.subr.bf16.mxu0 %v1944
        %2133 = vmatpush1.bf16.msra.mxu0 %v1943
        %2134 = vmatprep.subr.bf16.mxu0 %v1947
        %2135 = vmatpush1.bf16.msra.mxu0 %v1946
        %2136 = vmatprep.subr.bf16.mxu0 %v1950
        %2137 = vmatpush1.bf16.msra.mxu0 %v1949
        %2138 = vmatprep.subr.bf16.mxu0 %v1953
        %2139 = vmatpush1.bf16.msra.mxu0 %v1952
        %2140 = vmatprep.subr.bf16.mxu0 %v1956
        %2141 = vmatpush1.bf16.msra.mxu0 %v1955
        %2142 = vmatprep.subr.bf16.mxu0 %v1959
        %2143 = vmatpush1.bf16.msra.mxu0 %v1958
        %2144 = vmatprep.subr.bf16.mxu0 %v1962
        %2145 = vmatpush1.bf16.msra.mxu0 %v1961
        %2146 = vmatprep.subr.bf16.mxu0 %v1965
        %2147 = vmatpush1.bf16.msra.mxu0 %v1964
        %2148 = vmatprep.mubr.bf16.mxu0 %v1418
        %2149 = vmatmul.mubr.bf16.gmra.mrb[0].mxu0 %v1417
        %v2150 = vpop.f32.mrb[0].mxu0
        %v2151 = vadd.f32 %v2098, %v2150
        %v2152 = vpop.f32.mrb[0].mxu0
        %v2153 = vadd.f32 %v2100, %v2152
        %v2154 = vpop.f32.mrb[0].mxu0
        %v2155 = vadd.f32 %v2102, %v2154
        %v2156 = vpop.f32.mrb[0].mxu0
        %v2157 = vadd.f32 %v2104, %v2156
        %2158 = vmatprep.mubr.bf16.mxu0 %v1422
        %2159 = vmatmul.mubr.bf16.gmra.mrb[0].mxu0 %v1421
        %v2160 = vpop.f32.mrb[0].mxu0
        %v2161 = vadd.f32 %v2108, %v2160
        %v2162 = vpop.f32.mrb[0].mxu0
        %v2163 = vadd.f32 %v2110, %v2162
        %v2164 = vpop.f32.mrb[0].mxu0
        %v2165 = vadd.f32 %v2112, %v2164
        %v2166 = vpop.f32.mrb[0].mxu0
        %v2167 = vadd.f32 %v2114, %v2166
        %2168 = vdwg.mxu0
        %2169 = vmatprep.subr.bf16.mxu0 0
        %2170 = vmatpush1.bf16.msra.mxu0 %v1873
        %2171 = vmatprep.subr.bf16.mxu0 0
        %2172 = vmatpush1.bf16.msra.mxu0 %v1876
        %2173 = vmatprep.subr.bf16.mxu0 0
        %2174 = vmatpush1.bf16.msra.mxu0 %v1879
        %2175 = vmatprep.subr.bf16.mxu0 0
        %2176 = vmatpush1.bf16.msra.mxu0 %v1882
        %2177 = vmatprep.subr.bf16.mxu0 0
        %2178 = vmatpush1.bf16.msra.mxu0 %v1885
        %2179 = vmatprep.subr.bf16.mxu0 0
        %2180 = vmatpush1.bf16.msra.mxu0 %v1888
        %2181 = vmatprep.subr.bf16.mxu0 0
        %2182 = vmatpush1.bf16.msra.mxu0 %v1891
        %2183 = vmatprep.subr.bf16.mxu0 0
        %2184 = vmatpush1.bf16.msra.mxu0 %v1894
        %2185 = vmatprep.subr.bf16.mxu0 0
        %2186 = vmatpush1.bf16.msra.mxu0 %v1897
        %2187 = vmatprep.subr.bf16.mxu0 0
        %2188 = vmatpush1.bf16.msra.mxu0 %v1900
        %2189 = vmatprep.subr.bf16.mxu0 0
        %2190 = vmatpush1.bf16.msra.mxu0 %v1903
        %2191 = vmatprep.subr.bf16.mxu0 0
        %2192 = vmatpush1.bf16.msra.mxu0 %v1906
        %2193 = vmatprep.subr.bf16.mxu0 0
        %2194 = vmatpush1.bf16.msra.mxu0 %v1909
        %2195 = vmatprep.subr.bf16.mxu0 0
        %2196 = vmatpush1.bf16.msra.mxu0 %v1912
        %2197 = vmatprep.subr.bf16.mxu0 0
        %2198 = vmatpush1.bf16.msra.mxu0 %v1915
        %2199 = vmatprep.subr.bf16.mxu0 0
        %2200 = vmatpush1.bf16.msra.mxu0 %v1918
        %2201 = vmatprep.mubr.bf16.mxu0 %v1416
        %2202 = vmatmul.mubr.bf16.gmra.mrb[0].mxu0 %v1415
        %v2203 = vpop.f32.mrb[0].mxu0
        %v2204 = vadd.f32 0.0, %v2203
        %v2205 = vpop.f32.mrb[0].mxu0
        %v2206 = vpop.f32.mrb[0].mxu0
        %v2207 = vadd.f32 0.0, %v2206
        %v2208 = vpop.f32.mrb[0].mxu0
        %2209 = vmatprep.mubr.bf16.mxu0 %v1420
        %2210 = vmatmul.mubr.bf16.gmra.mrb[0].mxu0 %v1419
        %v2211 = vpop.f32.mrb[0].mxu0
        %v2212 = vadd.f32 0.0, %v2211
        %v2213 = vpop.f32.mrb[0].mxu0
        %v2214 = vpop.f32.mrb[0].mxu0
        %v2215 = vadd.f32 0.0, %v2214
        %v2216 = vpop.f32.mrb[0].mxu0
        %2217 = vdwg.mxu0
        %2218 = vmatprep.subr.bf16.mxu0 0
        %2219 = vmatpush1.bf16.msra.mxu0 %v1921
        %2220 = vmatprep.subr.bf16.mxu0 0
        %2221 = vmatpush1.bf16.msra.mxu0 %v1924
        %2222 = vmatprep.subr.bf16.mxu0 0
        %2223 = vmatpush1.bf16.msra.mxu0 %v1927
        %2224 = vmatprep.subr.bf16.mxu0 0
        %2225 = vmatpush1.bf16.msra.mxu0 %v1930
        %2226 = vmatprep.subr.bf16.mxu0 0
        %2227 = vmatpush1.bf16.msra.mxu0 %v1933
        %2228 = vmatprep.subr.bf16.mxu0 0
        %2229 = vmatpush1.bf16.msra.mxu0 %v1936
        %2230 = vmatprep.subr.bf16.mxu0 0
        %2231 = vmatpush1.bf16.msra.mxu0 %v1939
        %2232 = vmatprep.subr.bf16.mxu0 0
        %2233 = vmatpush1.bf16.msra.mxu0 %v1942
        %2234 = vmatprep.subr.bf16.mxu0 0
        %2235 = vmatpush1.bf16.msra.mxu0 %v1945
        %2236 = vmatprep.subr.bf16.mxu0 0
        %2237 = vmatpush1.bf16.msra.mxu0 %v1948
        %2238 = vmatprep.subr.bf16.mxu0 0
        %2239 = vmatpush1.bf16.msra.mxu0 %v1951
        %2240 = vmatprep.subr.bf16.mxu0 0
        %2241 = vmatpush1.bf16.msra.mxu0 %v1954
        %2242 = vmatprep.subr.bf16.mxu0 0
        %2243 = vmatpush1.bf16.msra.mxu0 %v1957
        %2244 = vmatprep.subr.bf16.mxu0 0
        %2245 = vmatpush1.bf16.msra.mxu0 %v1960
        %2246 = vmatprep.subr.bf16.mxu0 0
        %2247 = vmatpush1.bf16.msra.mxu0 %v1963
        %2248 = vmatprep.subr.bf16.mxu0 0
        %2249 = vmatpush1.bf16.msra.mxu0 %v1966
        %2250 = vmatprep.mubr.bf16.mxu0 %v1418
        %2251 = vmatmul.mubr.bf16.gmra.mrb[0].mxu0 %v1417
        %v2252 = vpop.f32.mrb[0].mxu0
        %v2253 = vadd.f32 %v2204, %v2252
        %v2254 = vpop.f32.mrb[0].mxu0
        %v2255 = vpop.f32.mrb[0].mxu0
        %v2256 = vadd.f32 %v2207, %v2255
        %v2257 = vpop.f32.mrb[0].mxu0
        %2258 = vmatprep.mubr.bf16.mxu0 %v1422
        %2259 = vmatmul.mubr.bf16.gmra.mrb[0].mxu0 %v1421
        %v2260 = vpop.f32.mrb[0].mxu0
        %v2261 = vadd.f32 %v2212, %v2260
        %v2262 = vpop.f32.mrb[0].mxu0
        %v2263 = vpop.f32.mrb[0].mxu0
        %v2264 = vadd.f32 %v2215, %v2263
        %v2265 = vpop.f32.mrb[0].mxu0
        %2266 = vdwg.mxu0
        %v2267 = vadd.f32 %v1403, %v2151
        %v2268 = vadd.f32 %v1404, %v2153
        %v2269 = vadd.f32 %v1405, %v2253
        %v2270 = vadd.f32 %v1406, %v2155
        %v2271 = vadd.f32 %v1407, %v2157
        %v2272 = vadd.f32 %v1408, %v2256
        %v2273 = vadd.f32 %v1409, %v2161
        %v2274 = vadd.f32 %v1410, %v2163
        %v2275 = vadd.f32 %v1411, %v2261
        %v2276 = vadd.f32 %v1412, %v2165
        %v2277 = vadd.f32 %v1413, %v2167
        %v2278 = vadd.f32 %v1414, %v2264
        %2279 = vst [vmem:[#allocation2] sm:$0xff] %v2267
        %2280 = vst [vmem:[#allocation2 + $0x8] sm:$0xff] %v2268
        %2281 = vst [vmem:[#allocation2 + $0x10] sm:$0xff] %v2269
        %2282 = vst [vmem:[#allocation2 + $0x18] sm:$0xff] %v2270
        %2283 = vst [vmem:[#allocation2 + $0x20] sm:$0xff] %v2271
        %2284 = vst [vmem:[#allocation2 + $0x28] sm:$0xff] %v2272
        %2285 = vst [vmem:[#allocation2 + $0x30] sm:$0xff] %v2273
        %2286 = vst [vmem:[#allocation2 + $0x38] sm:$0xff] %v2274
        %2287 = vst [vmem:[#allocation2 + $0x40] sm:$0xff] %v2275
        %2288 = vst [vmem:[#allocation2 + $0x48] sm:$0xff] %v2276
        %2289 = vst [vmem:[#allocation2 + $0x50] sm:$0xff] %v2277
        %2290 = vst [vmem:[#allocation2 + $0x58] sm:$0xff] %v2278
        %p2291 = scmp.eq.s32.totalorder %s21, 2
        // Predicated region
        $region68: #{gpt_forward.25} parent=58 // pred_check
          %p2292 = pneg %p2291
        $region69: #{gpt_forward.25} parent=58 // pred_check_branch
          %2294 = sbr.rel (%p2292) target = $region71
        $region70: #{gpt_forward.25} parent=58 // pred_region
          %v2295 = vld [vmem:[#allocation2] sm:$0xff]
          %v2296 = vld [vmem:[#allocation2 + $0x8] sm:$0xff]
          %v2297 = vld [vmem:[#allocation2 + $0x10] sm:$0xff]
          %v2298 = vld [vmem:[#allocation2 + $0x18] sm:$0xff]
          %v2299 = vld [vmem:[#allocation2 + $0x20] sm:$0xff]
          %v2300 = vld [vmem:[#allocation2 + $0x28] sm:$0xff]
          %v2301 = vld [vmem:[#allocation2 + $0x30] sm:$0xff]
          %v2302 = vld [vmem:[#allocation2 + $0x38] sm:$0xff]
          %v2303 = vld [vmem:[#allocation2 + $0x40] sm:$0xff]
          %v2304 = vld [vmem:[#allocation2 + $0x48] sm:$0xff]
          %v2305 = vld [vmem:[#allocation2 + $0x50] sm:$0xff]
          %v2306 = vld [vmem:[#allocation2 + $0x58] sm:$0xff]
          %v2307 = vld [vmem:[%s4] sm:$0x7]
          %v2309 = vlaneseq
          %v2310 = vshrl.u32 %v2309, 7
          %v2311 = vsub.s32 0, %v2310
          %v2312 = vrot.slane %v2307, %v2311
          %v2313 = vlaneseq
          %v2314 = vshrl.u32 %v2313, 7
          %v2315 = vsub.s32 1, %v2314
          %v2316 = vrot.slane %v2307, %v2315
          %v2317 = vlaneseq
          %v2318 = vshrl.u32 %v2317, 7
          %v2319 = vsub.s32 2, %v2318
          %v2320 = vrot.slane %v2307, %v2319
          %v2324 = vadd.f32 %v2295, %v2312
          %v2325 = vadd.f32 %v2296, %v2316
          %v2326 = vadd.f32 %v2297, %v2320
          %v2327 = vadd.f32 %v2298, %v2312
          %v2328 = vadd.f32 %v2299, %v2316
          %v2329 = vadd.f32 %v2300, %v2320
          %v2330 = vadd.f32 %v2301, %v2312
          %v2331 = vadd.f32 %v2302, %v2316
          %v2332 = vadd.f32 %v2303, %v2320
          %v2333 = vadd.f32 %v2304, %v2312
          %v2334 = vadd.f32 %v2305, %v2316
          %v2335 = vadd.f32 %v2306, %v2320
          %2336 = vst [vmem:[%s518] sm:$0xff] %v2324
          %2337 = vst [vmem:[%s518 + $0x8] sm:$0xff] %v2325
          %2338 = vst [vmem:[%s518 + $0x10] sm:$0xff] %v2326
          %2339 = vst [vmem:[%s518 + $0x18] sm:$0xff] %v2327
          %2340 = vst [vmem:[%s518 + $0x20] sm:$0xff] %v2328
          %2341 = vst [vmem:[%s518 + $0x28] sm:$0xff] %v2329
          %2342 = vst [vmem:[%s518 + $0x30] sm:$0xff] %v2330
          %2343 = vst [vmem:[%s518 + $0x38] sm:$0xff] %v2331
          %2344 = vst [vmem:[%s518 + $0x40] sm:$0xff] %v2332
          %2345 = vst [vmem:[%s518 + $0x48] sm:$0xff] %v2333
          %2346 = vst [vmem:[%s518 + $0x50] sm:$0xff] %v2334
          %2347 = vst [vmem:[%s518 + $0x58] sm:$0xff] %v2335
        $region71: #{gpt_forward.25} parent=58 // pred_fallthru
          _
        %s2348 = smul.u32 4, %s20
        %p2349 = scmp.lt.s32.totalorder %s2348, 3
        %s2350 = scalar_select %p2349, %s2348, 3
        %s2351 = smul.addr %s2350, 3
        %s2352 = smul.addr %s2351, 8
        %s2353 = scalar_lea.vmem %s5, %s2352
        // Predicated region
        $region72: #{gpt_forward.25} parent=58 // pred_check
          %p2354 = pneg %p171
        $region73: #{gpt_forward.25} parent=58 // pred_check_branch
          %2356 = sbr.rel (%p2354) target = $region75
        $region74: #{gpt_forward.25} parent=58 // pred_region
          %s2357 = smul.u32 4, %s20
        $region75: #{gpt_forward.25} parent=58 // pred_fallthru
          _
        // Predicated region
        $region76: #{gpt_forward.25} parent=58 // pred_check
          %p2358 = pneg %p171
        $region77: #{gpt_forward.25} parent=58 // pred_check_branch
          %2360 = sbr.rel (%p2358) target = $region79
        $region78: #{gpt_forward.25} parent=58 // pred_region
          %s2361 = smul.u32 4, %s20
          %p2362 = scmp.lt.s32.totalorder %s2361, 3
          %s2363 = scalar_select %p2362, %s2361, 3
          %s2364 = smul.addr %s2363, 3
          %s2365 = smul.addr %s2364, 8
          %s2366 = scalar_lea.vmem %s5, %s2365
        $region79: #{gpt_forward.25} parent=58 // pred_fallthru
          _
      $region59: #{gpt_forward.25} parent=5 // pred_fallthru
        _
      %p2367 = scmp.le.s32.totalorder 2, %s11
      // Predicated region
      $region80: #{gpt_forward.25} parent=5 // pred_check
        %p2368 = pneg %p2367
      $region81: #{gpt_forward.25} parent=5 // pred_check_branch
        %2370 = sbr.rel (%p2368) target = $region83
      $region82: #{gpt_forward.25} parent=5 // pred_region
        %s2371 = ssub.s32 %s11, 2
      $region83: #{gpt_forward.25} parent=5 // pred_fallthru
        _
    $region6: #{gpt_forward.25} parent=1 // loop_footer
      %s15 = sadd.s32 1, %s11
    $region7: #{gpt_forward.25} parent=1 // loop_footer_branch
      %10 = sbr.rel target = $region3
    $region8: #{gpt_forward.25} parent=1 // loop_exit
      _

</llo_original>
